<compile_context>
chip_gen: v6e
topology: v6e:2x2x1
jax: 0.10.0
libtpu: 0.0.40
codegen_flags: <defaults>
</compile_context>

<pallas_src>
import math
import functools

import numpy as np
import jax
import jax.numpy as jnp
from jax import lax
from jax.experimental import pallas as pl
from jax.experimental.pallas import tpu as pltpu

MATMUL_DTYPE = jnp.bfloat16   # MXU operand dtype; accumulation is always f32.
OUT_LANES = 128               # lane-dense padded output slab width


# ----------------------------- fused Pallas kernel ------------------------------

def _uni_transformer_kernel(
    x2d_ref, mask_ref, maskcol_ref, pe_ref,
    embw_ref, embb_ref,
    ln1g_ref, ln1b_ref, wqkv_ref, bqkv_ref, wo_ref, bo_ref,
    ln2g_ref, ln2b_ref, ffw1_ref, ffb1_ref, ffw2_ref, ffb2_ref,
    lnfg_ref, lnfb_ref,
    wlstm_ref, blstm_ref, h0_ref, c0_ref,
    ow1_ref, ob1_ref, ow2_ref, ob2_ref,
    out_ref,
    xenc_ref, hs_ref,
    *, B, S, E, H, n_layers):
    Dk = E // H
    scale = 1.0 / math.sqrt(Dk)
    eps = 1e-6
    f32 = jnp.float32

    def mm(a, w):
        # MXU matmul: bf16 operands, f32 accumulation (w is already bf16).
        return jnp.dot(a.astype(MATMUL_DTYPE), w, preferred_element_type=f32)

    def layernorm(x, g, b):
        # PyTorch reference: unbiased std (divisor d-1), divide by (std + eps).
        d = x.shape[-1]
        mean = jnp.mean(x, axis=-1, keepdims=True)
        diff = x - mean
        var = jnp.sum(diff * diff, axis=-1, keepdims=True) / (d - 1)
        return g * diff / (jnp.sqrt(var) + eps) + b

    # ---- embedding + positional encoding (activations: (B*S, E) f32 slab) ----
    x = mm(x2d_ref[...], embw_ref[...]) + embb_ref[...]
    x = x * math.sqrt(E)
    x = (x.reshape(B, S, E) + pe_ref[...][None, :, :]).reshape(B * S, E)

    # query-row mask broadcast over the key axis (== masked_fill with (B,1,S,1))
    maskq = mask_ref[...][:, :, None]                       # (B, S, 1)

    # ---- transformer encoder layers -------------------------------------------
    for l in range(n_layers):
        # sublayer 0: pre-norm multi-head self-attention + residual
        y = layernorm(x, ln1g_ref[l], ln1b_ref[l])
        qkv = mm(y, wqkv_ref[l]) + bqkv_ref[l]              # (B*S, 3E)
        qkv3 = qkv.reshape(B, S, 3 * E)

        heads = []
        for h in range(H):
            q_h = qkv3[:, :, h * Dk:(h + 1) * Dk]           # (B, S, Dk)
            k_h = qkv3[:, :, E + h * Dk:E + (h + 1) * Dk]
            v_h = qkv3[:, :, 2 * E + h * Dk:2 * E + (h + 1) * Dk]
            s = jnp.einsum('bqd,bkd->bqk',
                           q_h.astype(MATMUL_DTYPE), k_h.astype(MATMUL_DTYPE),
                           preferred_element_type=f32) * scale   # (B, S, S)
            s = jnp.where(maskq == 0.0, -1000000000.0, s)
            s = s - jnp.max(s, axis=-1, keepdims=True)
            p = jnp.exp(s)
            p = p * pl.reciprocal(jnp.sum(p, axis=-1, keepdims=True), approx=True)
            heads.append(jnp.einsum('bqk,bkd->bqd',
                                    p.astype(MATMUL_DTYPE),
                                    v_h.astype(MATMUL_DTYPE),
                                    preferred_element_type=f32))  # (B, S, Dk)
        a = jnp.concatenate(heads, axis=-1).reshape(B * S, E)
        x = x + mm(a, wo_ref[l]) + bo_ref[l]

        # sublayer 1: pre-norm position-wise feed-forward + residual
        y = layernorm(x, ln2g_ref[l], ln2b_ref[l])
        hdd = jnp.maximum(mm(y, ffw1_ref[l]) + ffb1_ref[l], 0.0)
        x = x + mm(hdd, ffw2_ref[l]) + ffb2_ref[l]

    # ---- final encoder LayerNorm -----------------------------------------------
    x = layernorm(x, lnfg_ref[...], lnfb_ref[...])          # (B*S, E)

    # ---- stage encoder output time-major so the LSTM reads contiguous (B,E) ----
    for b in range(B):
        xenc_ref[:, b:b + 1, :] = x[b * S:(b + 1) * S, :][:, None, :]

    # ---- LSTM decoder: one stacked (B,3E)x(3E,4E) gate matmul per step ---------
    w_lstm = wlstm_ref[...]              # bf16 (3E, 4E); rows: [o_prev | x_t | h]
    b_lstm = blstm_ref[...]              # f32 (1, 4E)
    h0 = jnp.broadcast_to(h0_ref[...], (B, E))
    c0 = jnp.broadcast_to(c0_ref[...], (B, E))
    o_prev0 = jnp.zeros((B, E), f32)

    def lstm_step(t, carry):
        o_prev, h, c = carry
        x_t = xenc_ref[t]                                   # (B, E) contiguous
        z = jnp.concatenate([o_prev, x_t, h], axis=1)       # (B, 3E)
        gates = mm(z, w_lstm) + b_lstm                      # (B, 4E) f32
        i_g = jax.nn.sigmoid(gates[:, 0:E])
        f_g = jax.nn.sigmoid(gates[:, E:2 * E])
        g_g = jnp.tanh(gates[:, 2 * E:3 * E])
        o_g = jax.nn.sigmoid(gates[:, 3 * E:4 * E])
        c_new = f_g * c + i_g * g_g
        h_new = o_g * jnp.tanh(c_new)
        hs_ref[t] = h_new                                   # stage for batched head
        return (h_new, h_new, c_new)

    lax.fori_loop(0, S, lstm_step, (o_prev0, h0, c0), unroll=True)

    # ---- output MLP head: ONE pair of matmuls over all (t, b) rows -------------
    hs2 = hs_ref[...].reshape(S * B, E)                     # rows ordered t*B + b
    hid = jnp.maximum(mm(hs2, ow1_ref[...]) + ob1_ref[...], 0.0)
    p = mm(hid, ow2_ref[...]) + ob2_ref[...]                # (S*B, 1)
    p = p * maskcol_ref[...]                                # final output mask
    # single lane-dense (unmasked) store of a padded slab; wrapper strips padding
    out_ref[...] = jnp.broadcast_to(p, (S * B, out_ref.shape[1]))


# ------------------------------ model glue ---------------------------------

def positional_encoding(max_len, d_model):
    # Matches the PyTorch reference formula exactly (incl. cos exponent 2*(i+1)).
    pe = np.zeros((max_len, d_model), dtype=np.float32)
    for pos in range(max_len):
        for i in range(0, d_model, 2):
            pe[pos, i] = math.sin(pos / 10000 ** (2 * i / d_model))
            pe[pos, i + 1] = math.cos(pos / 10000 ** (2 * (i + 1) / d_model))
    return jnp.asarray(pe)


def init_params(key, window, E, h_dim, n_layers, d_ff, heads, max_seq):
    keys = iter(jax.random.split(key, 64))

    def u(shape, fan_in):
        s = 1.0 / math.sqrt(fan_in)
        return jax.random.uniform(next(keys), shape, jnp.float32, -s, s)

    params = dict(
        heads=heads,
        embed_w=u((window, E), window), embed_b=u((1, E), window),
        pe=positional_encoding(max_seq, E),
        ln1_g=jnp.ones((n_layers, 1, E), jnp.float32),
        ln1_b=jnp.zeros((n_layers, 1, E), jnp.float32),
        ln2_g=jnp.ones((n_layers, 1, E), jnp.float32),
        ln2_b=jnp.zeros((n_layers, 1, E), jnp.float32),
        wqkv=u((n_layers, E, 3 * E), E), bqkv=u((n_layers, 1, 3 * E), E),
        wo=u((n_layers, E, E), E), bo=u((n_layers, 1, E), E),
        ff_w1=u((n_layers, E, d_ff), E), ff_b1=u((n_layers, 1, d_ff), E),
        ff_w2=u((n_layers, d_ff, E), d_ff), ff_b2=u((n_layers, 1, E), d_ff),
        ln_f_g=jnp.ones((1, E), jnp.float32), ln_f_b=jnp.zeros((1, E), jnp.float32),
        # LSTM (input 2E -> hidden E); rows 0:E multiply o_prev, E:2E the encoder
        # output at step t, 2E:3E the recurrent hidden state (gate order i,f,g,o).
        w_lstm=u((3 * E, 4 * E), E), b_lstm=u((1, 4 * E), E),
        h0=jnp.zeros((1, E), jnp.float32), c0=jnp.zeros((1, E), jnp.float32),
        out_w1=u((E, h_dim), E), out_b1=u((1, h_dim), E),
        out_w2=u((h_dim, 1), h_dim), out_b2=u((1, 1), h_dim),
    )
    return params


def _flop_estimate(B, S, W, E, H, d_ff, h_dim, n_layers):
    flops = 2 * B * S * W * E                                  # embedding
    per_layer = (2 * B * S * E * 3 * E                         # qkv projection
                 + 2 * 2 * B * S * S * E                       # QK^T + PV
                 + 2 * B * S * E * E                           # output projection
                 + 2 * 2 * B * S * E * d_ff)                   # feed-forward
    flops += n_layers * per_layer
    flops += 2 * B * S * 3 * E * 4 * E                         # LSTM gate matmuls
    flops += 2 * B * S * (E * h_dim + h_dim)                   # output MLP head
    transcendentals = (n_layers * B * H * S * S                # softmax exp
                       + 5 * B * S * E                         # LSTM sigmoid/tanh
                       + n_layers * B * S)                     # softmax reciprocal
    return int(flops), int(transcendentals)


def uni_transformer_forward(params, inputs, mask, lengths=None):
    B, S, W = inputs.shape
    E = params['embed_w'].shape[1]
    H = params['heads']
    d_ff = params['ff_w1'].shape[-1]
    h_dim = params['out_w1'].shape[-1]
    n_layers = params['wqkv'].shape[0]

    mask2d = mask.astype(jnp.float32)[..., 0]                  # (B, S)
    mask_col = mask2d.T.reshape(S * B, 1)                      # time-major rows
    pe = params['pe'][:S]                                      # (S, E)

    bf = lambda a: a.astype(MATMUL_DTYPE)                      # matmul weights -> bf16

    kernel = functools.partial(_uni_transformer_kernel,
                               B=B, S=S, E=E, H=H, n_layers=n_layers)

    args = (
        inputs.reshape(B * S, W).astype(jnp.float32),
        mask2d, mask_col, pe,
        bf(params['embed_w']), params['embed_b'],
        params['ln1_g'], params['ln1_b'],
        bf(params['wqkv']), params['bqkv'],
        bf(params['wo']), params['bo'],
        params['ln2_g'], params['ln2_b'],
        bf(params['ff_w1']), params['ff_b1'],
        bf(params['ff_w2']), params['ff_b2'],
        params['ln_f_g'], params['ln_f_b'],
        bf(params['w_lstm']), params['b_lstm'],
        params['h0'], params['c0'],
        bf(params['out_w1']), params['out_b1'],
        bf(params['out_w2']), params['out_b2'],
    )

    flops, transcendentals = _flop_estimate(B, S, W, E, H, d_ff, h_dim, n_layers)
    bytes_accessed = sum(int(np.prod(a.shape)) * a.dtype.itemsize for a in args)
    bytes_accessed += S * B * OUT_LANES * 4

    out = pl.pallas_call(
        kernel,
        out_shape=jax.ShapeDtypeStruct((S * B, OUT_LANES), jnp.float32),
        scratch_shapes=[
            pltpu.VMEM((S, B, E), jnp.float32),   # time-major encoder output
            pltpu.VMEM((S, B, E), jnp.float32),   # LSTM hidden states
        ],
        compiler_params=pltpu.CompilerParams(vmem_limit_bytes=32 * 1024 * 1024),
        cost_estimate=pl.CostEstimate(flops=flops,
                                      transcendentals=transcendentals,
                                      bytes_accessed=int(bytes_accessed)),
    )(*args)

    # Undo the time-major, lane-padded output layout (XLA-side plumbing only).
    pred = out[:, 0].reshape(S, B).transpose(1, 0)[:, :, None]  # (B, S, 1)
    return pred


# --------------------------------- main -------------------------------------

if __name__ == "__main__":
    B, S, Wd = 2, 8, 16                 # batch, seq, window_embed_size
    E, h_dim, N, d_ff, heads = 32, 16, 2, 32, 4

    key = jax.random.PRNGKey(0)
    k_in, k_p = jax.random.split(key)
    inputs = jax.random.normal(k_in, (B, S, Wd), jnp.float32)
    lengths = [S, 6]                    # seq_len = max(lengths) == S
    mask_np = np.ones((B, S, 1), np.float32)
    mask_np[1, lengths[1]:, 0] = 0.0
    mask = jnp.asarray(mask_np)

    params = init_params(k_p, Wd, E, h_dim, N, d_ff, heads, max_seq=S)

    out = uni_transformer_forward(params, inputs, mask, lengths)
    out = jax.block_until_ready(out)

    assert out.shape == (B, S, 1), out.shape
    assert bool(jnp.all(jnp.isfinite(out)))
    # rows beyond a sequence's length must be exactly zero (final mask)
    assert float(jnp.max(jnp.abs(out[1, lengths[1]:, :]))) == 0.0
    print("KERNEL_OK")
</pallas_src>

<mosaic_0001>
module attributes {stable_mosaic.version = 11 : i64} {
  func.func @_uni_transformer_kernel(%arg0: memref<16x16xf32, #tpu.memory_space<vmem>>, %arg1: memref<2x8xf32, #tpu.memory_space<vmem>>, %arg2: memref<16x1xf32, #tpu.memory_space<vmem>>, %arg3: memref<8x32xf32, #tpu.memory_space<vmem>>, %arg4: memref<16x32xbf16, #tpu.memory_space<vmem>>, %arg5: memref<1x32xf32, #tpu.memory_space<vmem>>, %arg6: memref<2x1x32xf32, #tpu.memory_space<vmem>>, %arg7: memref<2x1x32xf32, #tpu.memory_space<vmem>>, %arg8: memref<2x32x96xbf16, #tpu.memory_space<vmem>>, %arg9: memref<2x1x96xf32, #tpu.memory_space<vmem>>, %arg10: memref<2x32x32xbf16, #tpu.memory_space<vmem>>, %arg11: memref<2x1x32xf32, #tpu.memory_space<vmem>>, %arg12: memref<2x1x32xf32, #tpu.memory_space<vmem>>, %arg13: memref<2x1x32xf32, #tpu.memory_space<vmem>>, %arg14: memref<2x32x32xbf16, #tpu.memory_space<vmem>>, %arg15: memref<2x1x32xf32, #tpu.memory_space<vmem>>, %arg16: memref<2x32x32xbf16, #tpu.memory_space<vmem>>, %arg17: memref<2x1x32xf32, #tpu.memory_space<vmem>>, %arg18: memref<1x32xf32, #tpu.memory_space<vmem>>, %arg19: memref<1x32xf32, #tpu.memory_space<vmem>>, %arg20: memref<96x128xbf16, #tpu.memory_space<vmem>>, %arg21: memref<1x128xf32, #tpu.memory_space<vmem>>, %arg22: memref<1x32xf32, #tpu.memory_space<vmem>>, %arg23: memref<1x32xf32, #tpu.memory_space<vmem>>, %arg24: memref<32x16xbf16, #tpu.memory_space<vmem>>, %arg25: memref<1x16xf32, #tpu.memory_space<vmem>>, %arg26: memref<16x1xbf16, #tpu.memory_space<vmem>>, %arg27: memref<1x1xf32, #tpu.memory_space<vmem>>, %arg28: memref<16x128xf32, #tpu.memory_space<vmem>>, %arg29: memref<8x2x32xf32, #tpu.memory_space<vmem>>, %arg30: memref<8x2x32xf32, #tpu.memory_space<vmem>>) attributes {dimension_semantics = [], scalar_prefetch = 0 : i64, scratch_operands = 2 : i64, tpu.core_type = #tpu.core_type<tc>} {
    %c0 = arith.constant 0 : index
    %c0_0 = arith.constant 0 : index
    %0 = vector.load %arg0[%c0, %c0_0] : memref<16x16xf32, #tpu.memory_space<vmem>>, vector<16x16xf32>
    %c0_1 = arith.constant 0 : index
    %c0_2 = arith.constant 0 : index
    %1 = vector.load %arg4[%c0_1, %c0_2] : memref<16x32xbf16, #tpu.memory_space<vmem>>, vector<16x32xbf16>
    %2 = arith.truncf %0 : vector<16x16xf32> to vector<16x16xbf16>
    %cst = arith.constant dense<0.000000e+00> : vector<16x32xf32>
    %3 = tpu.matmul %2, %1, %cst {dimension_numbers = #tpu.dot_dimension_numbers<[1], [0], [0], [1], [0, 0, 1, 1], [], []>} : vector<16x16xbf16>, vector<16x32xbf16>, vector<16x32xf32> -> vector<16x32xf32>
    %c0_3 = arith.constant 0 : index
    %c0_4 = arith.constant 0 : index
    %4 = vector.load %arg5[%c0_3, %c0_4] : memref<1x32xf32, #tpu.memory_space<vmem>>, vector<1x32xf32>
    %5 = vector.broadcast %4 : vector<1x32xf32> to vector<16x32xf32>
    %6 = arith.addf %3, %5 : vector<16x32xf32>
    %cst_5 = arith.constant 5.65685415 : f32
    %7 = vector.broadcast %cst_5 : f32 to vector<16x32xf32>
    %8 = arith.mulf %6, %7 : vector<16x32xf32>
    %9 = vector.shape_cast %8 : vector<16x32xf32> to vector<2x8x32xf32>
    %c0_6 = arith.constant 0 : index
    %c0_7 = arith.constant 0 : index
    %10 = vector.load %arg3[%c0_6, %c0_7] : memref<8x32xf32, #tpu.memory_space<vmem>>, vector<8x32xf32>
    %11 = vector.shape_cast %10 : vector<8x32xf32> to vector<1x8x32xf32>
    %12 = vector.broadcast %11 : vector<1x8x32xf32> to vector<2x8x32xf32>
    %13 = arith.addf %9, %12 : vector<2x8x32xf32>
    %14 = vector.shape_cast %13 : vector<2x8x32xf32> to vector<16x32xf32>
    %c0_8 = arith.constant 0 : index
    %c0_9 = arith.constant 0 : index
    %15 = vector.load %arg1[%c0_8, %c0_9] : memref<2x8xf32, #tpu.memory_space<vmem>>, vector<2x8xf32>
    %16 = vector.shape_cast %15 : vector<2x8xf32> to vector<2x8x1xf32>
    %c0_10 = arith.constant 0 : index
    %c0_11 = arith.constant 0 : index
    %c0_12 = arith.constant 0 : index
    %17 = vector.load %arg6[%c0_10, %c0_11, %c0_12] : memref<2x1x32xf32, #tpu.memory_space<vmem>>, vector<1x1x32xf32>
    %18 = vector.shape_cast %17 : vector<1x1x32xf32> to vector<1x32xf32>
    %c0_13 = arith.constant 0 : index
    %c0_14 = arith.constant 0 : index
    %c0_15 = arith.constant 0 : index
    %19 = vector.load %arg7[%c0_13, %c0_14, %c0_15] : memref<2x1x32xf32, #tpu.memory_space<vmem>>, vector<1x1x32xf32>
    %20 = vector.shape_cast %19 : vector<1x1x32xf32> to vector<1x32xf32>
    %cst_16 = arith.constant dense<0.000000e+00> : vector<16xf32>
    %21 = vector.multi_reduction <add>, %14, %cst_16 [1] : vector<16x32xf32> to vector<16xf32>
    %22 = vector.shape_cast %21 : vector<16xf32> to vector<16x1xf32>
    %cst_17 = arith.constant 3.200000e+01 : f32
    %23 = vector.broadcast %cst_17 : f32 to vector<16x1xf32>
    %24 = arith.divf %22, %23 : vector<16x1xf32>
    %25 = vector.broadcast %24 : vector<16x1xf32> to vector<16x32xf32>
    %26 = arith.subf %14, %25 : vector<16x32xf32>
    %27 = arith.mulf %26, %26 : vector<16x32xf32>
    %cst_18 = arith.constant dense<0.000000e+00> : vector<16xf32>
    %28 = vector.multi_reduction <add>, %27, %cst_18 [1] : vector<16x32xf32> to vector<16xf32>
    %29 = vector.shape_cast %28 : vector<16xf32> to vector<16x1xf32>
    %cst_19 = arith.constant 3.100000e+01 : f32
    %30 = vector.broadcast %cst_19 : f32 to vector<16x1xf32>
    %31 = arith.divf %29, %30 : vector<16x1xf32>
    %32 = vector.broadcast %18 : vector<1x32xf32> to vector<16x32xf32>
    %33 = arith.mulf %32, %26 : vector<16x32xf32>
    %34 = math.sqrt %31 : vector<16x1xf32>
    %cst_20 = arith.constant 9.99999997E-7 : f32
    %35 = vector.broadcast %cst_20 : f32 to vector<16x1xf32>
    %36 = arith.addf %34, %35 : vector<16x1xf32>
    %37 = vector.broadcast %36 : vector<16x1xf32> to vector<16x32xf32>
    %38 = arith.divf %33, %37 : vector<16x32xf32>
    %39 = vector.broadcast %20 : vector<1x32xf32> to vector<16x32xf32>
    %40 = arith.addf %38, %39 : vector<16x32xf32>
    %c0_21 = arith.constant 0 : index
    %c0_22 = arith.constant 0 : index
    %c0_23 = arith.constant 0 : index
    %41 = vector.load %arg8[%c0_21, %c0_22, %c0_23] : memref<2x32x96xbf16, #tpu.memory_space<vmem>>, vector<1x32x96xbf16>
    %42 = vector.shape_cast %41 : vector<1x32x96xbf16> to vector<32x96xbf16>
    %43 = arith.truncf %40 : vector<16x32xf32> to vector<16x32xbf16>
    %cst_24 = arith.constant dense<0.000000e+00> : vector<16x96xf32>
    %44 = tpu.matmul %43, %42, %cst_24 {dimension_numbers = #tpu.dot_dimension_numbers<[1], [0], [0], [1], [0, 0, 1, 1], [], []>} : vector<16x32xbf16>, vector<32x96xbf16>, vector<16x96xf32> -> vector<16x96xf32>
    %c0_25 = arith.constant 0 : index
    %c0_26 = arith.constant 0 : index
    %c0_27 = arith.constant 0 : index
    %45 = vector.load %arg9[%c0_25, %c0_26, %c0_27] : memref<2x1x96xf32, #tpu.memory_space<vmem>>, vector<1x1x96xf32>
    %46 = vector.shape_cast %45 : vector<1x1x96xf32> to vector<1x96xf32>
    %47 = vector.broadcast %46 : vector<1x96xf32> to vector<16x96xf32>
    %48 = arith.addf %44, %47 : vector<16x96xf32>
    %49 = vector.shape_cast %48 : vector<16x96xf32> to vector<2x8x96xf32>
    %50 = vector.extract_strided_slice %49 {offsets = [0, 0, 0], sizes = [2, 8, 8], strides = [1, 1, 1]} : vector<2x8x96xf32> to vector<2x8x8xf32>
    %51 = vector.extract_strided_slice %49 {offsets = [0, 0, 32], sizes = [2, 8, 8], strides = [1, 1, 1]} : vector<2x8x96xf32> to vector<2x8x8xf32>
    %52 = vector.extract_strided_slice %49 {offsets = [0, 0, 64], sizes = [2, 8, 8], strides = [1, 1, 1]} : vector<2x8x96xf32> to vector<2x8x8xf32>
    %53 = arith.truncf %50 : vector<2x8x8xf32> to vector<2x8x8xbf16>
    %54 = arith.truncf %51 : vector<2x8x8xf32> to vector<2x8x8xbf16>
    "tpu.trace_start"() <{level = 10 : i32, message = "bqd,bkd->bqk"}> : () -> ()
    %cst_28 = arith.constant dense<0.000000e+00> : vector<2x8x8xf32>
    %55 = tpu.matmul %53, %54, %cst_28 {dimension_numbers = #tpu.dot_dimension_numbers<[2], [2], [1], [1], [0, 0, 0, 1, 1, 1], [0], [0]>} : vector<2x8x8xbf16>, vector<2x8x8xbf16>, vector<2x8x8xf32> -> vector<2x8x8xf32>
    "tpu.trace_stop"() : () -> ()
    %cst_29 = arith.constant 0.353553385 : f32
    %56 = vector.broadcast %cst_29 : f32 to vector<2x8x8xf32>
    %57 = arith.mulf %55, %56 : vector<2x8x8xf32>
    %cst_30 = arith.constant 0.000000e+00 : f32
    %58 = vector.broadcast %cst_30 : f32 to vector<2x8x1xf32>
    %59 = arith.cmpf oeq, %16, %58 : vector<2x8x1xf32>
    %cst_31 = arith.constant -1.000000e+09 : f32
    %60 = vector.shape_cast %59 : vector<2x8x1xi1> to vector<2x8x1xi1>
    %61 = vector.broadcast %60 : vector<2x8x1xi1> to vector<2x8x8xi1>
    %62 = vector.broadcast %cst_31 : f32 to vector<2x8x8xf32>
    %63 = arith.select %61, %62, %57 : vector<2x8x8xi1>, vector<2x8x8xf32>
    %cst_32 = arith.constant dense<0xFF800000> : vector<2x8xf32>
    %64 = vector.multi_reduction <maximumf>, %63, %cst_32 [2] : vector<2x8x8xf32> to vector<2x8xf32>
    %65 = vector.shape_cast %64 : vector<2x8xf32> to vector<2x8x1xf32>
    %66 = vector.broadcast %65 : vector<2x8x1xf32> to vector<2x8x8xf32>
    %67 = arith.subf %63, %66 : vector<2x8x8xf32>
    %68 = math.exp %67 : vector<2x8x8xf32>
    %cst_33 = arith.constant dense<0.000000e+00> : vector<2x8xf32>
    %69 = vector.multi_reduction <add>, %68, %cst_33 [2] : vector<2x8x8xf32> to vector<2x8xf32>
    %70 = vector.shape_cast %69 : vector<2x8xf32> to vector<2x8x1xf32>
    %71 = tpu.reciprocal %70 {approx = true} : vector<2x8x1xf32> -> vector<2x8x1xf32>
    %72 = vector.broadcast %71 : vector<2x8x1xf32> to vector<2x8x8xf32>
    %73 = arith.mulf %68, %72 : vector<2x8x8xf32>
    %74 = arith.truncf %73 : vector<2x8x8xf32> to vector<2x8x8xbf16>
    %75 = arith.truncf %52 : vector<2x8x8xf32> to vector<2x8x8xbf16>
    "tpu.trace_start"() <{level = 10 : i32, message = "bqk,bkd->bqd"}> : () -> ()
    %cst_34 = arith.constant dense<0.000000e+00> : vector<2x8x8xf32>
    %76 = tpu.matmul %74, %75, %cst_34 {dimension_numbers = #tpu.dot_dimension_numbers<[2], [1], [1], [2], [0, 0, 0, 1, 1, 2], [0], [0]>} : vector<2x8x8xbf16>, vector<2x8x8xbf16>, vector<2x8x8xf32> -> vector<2x8x8xf32>
    "tpu.trace_stop"() : () -> ()
    %77 = vector.extract_strided_slice %49 {offsets = [0, 0, 8], sizes = [2, 8, 8], strides = [1, 1, 1]} : vector<2x8x96xf32> to vector<2x8x8xf32>
    %78 = vector.extract_strided_slice %49 {offsets = [0, 0, 40], sizes = [2, 8, 8], strides = [1, 1, 1]} : vector<2x8x96xf32> to vector<2x8x8xf32>
    %79 = vector.extract_strided_slice %49 {offsets = [0, 0, 72], sizes = [2, 8, 8], strides = [1, 1, 1]} : vector<2x8x96xf32> to vector<2x8x8xf32>
    %80 = arith.truncf %77 : vector<2x8x8xf32> to vector<2x8x8xbf16>
    %81 = arith.truncf %78 : vector<2x8x8xf32> to vector<2x8x8xbf16>
    "tpu.trace_start"() <{level = 10 : i32, message = "bqd,bkd->bqk"}> : () -> ()
    %cst_35 = arith.constant dense<0.000000e+00> : vector<2x8x8xf32>
    %82 = tpu.matmul %80, %81, %cst_35 {dimension_numbers = #tpu.dot_dimension_numbers<[2], [2], [1], [1], [0, 0, 0, 1, 1, 1], [0], [0]>} : vector<2x8x8xbf16>, vector<2x8x8xbf16>, vector<2x8x8xf32> -> vector<2x8x8xf32>
    "tpu.trace_stop"() : () -> ()
    %cst_36 = arith.constant 0.353553385 : f32
    %83 = vector.broadcast %cst_36 : f32 to vector<2x8x8xf32>
    %84 = arith.mulf %82, %83 : vector<2x8x8xf32>
    %cst_37 = arith.constant 0.000000e+00 : f32
    %85 = vector.broadcast %cst_37 : f32 to vector<2x8x1xf32>
    %86 = arith.cmpf oeq, %16, %85 : vector<2x8x1xf32>
    %cst_38 = arith.constant -1.000000e+09 : f32
    %87 = vector.shape_cast %86 : vector<2x8x1xi1> to vector<2x8x1xi1>
    %88 = vector.broadcast %87 : vector<2x8x1xi1> to vector<2x8x8xi1>
    %89 = vector.broadcast %cst_38 : f32 to vector<2x8x8xf32>
    %90 = arith.select %88, %89, %84 : vector<2x8x8xi1>, vector<2x8x8xf32>
    %cst_39 = arith.constant dense<0xFF800000> : vector<2x8xf32>
    %91 = vector.multi_reduction <maximumf>, %90, %cst_39 [2] : vector<2x8x8xf32> to vector<2x8xf32>
    %92 = vector.shape_cast %91 : vector<2x8xf32> to vector<2x8x1xf32>
    %93 = vector.broadcast %92 : vector<2x8x1xf32> to vector<2x8x8xf32>
    %94 = arith.subf %90, %93 : vector<2x8x8xf32>
    %95 = math.exp %94 : vector<2x8x8xf32>
    %cst_40 = arith.constant dense<0.000000e+00> : vector<2x8xf32>
    %96 = vector.multi_reduction <add>, %95, %cst_40 [2] : vector<2x8x8xf32> to vector<2x8xf32>
    %97 = vector.shape_cast %96 : vector<2x8xf32> to vector<2x8x1xf32>
    %98 = tpu.reciprocal %97 {approx = true} : vector<2x8x1xf32> -> vector<2x8x1xf32>
    %99 = vector.broadcast %98 : vector<2x8x1xf32> to vector<2x8x8xf32>
    %100 = arith.mulf %95, %99 : vector<2x8x8xf32>
    %101 = arith.truncf %100 : vector<2x8x8xf32> to vector<2x8x8xbf16>
    %102 = arith.truncf %79 : vector<2x8x8xf32> to vector<2x8x8xbf16>
    "tpu.trace_start"() <{level = 10 : i32, message = "bqk,bkd->bqd"}> : () -> ()
    %cst_41 = arith.constant dense<0.000000e+00> : vector<2x8x8xf32>
    %103 = tpu.matmul %101, %102, %cst_41 {dimension_numbers = #tpu.dot_dimension_numbers<[2], [1], [1], [2], [0, 0, 0, 1, 1, 2], [0], [0]>} : vector<2x8x8xbf16>, vector<2x8x8xbf16>, vector<2x8x8xf32> -> vector<2x8x8xf32>
    "tpu.trace_stop"() : () -> ()
    %104 = vector.extract_strided_slice %49 {offsets = [0, 0, 16], sizes = [2, 8, 8], strides = [1, 1, 1]} : vector<2x8x96xf32> to vector<2x8x8xf32>
    %105 = vector.extract_strided_slice %49 {offsets = [0, 0, 48], sizes = [2, 8, 8], strides = [1, 1, 1]} : vector<2x8x96xf32> to vector<2x8x8xf32>
    %106 = vector.extract_strided_slice %49 {offsets = [0, 0, 80], sizes = [2, 8, 8], strides = [1, 1, 1]} : vector<2x8x96xf32> to vector<2x8x8xf32>
    %107 = arith.truncf %104 : vector<2x8x8xf32> to vector<2x8x8xbf16>
    %108 = arith.truncf %105 : vector<2x8x8xf32> to vector<2x8x8xbf16>
    "tpu.trace_start"() <{level = 10 : i32, message = "bqd,bkd->bqk"}> : () -> ()
    %cst_42 = arith.constant dense<0.000000e+00> : vector<2x8x8xf32>
    %109 = tpu.matmul %107, %108, %cst_42 {dimension_numbers = #tpu.dot_dimension_numbers<[2], [2], [1], [1], [0, 0, 0, 1, 1, 1], [0], [0]>} : vector<2x8x8xbf16>, vector<2x8x8xbf16>, vector<2x8x8xf32> -> vector<2x8x8xf32>
    "tpu.trace_stop"() : () -> ()
    %cst_43 = arith.constant 0.353553385 : f32
    %110 = vector.broadcast %cst_43 : f32 to vector<2x8x8xf32>
    %111 = arith.mulf %109, %110 : vector<2x8x8xf32>
    %cst_44 = arith.constant 0.000000e+00 : f32
    %112 = vector.broadcast %cst_44 : f32 to vector<2x8x1xf32>
    %113 = arith.cmpf oeq, %16, %112 : vector<2x8x1xf32>
    %cst_45 = arith.constant -1.000000e+09 : f32
    %114 = vector.shape_cast %113 : vector<2x8x1xi1> to vector<2x8x1xi1>
    %115 = vector.broadcast %114 : vector<2x8x1xi1> to vector<2x8x8xi1>
    %116 = vector.broadcast %cst_45 : f32 to vector<2x8x8xf32>
    %117 = arith.select %115, %116, %111 : vector<2x8x8xi1>, vector<2x8x8xf32>
    %cst_46 = arith.constant dense<0xFF800000> : vector<2x8xf32>
    %118 = vector.multi_reduction <maximumf>, %117, %cst_46 [2] : vector<2x8x8xf32> to vector<2x8xf32>
    %119 = vector.shape_cast %118 : vector<2x8xf32> to vector<2x8x1xf32>
    %120 = vector.broadcast %119 : vector<2x8x1xf32> to vector<2x8x8xf32>
    %121 = arith.subf %117, %120 : vector<2x8x8xf32>
    %122 = math.exp %121 : vector<2x8x8xf32>
    %cst_47 = arith.constant dense<0.000000e+00> : vector<2x8xf32>
    %123 = vector.multi_reduction <add>, %122, %cst_47 [2] : vector<2x8x8xf32> to vector<2x8xf32>
    %124 = vector.shape_cast %123 : vector<2x8xf32> to vector<2x8x1xf32>
    %125 = tpu.reciprocal %124 {approx = true} : vector<2x8x1xf32> -> vector<2x8x1xf32>
    %126 = vector.broadcast %125 : vector<2x8x1xf32> to vector<2x8x8xf32>
    %127 = arith.mulf %122, %126 : vector<2x8x8xf32>
    %128 = arith.truncf %127 : vector<2x8x8xf32> to vector<2x8x8xbf16>
    %129 = arith.truncf %106 : vector<2x8x8xf32> to vector<2x8x8xbf16>
    "tpu.trace_start"() <{level = 10 : i32, message = "bqk,bkd->bqd"}> : () -> ()
    %cst_48 = arith.constant dense<0.000000e+00> : vector<2x8x8xf32>
    %130 = tpu.matmul %128, %129, %cst_48 {dimension_numbers = #tpu.dot_dimension_numbers<[2], [1], [1], [2], [0, 0, 0, 1, 1, 2], [0], [0]>} : vector<2x8x8xbf16>, vector<2x8x8xbf16>, vector<2x8x8xf32> -> vector<2x8x8xf32>
    "tpu.trace_stop"() : () -> ()
    %131 = vector.extract_strided_slice %49 {offsets = [0, 0, 24], sizes = [2, 8, 8], strides = [1, 1, 1]} : vector<2x8x96xf32> to vector<2x8x8xf32>
    %132 = vector.extract_strided_slice %49 {offsets = [0, 0, 56], sizes = [2, 8, 8], strides = [1, 1, 1]} : vector<2x8x96xf32> to vector<2x8x8xf32>
    %133 = vector.extract_strided_slice %49 {offsets = [0, 0, 88], sizes = [2, 8, 8], strides = [1, 1, 1]} : vector<2x8x96xf32> to vector<2x8x8xf32>
    %134 = arith.truncf %131 : vector<2x8x8xf32> to vector<2x8x8xbf16>
    %135 = arith.truncf %132 : vector<2x8x8xf32> to vector<2x8x8xbf16>
    "tpu.trace_start"() <{level = 10 : i32, message = "bqd,bkd->bqk"}> : () -> ()
    %cst_49 = arith.constant dense<0.000000e+00> : vector<2x8x8xf32>
    %136 = tpu.matmul %134, %135, %cst_49 {dimension_numbers = #tpu.dot_dimension_numbers<[2], [2], [1], [1], [0, 0, 0, 1, 1, 1], [0], [0]>} : vector<2x8x8xbf16>, vector<2x8x8xbf16>, vector<2x8x8xf32> -> vector<2x8x8xf32>
    "tpu.trace_stop"() : () -> ()
    %cst_50 = arith.constant 0.353553385 : f32
    %137 = vector.broadcast %cst_50 : f32 to vector<2x8x8xf32>
    %138 = arith.mulf %136, %137 : vector<2x8x8xf32>
    %cst_51 = arith.constant 0.000000e+00 : f32
    %139 = vector.broadcast %cst_51 : f32 to vector<2x8x1xf32>
    %140 = arith.cmpf oeq, %16, %139 : vector<2x8x1xf32>
    %cst_52 = arith.constant -1.000000e+09 : f32
    %141 = vector.shape_cast %140 : vector<2x8x1xi1> to vector<2x8x1xi1>
    %142 = vector.broadcast %141 : vector<2x8x1xi1> to vector<2x8x8xi1>
    %143 = vector.broadcast %cst_52 : f32 to vector<2x8x8xf32>
    %144 = arith.select %142, %143, %138 : vector<2x8x8xi1>, vector<2x8x8xf32>
    %cst_53 = arith.constant dense<0xFF800000> : vector<2x8xf32>
    %145 = vector.multi_reduction <maximumf>, %144, %cst_53 [2] : vector<2x8x8xf32> to vector<2x8xf32>
    %146 = vector.shape_cast %145 : vector<2x8xf32> to vector<2x8x1xf32>
    %147 = vector.broadcast %146 : vector<2x8x1xf32> to vector<2x8x8xf32>
    %148 = arith.subf %144, %147 : vector<2x8x8xf32>
    %149 = math.exp %148 : vector<2x8x8xf32>
    %cst_54 = arith.constant dense<0.000000e+00> : vector<2x8xf32>
    %150 = vector.multi_reduction <add>, %149, %cst_54 [2] : vector<2x8x8xf32> to vector<2x8xf32>
    %151 = vector.shape_cast %150 : vector<2x8xf32> to vector<2x8x1xf32>
    %152 = tpu.reciprocal %151 {approx = true} : vector<2x8x1xf32> -> vector<2x8x1xf32>
    %153 = vector.broadcast %152 : vector<2x8x1xf32> to vector<2x8x8xf32>
    %154 = arith.mulf %149, %153 : vector<2x8x8xf32>
    %155 = arith.truncf %154 : vector<2x8x8xf32> to vector<2x8x8xbf16>
    %156 = arith.truncf %133 : vector<2x8x8xf32> to vector<2x8x8xbf16>
    "tpu.trace_start"() <{level = 10 : i32, message = "bqk,bkd->bqd"}> : () -> ()
    %cst_55 = arith.constant dense<0.000000e+00> : vector<2x8x8xf32>
    %157 = tpu.matmul %155, %156, %cst_55 {dimension_numbers = #tpu.dot_dimension_numbers<[2], [1], [1], [2], [0, 0, 0, 1, 1, 2], [0], [0]>} : vector<2x8x8xbf16>, vector<2x8x8xbf16>, vector<2x8x8xf32> -> vector<2x8x8xf32>
    "tpu.trace_stop"() : () -> ()
    %158 = tpu.concatenate %76, %103, %130, %157 in 2 : vector<2x8x8xf32>, vector<2x8x8xf32>, vector<2x8x8xf32>, vector<2x8x8xf32> -> vector<2x8x32xf32>
    %159 = vector.shape_cast %158 : vector<2x8x32xf32> to vector<16x32xf32>
    %c0_56 = arith.constant 0 : index
    %c0_57 = arith.constant 0 : index
    %c0_58 = arith.constant 0 : index
    %160 = vector.load %arg10[%c0_56, %c0_57, %c0_58] : memref<2x32x32xbf16, #tpu.memory_space<vmem>>, vector<1x32x32xbf16>
    %161 = vector.shape_cast %160 : vector<1x32x32xbf16> to vector<32x32xbf16>
    %162 = arith.truncf %159 : vector<16x32xf32> to vector<16x32xbf16>
    %cst_59 = arith.constant dense<0.000000e+00> : vector<16x32xf32>
    %163 = tpu.matmul %162, %161, %cst_59 {dimension_numbers = #tpu.dot_dimension_numbers<[1], [0], [0], [1], [0, 0, 1, 1], [], []>} : vector<16x32xbf16>, vector<32x32xbf16>, vector<16x32xf32> -> vector<16x32xf32>
    %164 = arith.addf %14, %163 : vector<16x32xf32>
    %c0_60 = arith.constant 0 : index
    %c0_61 = arith.constant 0 : index
    %c0_62 = arith.constant 0 : index
    %165 = vector.load %arg11[%c0_60, %c0_61, %c0_62] : memref<2x1x32xf32, #tpu.memory_space<vmem>>, vector<1x1x32xf32>
    %166 = vector.shape_cast %165 : vector<1x1x32xf32> to vector<1x32xf32>
    %167 = vector.broadcast %166 : vector<1x32xf32> to vector<16x32xf32>
    %168 = arith.addf %164, %167 : vector<16x32xf32>
    %c0_63 = arith.constant 0 : index
    %c0_64 = arith.constant 0 : index
    %c0_65 = arith.constant 0 : index
    %169 = vector.load %arg12[%c0_63, %c0_64, %c0_65] : memref<2x1x32xf32, #tpu.memory_space<vmem>>, vector<1x1x32xf32>
    %170 = vector.shape_cast %169 : vector<1x1x32xf32> to vector<1x32xf32>
    %c0_66 = arith.constant 0 : index
    %c0_67 = arith.constant 0 : index
    %c0_68 = arith.constant 0 : index
    %171 = vector.load %arg13[%c0_66, %c0_67, %c0_68] : memref<2x1x32xf32, #tpu.memory_space<vmem>>, vector<1x1x32xf32>
    %172 = vector.shape_cast %171 : vector<1x1x32xf32> to vector<1x32xf32>
    %cst_69 = arith.constant dense<0.000000e+00> : vector<16xf32>
    %173 = vector.multi_reduction <add>, %168, %cst_69 [1] : vector<16x32xf32> to vector<16xf32>
    %174 = vector.shape_cast %173 : vector<16xf32> to vector<16x1xf32>
    %cst_70 = arith.constant 3.200000e+01 : f32
    %175 = vector.broadcast %cst_70 : f32 to vector<16x1xf32>
    %176 = arith.divf %174, %175 : vector<16x1xf32>
    %177 = vector.broadcast %176 : vector<16x1xf32> to vector<16x32xf32>
    %178 = arith.subf %168, %177 : vector<16x32xf32>
    %179 = arith.mulf %178, %178 : vector<16x32xf32>
    %cst_71 = arith.constant dense<0.000000e+00> : vector<16xf32>
    %180 = vector.multi_reduction <add>, %179, %cst_71 [1] : vector<16x32xf32> to vector<16xf32>
    %181 = vector.shape_cast %180 : vector<16xf32> to vector<16x1xf32>
    %cst_72 = arith.constant 3.100000e+01 : f32
    %182 = vector.broadcast %cst_72 : f32 to vector<16x1xf32>
    %183 = arith.divf %181, %182 : vector<16x1xf32>
    %184 = vector.broadcast %170 : vector<1x32xf32> to vector<16x32xf32>
    %185 = arith.mulf %184, %178 : vector<16x32xf32>
    %186 = math.sqrt %183 : vector<16x1xf32>
    %cst_73 = arith.constant 9.99999997E-7 : f32
    %187 = vector.broadcast %cst_73 : f32 to vector<16x1xf32>
    %188 = arith.addf %186, %187 : vector<16x1xf32>
    %189 = vector.broadcast %188 : vector<16x1xf32> to vector<16x32xf32>
    %190 = arith.divf %185, %189 : vector<16x32xf32>
    %191 = vector.broadcast %172 : vector<1x32xf32> to vector<16x32xf32>
    %192 = arith.addf %190, %191 : vector<16x32xf32>
    %c0_74 = arith.constant 0 : index
    %c0_75 = arith.constant 0 : index
    %c0_76 = arith.constant 0 : index
    %193 = vector.load %arg14[%c0_74, %c0_75, %c0_76] : memref<2x32x32xbf16, #tpu.memory_space<vmem>>, vector<1x32x32xbf16>
    %194 = vector.shape_cast %193 : vector<1x32x32xbf16> to vector<32x32xbf16>
    %195 = arith.truncf %192 : vector<16x32xf32> to vector<16x32xbf16>
    %cst_77 = arith.constant dense<0.000000e+00> : vector<16x32xf32>
    %196 = tpu.matmul %195, %194, %cst_77 {dimension_numbers = #tpu.dot_dimension_numbers<[1], [0], [0], [1], [0, 0, 1, 1], [], []>} : vector<16x32xbf16>, vector<32x32xbf16>, vector<16x32xf32> -> vector<16x32xf32>
    %c0_78 = arith.constant 0 : index
    %c0_79 = arith.constant 0 : index
    %c0_80 = arith.constant 0 : index
    %197 = vector.load %arg15[%c0_78, %c0_79, %c0_80] : memref<2x1x32xf32, #tpu.memory_space<vmem>>, vector<1x1x32xf32>
    %198 = vector.shape_cast %197 : vector<1x1x32xf32> to vector<1x32xf32>
    %199 = vector.broadcast %198 : vector<1x32xf32> to vector<16x32xf32>
    %200 = arith.addf %196, %199 : vector<16x32xf32>
    %cst_81 = arith.constant 0.000000e+00 : f32
    %201 = vector.broadcast %cst_81 : f32 to vector<16x32xf32>
    %202 = arith.maximumf %200, %201 : vector<16x32xf32>
    %c0_82 = arith.constant 0 : index
    %c0_83 = arith.constant 0 : index
    %c0_84 = arith.constant 0 : index
    %203 = vector.load %arg16[%c0_82, %c0_83, %c0_84] : memref<2x32x32xbf16, #tpu.memory_space<vmem>>, vector<1x32x32xbf16>
    %204 = vector.shape_cast %203 : vector<1x32x32xbf16> to vector<32x32xbf16>
    %205 = arith.truncf %202 : vector<16x32xf32> to vector<16x32xbf16>
    %cst_85 = arith.constant dense<0.000000e+00> : vector<16x32xf32>
    %206 = tpu.matmul %205, %204, %cst_85 {dimension_numbers = #tpu.dot_dimension_numbers<[1], [0], [0], [1], [0, 0, 1, 1], [], []>} : vector<16x32xbf16>, vector<32x32xbf16>, vector<16x32xf32> -> vector<16x32xf32>
    %207 = arith.addf %168, %206 : vector<16x32xf32>
    %c0_86 = arith.constant 0 : index
    %c0_87 = arith.constant 0 : index
    %c0_88 = arith.constant 0 : index
    %208 = vector.load %arg17[%c0_86, %c0_87, %c0_88] : memref<2x1x32xf32, #tpu.memory_space<vmem>>, vector<1x1x32xf32>
    %209 = vector.shape_cast %208 : vector<1x1x32xf32> to vector<1x32xf32>
    %210 = vector.broadcast %209 : vector<1x32xf32> to vector<16x32xf32>
    %211 = arith.addf %207, %210 : vector<16x32xf32>
    %c1 = arith.constant 1 : index
    %c0_89 = arith.constant 0 : index
    %c0_90 = arith.constant 0 : index
    %212 = vector.load %arg6[%c1, %c0_89, %c0_90] : memref<2x1x32xf32, #tpu.memory_space<vmem>>, vector<1x1x32xf32>
    %213 = vector.shape_cast %212 : vector<1x1x32xf32> to vector<1x32xf32>
    %c1_91 = arith.constant 1 : index
    %c0_92 = arith.constant 0 : index
    %c0_93 = arith.constant 0 : index
    %214 = vector.load %arg7[%c1_91, %c0_92, %c0_93] : memref<2x1x32xf32, #tpu.memory_space<vmem>>, vector<1x1x32xf32>
    %215 = vector.shape_cast %214 : vector<1x1x32xf32> to vector<1x32xf32>
    %cst_94 = arith.constant dense<0.000000e+00> : vector<16xf32>
    %216 = vector.multi_reduction <add>, %211, %cst_94 [1] : vector<16x32xf32> to vector<16xf32>
    %217 = vector.shape_cast %216 : vector<16xf32> to vector<16x1xf32>
    %cst_95 = arith.constant 3.200000e+01 : f32
    %218 = vector.broadcast %cst_95 : f32 to vector<16x1xf32>
    %219 = arith.divf %217, %218 : vector<16x1xf32>
    %220 = vector.broadcast %219 : vector<16x1xf32> to vector<16x32xf32>
    %221 = arith.subf %211, %220 : vector<16x32xf32>
    %222 = arith.mulf %221, %221 : vector<16x32xf32>
    %cst_96 = arith.constant dense<0.000000e+00> : vector<16xf32>
    %223 = vector.multi_reduction <add>, %222, %cst_96 [1] : vector<16x32xf32> to vector<16xf32>
    %224 = vector.shape_cast %223 : vector<16xf32> to vector<16x1xf32>
    %cst_97 = arith.constant 3.100000e+01 : f32
    %225 = vector.broadcast %cst_97 : f32 to vector<16x1xf32>
    %226 = arith.divf %224, %225 : vector<16x1xf32>
    %227 = vector.broadcast %213 : vector<1x32xf32> to vector<16x32xf32>
    %228 = arith.mulf %227, %221 : vector<16x32xf32>
    %229 = math.sqrt %226 : vector<16x1xf32>
    %cst_98 = arith.constant 9.99999997E-7 : f32
    %230 = vector.broadcast %cst_98 : f32 to vector<16x1xf32>
    %231 = arith.addf %229, %230 : vector<16x1xf32>
    %232 = vector.broadcast %231 : vector<16x1xf32> to vector<16x32xf32>
    %233 = arith.divf %228, %232 : vector<16x32xf32>
    %234 = vector.broadcast %215 : vector<1x32xf32> to vector<16x32xf32>
    %235 = arith.addf %233, %234 : vector<16x32xf32>
    %c1_99 = arith.constant 1 : index
    %c0_100 = arith.constant 0 : index
    %c0_101 = arith.constant 0 : index
    %236 = vector.load %arg8[%c1_99, %c0_100, %c0_101] : memref<2x32x96xbf16, #tpu.memory_space<vmem>>, vector<1x32x96xbf16>
    %237 = vector.shape_cast %236 : vector<1x32x96xbf16> to vector<32x96xbf16>
    %238 = arith.truncf %235 : vector<16x32xf32> to vector<16x32xbf16>
    %cst_102 = arith.constant dense<0.000000e+00> : vector<16x96xf32>
    %239 = tpu.matmul %238, %237, %cst_102 {dimension_numbers = #tpu.dot_dimension_numbers<[1], [0], [0], [1], [0, 0, 1, 1], [], []>} : vector<16x32xbf16>, vector<32x96xbf16>, vector<16x96xf32> -> vector<16x96xf32>
    %c1_103 = arith.constant 1 : index
    %c0_104 = arith.constant 0 : index
    %c0_105 = arith.constant 0 : index
    %240 = vector.load %arg9[%c1_103, %c0_104, %c0_105] : memref<2x1x96xf32, #tpu.memory_space<vmem>>, vector<1x1x96xf32>
    %241 = vector.shape_cast %240 : vector<1x1x96xf32> to vector<1x96xf32>
    %242 = vector.broadcast %241 : vector<1x96xf32> to vector<16x96xf32>
    %243 = arith.addf %239, %242 : vector<16x96xf32>
    %244 = vector.shape_cast %243 : vector<16x96xf32> to vector<2x8x96xf32>
    %245 = vector.extract_strided_slice %244 {offsets = [0, 0, 0], sizes = [2, 8, 8], strides = [1, 1, 1]} : vector<2x8x96xf32> to vector<2x8x8xf32>
    %246 = vector.extract_strided_slice %244 {offsets = [0, 0, 32], sizes = [2, 8, 8], strides = [1, 1, 1]} : vector<2x8x96xf32> to vector<2x8x8xf32>
    %247 = vector.extract_strided_slice %244 {offsets = [0, 0, 64], sizes = [2, 8, 8], strides = [1, 1, 1]} : vector<2x8x96xf32> to vector<2x8x8xf32>
    %248 = arith.truncf %245 : vector<2x8x8xf32> to vector<2x8x8xbf16>
    %249 = arith.truncf %246 : vector<2x8x8xf32> to vector<2x8x8xbf16>
    "tpu.trace_start"() <{level = 10 : i32, message = "bqd,bkd->bqk"}> : () -> ()
    %cst_106 = arith.constant dense<0.000000e+00> : vector<2x8x8xf32>
    %250 = tpu.matmul %248, %249, %cst_106 {dimension_numbers = #tpu.dot_dimension_numbers<[2], [2], [1], [1], [0, 0, 0, 1, 1, 1], [0], [0]>} : vector<2x8x8xbf16>, vector<2x8x8xbf16>, vector<2x8x8xf32> -> vector<2x8x8xf32>
    "tpu.trace_stop"() : () -> ()
    %cst_107 = arith.constant 0.353553385 : f32
    %251 = vector.broadcast %cst_107 : f32 to vector<2x8x8xf32>
    %252 = arith.mulf %250, %251 : vector<2x8x8xf32>
    %cst_108 = arith.constant 0.000000e+00 : f32
    %253 = vector.broadcast %cst_108 : f32 to vector<2x8x1xf32>
    %254 = arith.cmpf oeq, %16, %253 : vector<2x8x1xf32>
    %cst_109 = arith.constant -1.000000e+09 : f32
    %255 = vector.shape_cast %254 : vector<2x8x1xi1> to vector<2x8x1xi1>
    %256 = vector.broadcast %255 : vector<2x8x1xi1> to vector<2x8x8xi1>
    %257 = vector.broadcast %cst_109 : f32 to vector<2x8x8xf32>
    %258 = arith.select %256, %257, %252 : vector<2x8x8xi1>, vector<2x8x8xf32>
    %cst_110 = arith.constant dense<0xFF800000> : vector<2x8xf32>
    %259 = vector.multi_reduction <maximumf>, %258, %cst_110 [2] : vector<2x8x8xf32> to vector<2x8xf32>
    %260 = vector.shape_cast %259 : vector<2x8xf32> to vector<2x8x1xf32>
    %261 = vector.broadcast %260 : vector<2x8x1xf32> to vector<2x8x8xf32>
    %262 = arith.subf %258, %261 : vector<2x8x8xf32>
    %263 = math.exp %262 : vector<2x8x8xf32>
    %cst_111 = arith.constant dense<0.000000e+00> : vector<2x8xf32>
    %264 = vector.multi_reduction <add>, %263, %cst_111 [2] : vector<2x8x8xf32> to vector<2x8xf32>
    %265 = vector.shape_cast %264 : vector<2x8xf32> to vector<2x8x1xf32>
    %266 = tpu.reciprocal %265 {approx = true} : vector<2x8x1xf32> -> vector<2x8x1xf32>
    %267 = vector.broadcast %266 : vector<2x8x1xf32> to vector<2x8x8xf32>
    %268 = arith.mulf %263, %267 : vector<2x8x8xf32>
    %269 = arith.truncf %268 : vector<2x8x8xf32> to vector<2x8x8xbf16>
    %270 = arith.truncf %247 : vector<2x8x8xf32> to vector<2x8x8xbf16>
    "tpu.trace_start"() <{level = 10 : i32, message = "bqk,bkd->bqd"}> : () -> ()
    %cst_112 = arith.constant dense<0.000000e+00> : vector<2x8x8xf32>
    %271 = tpu.matmul %269, %270, %cst_112 {dimension_numbers = #tpu.dot_dimension_numbers<[2], [1], [1], [2], [0, 0, 0, 1, 1, 2], [0], [0]>} : vector<2x8x8xbf16>, vector<2x8x8xbf16>, vector<2x8x8xf32> -> vector<2x8x8xf32>
    "tpu.trace_stop"() : () -> ()
    %272 = vector.extract_strided_slice %244 {offsets = [0, 0, 8], sizes = [2, 8, 8], strides = [1, 1, 1]} : vector<2x8x96xf32> to vector<2x8x8xf32>
    %273 = vector.extract_strided_slice %244 {offsets = [0, 0, 40], sizes = [2, 8, 8], strides = [1, 1, 1]} : vector<2x8x96xf32> to vector<2x8x8xf32>
    %274 = vector.extract_strided_slice %244 {offsets = [0, 0, 72], sizes = [2, 8, 8], strides = [1, 1, 1]} : vector<2x8x96xf32> to vector<2x8x8xf32>
    %275 = arith.truncf %272 : vector<2x8x8xf32> to vector<2x8x8xbf16>
    %276 = arith.truncf %273 : vector<2x8x8xf32> to vector<2x8x8xbf16>
    "tpu.trace_start"() <{level = 10 : i32, message = "bqd,bkd->bqk"}> : () -> ()
    %cst_113 = arith.constant dense<0.000000e+00> : vector<2x8x8xf32>
    %277 = tpu.matmul %275, %276, %cst_113 {dimension_numbers = #tpu.dot_dimension_numbers<[2], [2], [1], [1], [0, 0, 0, 1, 1, 1], [0], [0]>} : vector<2x8x8xbf16>, vector<2x8x8xbf16>, vector<2x8x8xf32> -> vector<2x8x8xf32>
    "tpu.trace_stop"() : () -> ()
    %cst_114 = arith.constant 0.353553385 : f32
    %278 = vector.broadcast %cst_114 : f32 to vector<2x8x8xf32>
    %279 = arith.mulf %277, %278 : vector<2x8x8xf32>
    %cst_115 = arith.constant 0.000000e+00 : f32
    %280 = vector.broadcast %cst_115 : f32 to vector<2x8x1xf32>
    %281 = arith.cmpf oeq, %16, %280 : vector<2x8x1xf32>
    %cst_116 = arith.constant -1.000000e+09 : f32
    %282 = vector.shape_cast %281 : vector<2x8x1xi1> to vector<2x8x1xi1>
    %283 = vector.broadcast %282 : vector<2x8x1xi1> to vector<2x8x8xi1>
    %284 = vector.broadcast %cst_116 : f32 to vector<2x8x8xf32>
    %285 = arith.select %283, %284, %279 : vector<2x8x8xi1>, vector<2x8x8xf32>
    %cst_117 = arith.constant dense<0xFF800000> : vector<2x8xf32>
    %286 = vector.multi_reduction <maximumf>, %285, %cst_117 [2] : vector<2x8x8xf32> to vector<2x8xf32>
    %287 = vector.shape_cast %286 : vector<2x8xf32> to vector<2x8x1xf32>
    %288 = vector.broadcast %287 : vector<2x8x1xf32> to vector<2x8x8xf32>
    %289 = arith.subf %285, %288 : vector<2x8x8xf32>
    %290 = math.exp %289 : vector<2x8x8xf32>
    %cst_118 = arith.constant dense<0.000000e+00> : vector<2x8xf32>
    %291 = vector.multi_reduction <add>, %290, %cst_118 [2] : vector<2x8x8xf32> to vector<2x8xf32>
    %292 = vector.shape_cast %291 : vector<2x8xf32> to vector<2x8x1xf32>
    %293 = tpu.reciprocal %292 {approx = true} : vector<2x8x1xf32> -> vector<2x8x1xf32>
    %294 = vector.broadcast %293 : vector<2x8x1xf32> to vector<2x8x8xf32>
    %295 = arith.mulf %290, %294 : vector<2x8x8xf32>
    %296 = arith.truncf %295 : vector<2x8x8xf32> to vector<2x8x8xbf16>
    %297 = arith.truncf %274 : vector<2x8x8xf32> to vector<2x8x8xbf16>
    "tpu.trace_start"() <{level = 10 : i32, message = "bqk,bkd->bqd"}> : () -> ()
    %cst_119 = arith.constant dense<0.000000e+00> : vector<2x8x8xf32>
    %298 = tpu.matmul %296, %297, %cst_119 {dimension_numbers = #tpu.dot_dimension_numbers<[2], [1], [1], [2], [0, 0, 0, 1, 1, 2], [0], [0]>} : vector<2x8x8xbf16>, vector<2x8x8xbf16>, vector<2x8x8xf32> -> vector<2x8x8xf32>
    "tpu.trace_stop"() : () -> ()
    %299 = vector.extract_strided_slice %244 {offsets = [0, 0, 16], sizes = [2, 8, 8], strides = [1, 1, 1]} : vector<2x8x96xf32> to vector<2x8x8xf32>
    %300 = vector.extract_strided_slice %244 {offsets = [0, 0, 48], sizes = [2, 8, 8], strides = [1, 1, 1]} : vector<2x8x96xf32> to vector<2x8x8xf32>
    %301 = vector.extract_strided_slice %244 {offsets = [0, 0, 80], sizes = [2, 8, 8], strides = [1, 1, 1]} : vector<2x8x96xf32> to vector<2x8x8xf32>
    %302 = arith.truncf %299 : vector<2x8x8xf32> to vector<2x8x8xbf16>
    %303 = arith.truncf %300 : vector<2x8x8xf32> to vector<2x8x8xbf16>
    "tpu.trace_start"() <{level = 10 : i32, message = "bqd,bkd->bqk"}> : () -> ()
    %cst_120 = arith.constant dense<0.000000e+00> : vector<2x8x8xf32>
    %304 = tpu.matmul %302, %303, %cst_120 {dimension_numbers = #tpu.dot_dimension_numbers<[2], [2], [1], [1], [0, 0, 0, 1, 1, 1], [0], [0]>} : vector<2x8x8xbf16>, vector<2x8x8xbf16>, vector<2x8x8xf32> -> vector<2x8x8xf32>
    "tpu.trace_stop"() : () -> ()
    %cst_121 = arith.constant 0.353553385 : f32
    %305 = vector.broadcast %cst_121 : f32 to vector<2x8x8xf32>
    %306 = arith.mulf %304, %305 : vector<2x8x8xf32>
    %cst_122 = arith.constant 0.000000e+00 : f32
    %307 = vector.broadcast %cst_122 : f32 to vector<2x8x1xf32>
    %308 = arith.cmpf oeq, %16, %307 : vector<2x8x1xf32>
    %cst_123 = arith.constant -1.000000e+09 : f32
    %309 = vector.shape_cast %308 : vector<2x8x1xi1> to vector<2x8x1xi1>
    %310 = vector.broadcast %309 : vector<2x8x1xi1> to vector<2x8x8xi1>
    %311 = vector.broadcast %cst_123 : f32 to vector<2x8x8xf32>
    %312 = arith.select %310, %311, %306 : vector<2x8x8xi1>, vector<2x8x8xf32>
    %cst_124 = arith.constant dense<0xFF800000> : vector<2x8xf32>
    %313 = vector.multi_reduction <maximumf>, %312, %cst_124 [2] : vector<2x8x8xf32> to vector<2x8xf32>
    %314 = vector.shape_cast %313 : vector<2x8xf32> to vector<2x8x1xf32>
    %315 = vector.broadcast %314 : vector<2x8x1xf32> to vector<2x8x8xf32>
    %316 = arith.subf %312, %315 : vector<2x8x8xf32>
    %317 = math.exp %316 : vector<2x8x8xf32>
    %cst_125 = arith.constant dense<0.000000e+00> : vector<2x8xf32>
    %318 = vector.multi_reduction <add>, %317, %cst_125 [2] : vector<2x8x8xf32> to vector<2x8xf32>
    %319 = vector.shape_cast %318 : vector<2x8xf32> to vector<2x8x1xf32>
    %320 = tpu.reciprocal %319 {approx = true} : vector<2x8x1xf32> -> vector<2x8x1xf32>
    %321 = vector.broadcast %320 : vector<2x8x1xf32> to vector<2x8x8xf32>
    %322 = arith.mulf %317, %321 : vector<2x8x8xf32>
    %323 = arith.truncf %322 : vector<2x8x8xf32> to vector<2x8x8xbf16>
    %324 = arith.truncf %301 : vector<2x8x8xf32> to vector<2x8x8xbf16>
    "tpu.trace_start"() <{level = 10 : i32, message = "bqk,bkd->bqd"}> : () -> ()
    %cst_126 = arith.constant dense<0.000000e+00> : vector<2x8x8xf32>
    %325 = tpu.matmul %323, %324, %cst_126 {dimension_numbers = #tpu.dot_dimension_numbers<[2], [1], [1], [2], [0, 0, 0, 1, 1, 2], [0], [0]>} : vector<2x8x8xbf16>, vector<2x8x8xbf16>, vector<2x8x8xf32> -> vector<2x8x8xf32>
    "tpu.trace_stop"() : () -> ()
    %326 = vector.extract_strided_slice %244 {offsets = [0, 0, 24], sizes = [2, 8, 8], strides = [1, 1, 1]} : vector<2x8x96xf32> to vector<2x8x8xf32>
    %327 = vector.extract_strided_slice %244 {offsets = [0, 0, 56], sizes = [2, 8, 8], strides = [1, 1, 1]} : vector<2x8x96xf32> to vector<2x8x8xf32>
    %328 = vector.extract_strided_slice %244 {offsets = [0, 0, 88], sizes = [2, 8, 8], strides = [1, 1, 1]} : vector<2x8x96xf32> to vector<2x8x8xf32>
    %329 = arith.truncf %326 : vector<2x8x8xf32> to vector<2x8x8xbf16>
    %330 = arith.truncf %327 : vector<2x8x8xf32> to vector<2x8x8xbf16>
    "tpu.trace_start"() <{level = 10 : i32, message = "bqd,bkd->bqk"}> : () -> ()
    %cst_127 = arith.constant dense<0.000000e+00> : vector<2x8x8xf32>
    %331 = tpu.matmul %329, %330, %cst_127 {dimension_numbers = #tpu.dot_dimension_numbers<[2], [2], [1], [1], [0, 0, 0, 1, 1, 1], [0], [0]>} : vector<2x8x8xbf16>, vector<2x8x8xbf16>, vector<2x8x8xf32> -> vector<2x8x8xf32>
    "tpu.trace_stop"() : () -> ()
    %cst_128 = arith.constant 0.353553385 : f32
    %332 = vector.broadcast %cst_128 : f32 to vector<2x8x8xf32>
    %333 = arith.mulf %331, %332 : vector<2x8x8xf32>
    %cst_129 = arith.constant 0.000000e+00 : f32
    %334 = vector.broadcast %cst_129 : f32 to vector<2x8x1xf32>
    %335 = arith.cmpf oeq, %16, %334 : vector<2x8x1xf32>
    %cst_130 = arith.constant -1.000000e+09 : f32
    %336 = vector.shape_cast %335 : vector<2x8x1xi1> to vector<2x8x1xi1>
    %337 = vector.broadcast %336 : vector<2x8x1xi1> to vector<2x8x8xi1>
    %338 = vector.broadcast %cst_130 : f32 to vector<2x8x8xf32>
    %339 = arith.select %337, %338, %333 : vector<2x8x8xi1>, vector<2x8x8xf32>
    %cst_131 = arith.constant dense<0xFF800000> : vector<2x8xf32>
    %340 = vector.multi_reduction <maximumf>, %339, %cst_131 [2] : vector<2x8x8xf32> to vector<2x8xf32>
    %341 = vector.shape_cast %340 : vector<2x8xf32> to vector<2x8x1xf32>
    %342 = vector.broadcast %341 : vector<2x8x1xf32> to vector<2x8x8xf32>
    %343 = arith.subf %339, %342 : vector<2x8x8xf32>
    %344 = math.exp %343 : vector<2x8x8xf32>
    %cst_132 = arith.constant dense<0.000000e+00> : vector<2x8xf32>
    %345 = vector.multi_reduction <add>, %344, %cst_132 [2] : vector<2x8x8xf32> to vector<2x8xf32>
    %346 = vector.shape_cast %345 : vector<2x8xf32> to vector<2x8x1xf32>
    %347 = tpu.reciprocal %346 {approx = true} : vector<2x8x1xf32> -> vector<2x8x1xf32>
    %348 = vector.broadcast %347 : vector<2x8x1xf32> to vector<2x8x8xf32>
    %349 = arith.mulf %344, %348 : vector<2x8x8xf32>
    %350 = arith.truncf %349 : vector<2x8x8xf32> to vector<2x8x8xbf16>
    %351 = arith.truncf %328 : vector<2x8x8xf32> to vector<2x8x8xbf16>
    "tpu.trace_start"() <{level = 10 : i32, message = "bqk,bkd->bqd"}> : () -> ()
    %cst_133 = arith.constant dense<0.000000e+00> : vector<2x8x8xf32>
    %352 = tpu.matmul %350, %351, %cst_133 {dimension_numbers = #tpu.dot_dimension_numbers<[2], [1], [1], [2], [0, 0, 0, 1, 1, 2], [0], [0]>} : vector<2x8x8xbf16>, vector<2x8x8xbf16>, vector<2x8x8xf32> -> vector<2x8x8xf32>
    "tpu.trace_stop"() : () -> ()
    %353 = tpu.concatenate %271, %298, %325, %352 in 2 : vector<2x8x8xf32>, vector<2x8x8xf32>, vector<2x8x8xf32>, vector<2x8x8xf32> -> vector<2x8x32xf32>
    %354 = vector.shape_cast %353 : vector<2x8x32xf32> to vector<16x32xf32>
    %c1_134 = arith.constant 1 : index
    %c0_135 = arith.constant 0 : index
    %c0_136 = arith.constant 0 : index
    %355 = vector.load %arg10[%c1_134, %c0_135, %c0_136] : memref<2x32x32xbf16, #tpu.memory_space<vmem>>, vector<1x32x32xbf16>
    %356 = vector.shape_cast %355 : vector<1x32x32xbf16> to vector<32x32xbf16>
    %357 = arith.truncf %354 : vector<16x32xf32> to vector<16x32xbf16>
    %cst_137 = arith.constant dense<0.000000e+00> : vector<16x32xf32>
    %358 = tpu.matmul %357, %356, %cst_137 {dimension_numbers = #tpu.dot_dimension_numbers<[1], [0], [0], [1], [0, 0, 1, 1], [], []>} : vector<16x32xbf16>, vector<32x32xbf16>, vector<16x32xf32> -> vector<16x32xf32>
    %359 = arith.addf %211, %358 : vector<16x32xf32>
    %c1_138 = arith.constant 1 : index
    %c0_139 = arith.constant 0 : index
    %c0_140 = arith.constant 0 : index
    %360 = vector.load %arg11[%c1_138, %c0_139, %c0_140] : memref<2x1x32xf32, #tpu.memory_space<vmem>>, vector<1x1x32xf32>
    %361 = vector.shape_cast %360 : vector<1x1x32xf32> to vector<1x32xf32>
    %362 = vector.broadcast %361 : vector<1x32xf32> to vector<16x32xf32>
    %363 = arith.addf %359, %362 : vector<16x32xf32>
    %c1_141 = arith.constant 1 : index
    %c0_142 = arith.constant 0 : index
    %c0_143 = arith.constant 0 : index
    %364 = vector.load %arg12[%c1_141, %c0_142, %c0_143] : memref<2x1x32xf32, #tpu.memory_space<vmem>>, vector<1x1x32xf32>
    %365 = vector.shape_cast %364 : vector<1x1x32xf32> to vector<1x32xf32>
    %c1_144 = arith.constant 1 : index
    %c0_145 = arith.constant 0 : index
    %c0_146 = arith.constant 0 : index
    %366 = vector.load %arg13[%c1_144, %c0_145, %c0_146] : memref<2x1x32xf32, #tpu.memory_space<vmem>>, vector<1x1x32xf32>
    %367 = vector.shape_cast %366 : vector<1x1x32xf32> to vector<1x32xf32>
    %cst_147 = arith.constant dense<0.000000e+00> : vector<16xf32>
    %368 = vector.multi_reduction <add>, %363, %cst_147 [1] : vector<16x32xf32> to vector<16xf32>
    %369 = vector.shape_cast %368 : vector<16xf32> to vector<16x1xf32>
    %cst_148 = arith.constant 3.200000e+01 : f32
    %370 = vector.broadcast %cst_148 : f32 to vector<16x1xf32>
    %371 = arith.divf %369, %370 : vector<16x1xf32>
    %372 = vector.broadcast %371 : vector<16x1xf32> to vector<16x32xf32>
    %373 = arith.subf %363, %372 : vector<16x32xf32>
    %374 = arith.mulf %373, %373 : vector<16x32xf32>
    %cst_149 = arith.constant dense<0.000000e+00> : vector<16xf32>
    %375 = vector.multi_reduction <add>, %374, %cst_149 [1] : vector<16x32xf32> to vector<16xf32>
    %376 = vector.shape_cast %375 : vector<16xf32> to vector<16x1xf32>
    %cst_150 = arith.constant 3.100000e+01 : f32
    %377 = vector.broadcast %cst_150 : f32 to vector<16x1xf32>
    %378 = arith.divf %376, %377 : vector<16x1xf32>
    %379 = vector.broadcast %365 : vector<1x32xf32> to vector<16x32xf32>
    %380 = arith.mulf %379, %373 : vector<16x32xf32>
    %381 = math.sqrt %378 : vector<16x1xf32>
    %cst_151 = arith.constant 9.99999997E-7 : f32
    %382 = vector.broadcast %cst_151 : f32 to vector<16x1xf32>
    %383 = arith.addf %381, %382 : vector<16x1xf32>
    %384 = vector.broadcast %383 : vector<16x1xf32> to vector<16x32xf32>
    %385 = arith.divf %380, %384 : vector<16x32xf32>
    %386 = vector.broadcast %367 : vector<1x32xf32> to vector<16x32xf32>
    %387 = arith.addf %385, %386 : vector<16x32xf32>
    %c1_152 = arith.constant 1 : index
    %c0_153 = arith.constant 0 : index
    %c0_154 = arith.constant 0 : index
    %388 = vector.load %arg14[%c1_152, %c0_153, %c0_154] : memref<2x32x32xbf16, #tpu.memory_space<vmem>>, vector<1x32x32xbf16>
    %389 = vector.shape_cast %388 : vector<1x32x32xbf16> to vector<32x32xbf16>
    %390 = arith.truncf %387 : vector<16x32xf32> to vector<16x32xbf16>
    %cst_155 = arith.constant dense<0.000000e+00> : vector<16x32xf32>
    %391 = tpu.matmul %390, %389, %cst_155 {dimension_numbers = #tpu.dot_dimension_numbers<[1], [0], [0], [1], [0, 0, 1, 1], [], []>} : vector<16x32xbf16>, vector<32x32xbf16>, vector<16x32xf32> -> vector<16x32xf32>
    %c1_156 = arith.constant 1 : index
    %c0_157 = arith.constant 0 : index
    %c0_158 = arith.constant 0 : index
    %392 = vector.load %arg15[%c1_156, %c0_157, %c0_158] : memref<2x1x32xf32, #tpu.memory_space<vmem>>, vector<1x1x32xf32>
    %393 = vector.shape_cast %392 : vector<1x1x32xf32> to vector<1x32xf32>
    %394 = vector.broadcast %393 : vector<1x32xf32> to vector<16x32xf32>
    %395 = arith.addf %391, %394 : vector<16x32xf32>
    %cst_159 = arith.constant 0.000000e+00 : f32
    %396 = vector.broadcast %cst_159 : f32 to vector<16x32xf32>
    %397 = arith.maximumf %395, %396 : vector<16x32xf32>
    %c1_160 = arith.constant 1 : index
    %c0_161 = arith.constant 0 : index
    %c0_162 = arith.constant 0 : index
    %398 = vector.load %arg16[%c1_160, %c0_161, %c0_162] : memref<2x32x32xbf16, #tpu.memory_space<vmem>>, vector<1x32x32xbf16>
    %399 = vector.shape_cast %398 : vector<1x32x32xbf16> to vector<32x32xbf16>
    %400 = arith.truncf %397 : vector<16x32xf32> to vector<16x32xbf16>
    %cst_163 = arith.constant dense<0.000000e+00> : vector<16x32xf32>
    %401 = tpu.matmul %400, %399, %cst_163 {dimension_numbers = #tpu.dot_dimension_numbers<[1], [0], [0], [1], [0, 0, 1, 1], [], []>} : vector<16x32xbf16>, vector<32x32xbf16>, vector<16x32xf32> -> vector<16x32xf32>
    %402 = arith.addf %363, %401 : vector<16x32xf32>
    %c1_164 = arith.constant 1 : index
    %c0_165 = arith.constant 0 : index
    %c0_166 = arith.constant 0 : index
    %403 = vector.load %arg17[%c1_164, %c0_165, %c0_166] : memref<2x1x32xf32, #tpu.memory_space<vmem>>, vector<1x1x32xf32>
    %404 = vector.shape_cast %403 : vector<1x1x32xf32> to vector<1x32xf32>
    %405 = vector.broadcast %404 : vector<1x32xf32> to vector<16x32xf32>
    %406 = arith.addf %402, %405 : vector<16x32xf32>
    %c0_167 = arith.constant 0 : index
    %c0_168 = arith.constant 0 : index
    %407 = vector.load %arg18[%c0_167, %c0_168] : memref<1x32xf32, #tpu.memory_space<vmem>>, vector<1x32xf32>
    %c0_169 = arith.constant 0 : index
    %c0_170 = arith.constant 0 : index
    %408 = vector.load %arg19[%c0_169, %c0_170] : memref<1x32xf32, #tpu.memory_space<vmem>>, vector<1x32xf32>
    %cst_171 = arith.constant dense<0.000000e+00> : vector<16xf32>
    %409 = vector.multi_reduction <add>, %406, %cst_171 [1] : vector<16x32xf32> to vector<16xf32>
    %410 = vector.shape_cast %409 : vector<16xf32> to vector<16x1xf32>
    %cst_172 = arith.constant 3.200000e+01 : f32
    %411 = vector.broadcast %cst_172 : f32 to vector<16x1xf32>
    %412 = arith.divf %410, %411 : vector<16x1xf32>
    %413 = vector.broadcast %412 : vector<16x1xf32> to vector<16x32xf32>
    %414 = arith.subf %406, %413 : vector<16x32xf32>
    %415 = arith.mulf %414, %414 : vector<16x32xf32>
    %cst_173 = arith.constant dense<0.000000e+00> : vector<16xf32>
    %416 = vector.multi_reduction <add>, %415, %cst_173 [1] : vector<16x32xf32> to vector<16xf32>
    %417 = vector.shape_cast %416 : vector<16xf32> to vector<16x1xf32>
    %cst_174 = arith.constant 3.100000e+01 : f32
    %418 = vector.broadcast %cst_174 : f32 to vector<16x1xf32>
    %419 = arith.divf %417, %418 : vector<16x1xf32>
    %420 = vector.broadcast %407 : vector<1x32xf32> to vector<16x32xf32>
    %421 = arith.mulf %420, %414 : vector<16x32xf32>
    %422 = math.sqrt %419 : vector<16x1xf32>
    %cst_175 = arith.constant 9.99999997E-7 : f32
    %423 = vector.broadcast %cst_175 : f32 to vector<16x1xf32>
    %424 = arith.addf %422, %423 : vector<16x1xf32>
    %425 = vector.broadcast %424 : vector<16x1xf32> to vector<16x32xf32>
    %426 = arith.divf %421, %425 : vector<16x32xf32>
    %427 = vector.broadcast %408 : vector<1x32xf32> to vector<16x32xf32>
    %428 = arith.addf %426, %427 : vector<16x32xf32>
    %429 = vector.extract_strided_slice %428 {offsets = [0, 0], sizes = [8, 32], strides = [1, 1]} : vector<16x32xf32> to vector<8x32xf32>
    %430 = vector.shape_cast %429 : vector<8x32xf32> to vector<8x1x32xf32>
    %c0_176 = arith.constant 0 : index
    %c0_177 = arith.constant 0 : index
    %c0_178 = arith.constant 0 : index
    %431 = vector.load %arg29[%c0_176, %c0_177, %c0_178] : memref<8x2x32xf32, #tpu.memory_space<vmem>>, vector<8x1x32xf32>
    tpu.vector_store %arg29[%c0_176, %c0_177, %c0_178], %430 {strides = array<i32>} : memref<8x2x32xf32, #tpu.memory_space<vmem>>, vector<8x1x32xf32>,
    %432 = vector.extract_strided_slice %428 {offsets = [8, 0], sizes = [8, 32], strides = [1, 1]} : vector<16x32xf32> to vector<8x32xf32>
    %433 = vector.shape_cast %432 : vector<8x32xf32> to vector<8x1x32xf32>
    %c0_179 = arith.constant 0 : index
    %c1_180 = arith.constant 1 : index
    %c0_181 = arith.constant 0 : index
    %434 = vector.load %arg29[%c0_179, %c1_180, %c0_181] : memref<8x2x32xf32, #tpu.memory_space<vmem>>, vector<8x1x32xf32>
    tpu.vector_store %arg29[%c0_179, %c1_180, %c0_181], %433 {strides = array<i32>} : memref<8x2x32xf32, #tpu.memory_space<vmem>>, vector<8x1x32xf32>,
    %c0_182 = arith.constant 0 : index
    %c0_183 = arith.constant 0 : index
    %435 = vector.load %arg20[%c0_182, %c0_183] : memref<96x128xbf16, #tpu.memory_space<vmem>>, vector<96x128xbf16>
    %c0_184 = arith.constant 0 : index
    %c0_185 = arith.constant 0 : index
    %436 = vector.load %arg21[%c0_184, %c0_185] : memref<1x128xf32, #tpu.memory_space<vmem>>, vector<1x128xf32>
    %c0_186 = arith.constant 0 : index
    %c0_187 = arith.constant 0 : index
    %437 = vector.load %arg22[%c0_186, %c0_187] : memref<1x32xf32, #tpu.memory_space<vmem>>, vector<1x32xf32>
    %438 = vector.shape_cast %437 : vector<1x32xf32> to vector<1x32xf32>
    %439 = vector.broadcast %438 : vector<1x32xf32> to vector<2x32xf32>
    %c0_188 = arith.constant 0 : index
    %c0_189 = arith.constant 0 : index
    %440 = vector.load %arg23[%c0_188, %c0_189] : memref<1x32xf32, #tpu.memory_space<vmem>>, vector<1x32xf32>
    %441 = vector.shape_cast %440 : vector<1x32xf32> to vector<1x32xf32>
    %442 = vector.broadcast %441 : vector<1x32xf32> to vector<2x32xf32>
    %cst_190 = arith.constant 0.000000e+00 : f32
    %443 = vector.broadcast %cst_190 : f32 to vector<2x32xf32>
    %c0_i32 = arith.constant 0 : i32
    %444 = arith.index_cast %c0_i32 : i32 to index
    %c0_191 = arith.constant 0 : index
    %c0_192 = arith.constant 0 : index
    %445 = vector.load %arg29[%444, %c0_191, %c0_192] : memref<8x2x32xf32, #tpu.memory_space<vmem>>, vector<1x2x32xf32>
    %446 = vector.shape_cast %445 : vector<1x2x32xf32> to vector<2x32xf32>
    %447 = tpu.concatenate %443, %446, %439 in 1 : vector<2x32xf32>, vector<2x32xf32>, vector<2x32xf32> -> vector<2x96xf32>
    %448 = arith.truncf %447 : vector<2x96xf32> to vector<2x96xbf16>
    %cst_193 = arith.constant dense<0.000000e+00> : vector<2x128xf32>
    %449 = tpu.matmul %448, %435, %cst_193 {dimension_numbers = #tpu.dot_dimension_numbers<[1], [0], [0], [1], [0, 0, 1, 1], [], []>} : vector<2x96xbf16>, vector<96x128xbf16>, vector<2x128xf32> -> vector<2x128xf32>
    %450 = vector.broadcast %436 : vector<1x128xf32> to vector<2x128xf32>
    %451 = arith.addf %449, %450 : vector<2x128xf32>
    %452 = vector.extract_strided_slice %451 {offsets = [0, 0], sizes = [2, 32], strides = [1, 1]} : vector<2x128xf32> to vector<2x32xf32>
    %453 = arith.negf %452 : vector<2x32xf32>
    %454 = math.exp %453 : vector<2x32xf32>
    %cst_194 = arith.constant 1.000000e+00 : f32
    %455 = vector.broadcast %cst_194 : f32 to vector<2x32xf32>
    %456 = arith.addf %455, %454 : vector<2x32xf32>
    %457 = arith.divf %455, %456 : vector<2x32xf32>
    %458 = vector.extract_strided_slice %451 {offsets = [0, 32], sizes = [2, 32], strides = [1, 1]} : vector<2x128xf32> to vector<2x32xf32>
    %459 = arith.negf %458 : vector<2x32xf32>
    %460 = math.exp %459 : vector<2x32xf32>
    %cst_195 = arith.constant 1.000000e+00 : f32
    %461 = vector.broadcast %cst_195 : f32 to vector<2x32xf32>
    %462 = arith.addf %461, %460 : vector<2x32xf32>
    %463 = arith.divf %461, %462 : vector<2x32xf32>
    %464 = vector.extract_strided_slice %451 {offsets = [0, 64], sizes = [2, 32], strides = [1, 1]} : vector<2x128xf32> to vector<2x32xf32>
    %465 = math.tanh %464 : vector<2x32xf32>
    %466 = vector.extract_strided_slice %451 {offsets = [0, 96], sizes = [2, 32], strides = [1, 1]} : vector<2x128xf32> to vector<2x32xf32>
    %467 = arith.negf %466 : vector<2x32xf32>
    %468 = math.exp %467 : vector<2x32xf32>
    %cst_196 = arith.constant 1.000000e+00 : f32
    %469 = vector.broadcast %cst_196 : f32 to vector<2x32xf32>
    %470 = arith.addf %469, %468 : vector<2x32xf32>
    %471 = arith.divf %469, %470 : vector<2x32xf32>
    %472 = arith.mulf %463, %442 : vector<2x32xf32>
    %473 = arith.mulf %457, %465 : vector<2x32xf32>
    %474 = arith.addf %472, %473 : vector<2x32xf32>
    %475 = math.tanh %474 : vector<2x32xf32>
    %476 = arith.mulf %471, %475 : vector<2x32xf32>
    %477 = arith.index_cast %c0_i32 : i32 to index
    %c0_197 = arith.constant 0 : index
    %c0_198 = arith.constant 0 : index
    %478 = vector.load %arg30[%477, %c0_197, %c0_198] : memref<8x2x32xf32, #tpu.memory_space<vmem>>, vector<1x2x32xf32>
    %479 = vector.shape_cast %478 : vector<1x2x32xf32> to vector<2x32xf32>
    %480 = vector.shape_cast %476 : vector<2x32xf32> to vector<1x2x32xf32>
    tpu.vector_store %arg30[%477, %c0_197, %c0_198], %480 {strides = array<i32>} : memref<8x2x32xf32, #tpu.memory_space<vmem>>, vector<1x2x32xf32>,
    %c1_i32 = arith.constant 1 : i32
    %481 = arith.index_cast %c1_i32 : i32 to index
    %c0_199 = arith.constant 0 : index
    %c0_200 = arith.constant 0 : index
    %482 = vector.load %arg29[%481, %c0_199, %c0_200] : memref<8x2x32xf32, #tpu.memory_space<vmem>>, vector<1x2x32xf32>
    %483 = vector.shape_cast %482 : vector<1x2x32xf32> to vector<2x32xf32>
    %484 = tpu.concatenate %476, %483, %476 in 1 : vector<2x32xf32>, vector<2x32xf32>, vector<2x32xf32> -> vector<2x96xf32>
    %485 = arith.truncf %484 : vector<2x96xf32> to vector<2x96xbf16>
    %cst_201 = arith.constant dense<0.000000e+00> : vector<2x128xf32>
    %486 = tpu.matmul %485, %435, %cst_201 {dimension_numbers = #tpu.dot_dimension_numbers<[1], [0], [0], [1], [0, 0, 1, 1], [], []>} : vector<2x96xbf16>, vector<96x128xbf16>, vector<2x128xf32> -> vector<2x128xf32>
    %487 = vector.broadcast %436 : vector<1x128xf32> to vector<2x128xf32>
    %488 = arith.addf %486, %487 : vector<2x128xf32>
    %489 = vector.extract_strided_slice %488 {offsets = [0, 0], sizes = [2, 32], strides = [1, 1]} : vector<2x128xf32> to vector<2x32xf32>
    %490 = arith.negf %489 : vector<2x32xf32>
    %491 = math.exp %490 : vector<2x32xf32>
    %cst_202 = arith.constant 1.000000e+00 : f32
    %492 = vector.broadcast %cst_202 : f32 to vector<2x32xf32>
    %493 = arith.addf %492, %491 : vector<2x32xf32>
    %494 = arith.divf %492, %493 : vector<2x32xf32>
    %495 = vector.extract_strided_slice %488 {offsets = [0, 32], sizes = [2, 32], strides = [1, 1]} : vector<2x128xf32> to vector<2x32xf32>
    %496 = arith.negf %495 : vector<2x32xf32>
    %497 = math.exp %496 : vector<2x32xf32>
    %cst_203 = arith.constant 1.000000e+00 : f32
    %498 = vector.broadcast %cst_203 : f32 to vector<2x32xf32>
    %499 = arith.addf %498, %497 : vector<2x32xf32>
    %500 = arith.divf %498, %499 : vector<2x32xf32>
    %501 = vector.extract_strided_slice %488 {offsets = [0, 64], sizes = [2, 32], strides = [1, 1]} : vector<2x128xf32> to vector<2x32xf32>
    %502 = math.tanh %501 : vector<2x32xf32>
    %503 = vector.extract_strided_slice %488 {offsets = [0, 96], sizes = [2, 32], strides = [1, 1]} : vector<2x128xf32> to vector<2x32xf32>
    %504 = arith.negf %503 : vector<2x32xf32>
    %505 = math.exp %504 : vector<2x32xf32>
    %cst_204 = arith.constant 1.000000e+00 : f32
    %506 = vector.broadcast %cst_204 : f32 to vector<2x32xf32>
    %507 = arith.addf %506, %505 : vector<2x32xf32>
    %508 = arith.divf %506, %507 : vector<2x32xf32>
    %509 = arith.mulf %500, %474 : vector<2x32xf32>
    %510 = arith.mulf %494, %502 : vector<2x32xf32>
    %511 = arith.addf %509, %510 : vector<2x32xf32>
    %512 = math.tanh %511 : vector<2x32xf32>
    %513 = arith.mulf %508, %512 : vector<2x32xf32>
    %514 = arith.index_cast %c1_i32 : i32 to index
    %c0_205 = arith.constant 0 : index
    %c0_206 = arith.constant 0 : index
    %515 = vector.load %arg30[%514, %c0_205, %c0_206] : memref<8x2x32xf32, #tpu.memory_space<vmem>>, vector<1x2x32xf32>
    %516 = vector.shape_cast %515 : vector<1x2x32xf32> to vector<2x32xf32>
    %517 = vector.shape_cast %513 : vector<2x32xf32> to vector<1x2x32xf32>
    tpu.vector_store %arg30[%514, %c0_205, %c0_206], %517 {strides = array<i32>} : memref<8x2x32xf32, #tpu.memory_space<vmem>>, vector<1x2x32xf32>,
    %c2_i32 = arith.constant 2 : i32
    %518 = arith.index_cast %c2_i32 : i32 to index
    %c0_207 = arith.constant 0 : index
    %c0_208 = arith.constant 0 : index
    %519 = vector.load %arg29[%518, %c0_207, %c0_208] : memref<8x2x32xf32, #tpu.memory_space<vmem>>, vector<1x2x32xf32>
    %520 = vector.shape_cast %519 : vector<1x2x32xf32> to vector<2x32xf32>
    %521 = tpu.concatenate %513, %520, %513 in 1 : vector<2x32xf32>, vector<2x32xf32>, vector<2x32xf32> -> vector<2x96xf32>
    %522 = arith.truncf %521 : vector<2x96xf32> to vector<2x96xbf16>
    %cst_209 = arith.constant dense<0.000000e+00> : vector<2x128xf32>
    %523 = tpu.matmul %522, %435, %cst_209 {dimension_numbers = #tpu.dot_dimension_numbers<[1], [0], [0], [1], [0, 0, 1, 1], [], []>} : vector<2x96xbf16>, vector<96x128xbf16>, vector<2x128xf32> -> vector<2x128xf32>
    %524 = vector.broadcast %436 : vector<1x128xf32> to vector<2x128xf32>
    %525 = arith.addf %523, %524 : vector<2x128xf32>
    %526 = vector.extract_strided_slice %525 {offsets = [0, 0], sizes = [2, 32], strides = [1, 1]} : vector<2x128xf32> to vector<2x32xf32>
    %527 = arith.negf %526 : vector<2x32xf32>
    %528 = math.exp %527 : vector<2x32xf32>
    %cst_210 = arith.constant 1.000000e+00 : f32
    %529 = vector.broadcast %cst_210 : f32 to vector<2x32xf32>
    %530 = arith.addf %529, %528 : vector<2x32xf32>
    %531 = arith.divf %529, %530 : vector<2x32xf32>
    %532 = vector.extract_strided_slice %525 {offsets = [0, 32], sizes = [2, 32], strides = [1, 1]} : vector<2x128xf32> to vector<2x32xf32>
    %533 = arith.negf %532 : vector<2x32xf32>
    %534 = math.exp %533 : vector<2x32xf32>
    %cst_211 = arith.constant 1.000000e+00 : f32
    %535 = vector.broadcast %cst_211 : f32 to vector<2x32xf32>
    %536 = arith.addf %535, %534 : vector<2x32xf32>
    %537 = arith.divf %535, %536 : vector<2x32xf32>
    %538 = vector.extract_strided_slice %525 {offsets = [0, 64], sizes = [2, 32], strides = [1, 1]} : vector<2x128xf32> to vector<2x32xf32>
    %539 = math.tanh %538 : vector<2x32xf32>
    %540 = vector.extract_strided_slice %525 {offsets = [0, 96], sizes = [2, 32], strides = [1, 1]} : vector<2x128xf32> to vector<2x32xf32>
    %541 = arith.negf %540 : vector<2x32xf32>
    %542 = math.exp %541 : vector<2x32xf32>
    %cst_212 = arith.constant 1.000000e+00 : f32
    %543 = vector.broadcast %cst_212 : f32 to vector<2x32xf32>
    %544 = arith.addf %543, %542 : vector<2x32xf32>
    %545 = arith.divf %543, %544 : vector<2x32xf32>
    %546 = arith.mulf %537, %511 : vector<2x32xf32>
    %547 = arith.mulf %531, %539 : vector<2x32xf32>
    %548 = arith.addf %546, %547 : vector<2x32xf32>
    %549 = math.tanh %548 : vector<2x32xf32>
    %550 = arith.mulf %545, %549 : vector<2x32xf32>
    %551 = arith.index_cast %c2_i32 : i32 to index
    %c0_213 = arith.constant 0 : index
    %c0_214 = arith.constant 0 : index
    %552 = vector.load %arg30[%551, %c0_213, %c0_214] : memref<8x2x32xf32, #tpu.memory_space<vmem>>, vector<1x2x32xf32>
    %553 = vector.shape_cast %552 : vector<1x2x32xf32> to vector<2x32xf32>
    %554 = vector.shape_cast %550 : vector<2x32xf32> to vector<1x2x32xf32>
    tpu.vector_store %arg30[%551, %c0_213, %c0_214], %554 {strides = array<i32>} : memref<8x2x32xf32, #tpu.memory_space<vmem>>, vector<1x2x32xf32>,
    %c3_i32 = arith.constant 3 : i32
    %555 = arith.index_cast %c3_i32 : i32 to index
    %c0_215 = arith.constant 0 : index
    %c0_216 = arith.constant 0 : index
    %556 = vector.load %arg29[%555, %c0_215, %c0_216] : memref<8x2x32xf32, #tpu.memory_space<vmem>>, vector<1x2x32xf32>
    %557 = vector.shape_cast %556 : vector<1x2x32xf32> to vector<2x32xf32>
    %558 = tpu.concatenate %550, %557, %550 in 1 : vector<2x32xf32>, vector<2x32xf32>, vector<2x32xf32> -> vector<2x96xf32>
    %559 = arith.truncf %558 : vector<2x96xf32> to vector<2x96xbf16>
    %cst_217 = arith.constant dense<0.000000e+00> : vector<2x128xf32>
    %560 = tpu.matmul %559, %435, %cst_217 {dimension_numbers = #tpu.dot_dimension_numbers<[1], [0], [0], [1], [0, 0, 1, 1], [], []>} : vector<2x96xbf16>, vector<96x128xbf16>, vector<2x128xf32> -> vector<2x128xf32>
    %561 = vector.broadcast %436 : vector<1x128xf32> to vector<2x128xf32>
    %562 = arith.addf %560, %561 : vector<2x128xf32>
    %563 = vector.extract_strided_slice %562 {offsets = [0, 0], sizes = [2, 32], strides = [1, 1]} : vector<2x128xf32> to vector<2x32xf32>
    %564 = arith.negf %563 : vector<2x32xf32>
    %565 = math.exp %564 : vector<2x32xf32>
    %cst_218 = arith.constant 1.000000e+00 : f32
    %566 = vector.broadcast %cst_218 : f32 to vector<2x32xf32>
    %567 = arith.addf %566, %565 : vector<2x32xf32>
    %568 = arith.divf %566, %567 : vector<2x32xf32>
    %569 = vector.extract_strided_slice %562 {offsets = [0, 32], sizes = [2, 32], strides = [1, 1]} : vector<2x128xf32> to vector<2x32xf32>
    %570 = arith.negf %569 : vector<2x32xf32>
    %571 = math.exp %570 : vector<2x32xf32>
    %cst_219 = arith.constant 1.000000e+00 : f32
    %572 = vector.broadcast %cst_219 : f32 to vector<2x32xf32>
    %573 = arith.addf %572, %571 : vector<2x32xf32>
    %574 = arith.divf %572, %573 : vector<2x32xf32>
    %575 = vector.extract_strided_slice %562 {offsets = [0, 64], sizes = [2, 32], strides = [1, 1]} : vector<2x128xf32> to vector<2x32xf32>
    %576 = math.tanh %575 : vector<2x32xf32>
    %577 = vector.extract_strided_slice %562 {offsets = [0, 96], sizes = [2, 32], strides = [1, 1]} : vector<2x128xf32> to vector<2x32xf32>
    %578 = arith.negf %577 : vector<2x32xf32>
    %579 = math.exp %578 : vector<2x32xf32>
    %cst_220 = arith.constant 1.000000e+00 : f32
    %580 = vector.broadcast %cst_220 : f32 to vector<2x32xf32>
    %581 = arith.addf %580, %579 : vector<2x32xf32>
    %582 = arith.divf %580, %581 : vector<2x32xf32>
    %583 = arith.mulf %574, %548 : vector<2x32xf32>
    %584 = arith.mulf %568, %576 : vector<2x32xf32>
    %585 = arith.addf %583, %584 : vector<2x32xf32>
    %586 = math.tanh %585 : vector<2x32xf32>
    %587 = arith.mulf %582, %586 : vector<2x32xf32>
    %588 = arith.index_cast %c3_i32 : i32 to index
    %c0_221 = arith.constant 0 : index
    %c0_222 = arith.constant 0 : index
    %589 = vector.load %arg30[%588, %c0_221, %c0_222] : memref<8x2x32xf32, #tpu.memory_space<vmem>>, vector<1x2x32xf32>
    %590 = vector.shape_cast %589 : vector<1x2x32xf32> to vector<2x32xf32>
    %591 = vector.shape_cast %587 : vector<2x32xf32> to vector<1x2x32xf32>
    tpu.vector_store %arg30[%588, %c0_221, %c0_222], %591 {strides = array<i32>} : memref<8x2x32xf32, #tpu.memory_space<vmem>>, vector<1x2x32xf32>,
    %c4_i32 = arith.constant 4 : i32
    %592 = arith.index_cast %c4_i32 : i32 to index
    %c0_223 = arith.constant 0 : index
    %c0_224 = arith.constant 0 : index
    %593 = vector.load %arg29[%592, %c0_223, %c0_224] : memref<8x2x32xf32, #tpu.memory_space<vmem>>, vector<1x2x32xf32>
    %594 = vector.shape_cast %593 : vector<1x2x32xf32> to vector<2x32xf32>
    %595 = tpu.concatenate %587, %594, %587 in 1 : vector<2x32xf32>, vector<2x32xf32>, vector<2x32xf32> -> vector<2x96xf32>
    %596 = arith.truncf %595 : vector<2x96xf32> to vector<2x96xbf16>
    %cst_225 = arith.constant dense<0.000000e+00> : vector<2x128xf32>
    %597 = tpu.matmul %596, %435, %cst_225 {dimension_numbers = #tpu.dot_dimension_numbers<[1], [0], [0], [1], [0, 0, 1, 1], [], []>} : vector<2x96xbf16>, vector<96x128xbf16>, vector<2x128xf32> -> vector<2x128xf32>
    %598 = vector.broadcast %436 : vector<1x128xf32> to vector<2x128xf32>
    %599 = arith.addf %597, %598 : vector<2x128xf32>
    %600 = vector.extract_strided_slice %599 {offsets = [0, 0], sizes = [2, 32], strides = [1, 1]} : vector<2x128xf32> to vector<2x32xf32>
    %601 = arith.negf %600 : vector<2x32xf32>
    %602 = math.exp %601 : vector<2x32xf32>
    %cst_226 = arith.constant 1.000000e+00 : f32
    %603 = vector.broadcast %cst_226 : f32 to vector<2x32xf32>
    %604 = arith.addf %603, %602 : vector<2x32xf32>
    %605 = arith.divf %603, %604 : vector<2x32xf32>
    %606 = vector.extract_strided_slice %599 {offsets = [0, 32], sizes = [2, 32], strides = [1, 1]} : vector<2x128xf32> to vector<2x32xf32>
    %607 = arith.negf %606 : vector<2x32xf32>
    %608 = math.exp %607 : vector<2x32xf32>
    %cst_227 = arith.constant 1.000000e+00 : f32
    %609 = vector.broadcast %cst_227 : f32 to vector<2x32xf32>
    %610 = arith.addf %609, %608 : vector<2x32xf32>
    %611 = arith.divf %609, %610 : vector<2x32xf32>
    %612 = vector.extract_strided_slice %599 {offsets = [0, 64], sizes = [2, 32], strides = [1, 1]} : vector<2x128xf32> to vector<2x32xf32>
    %613 = math.tanh %612 : vector<2x32xf32>
    %614 = vector.extract_strided_slice %599 {offsets = [0, 96], sizes = [2, 32], strides = [1, 1]} : vector<2x128xf32> to vector<2x32xf32>
    %615 = arith.negf %614 : vector<2x32xf32>
    %616 = math.exp %615 : vector<2x32xf32>
    %cst_228 = arith.constant 1.000000e+00 : f32
    %617 = vector.broadcast %cst_228 : f32 to vector<2x32xf32>
    %618 = arith.addf %617, %616 : vector<2x32xf32>
    %619 = arith.divf %617, %618 : vector<2x32xf32>
    %620 = arith.mulf %611, %585 : vector<2x32xf32>
    %621 = arith.mulf %605, %613 : vector<2x32xf32>
    %622 = arith.addf %620, %621 : vector<2x32xf32>
    %623 = math.tanh %622 : vector<2x32xf32>
    %624 = arith.mulf %619, %623 : vector<2x32xf32>
    %625 = arith.index_cast %c4_i32 : i32 to index
    %c0_229 = arith.constant 0 : index
    %c0_230 = arith.constant 0 : index
    %626 = vector.load %arg30[%625, %c0_229, %c0_230] : memref<8x2x32xf32, #tpu.memory_space<vmem>>, vector<1x2x32xf32>
    %627 = vector.shape_cast %626 : vector<1x2x32xf32> to vector<2x32xf32>
    %628 = vector.shape_cast %624 : vector<2x32xf32> to vector<1x2x32xf32>
    tpu.vector_store %arg30[%625, %c0_229, %c0_230], %628 {strides = array<i32>} : memref<8x2x32xf32, #tpu.memory_space<vmem>>, vector<1x2x32xf32>,
    %c5_i32 = arith.constant 5 : i32
    %629 = arith.index_cast %c5_i32 : i32 to index
    %c0_231 = arith.constant 0 : index
    %c0_232 = arith.constant 0 : index
    %630 = vector.load %arg29[%629, %c0_231, %c0_232] : memref<8x2x32xf32, #tpu.memory_space<vmem>>, vector<1x2x32xf32>
    %631 = vector.shape_cast %630 : vector<1x2x32xf32> to vector<2x32xf32>
    %632 = tpu.concatenate %624, %631, %624 in 1 : vector<2x32xf32>, vector<2x32xf32>, vector<2x32xf32> -> vector<2x96xf32>
    %633 = arith.truncf %632 : vector<2x96xf32> to vector<2x96xbf16>
    %cst_233 = arith.constant dense<0.000000e+00> : vector<2x128xf32>
    %634 = tpu.matmul %633, %435, %cst_233 {dimension_numbers = #tpu.dot_dimension_numbers<[1], [0], [0], [1], [0, 0, 1, 1], [], []>} : vector<2x96xbf16>, vector<96x128xbf16>, vector<2x128xf32> -> vector<2x128xf32>
    %635 = vector.broadcast %436 : vector<1x128xf32> to vector<2x128xf32>
    %636 = arith.addf %634, %635 : vector<2x128xf32>
    %637 = vector.extract_strided_slice %636 {offsets = [0, 0], sizes = [2, 32], strides = [1, 1]} : vector<2x128xf32> to vector<2x32xf32>
    %638 = arith.negf %637 : vector<2x32xf32>
    %639 = math.exp %638 : vector<2x32xf32>
    %cst_234 = arith.constant 1.000000e+00 : f32
    %640 = vector.broadcast %cst_234 : f32 to vector<2x32xf32>
    %641 = arith.addf %640, %639 : vector<2x32xf32>
    %642 = arith.divf %640, %641 : vector<2x32xf32>
    %643 = vector.extract_strided_slice %636 {offsets = [0, 32], sizes = [2, 32], strides = [1, 1]} : vector<2x128xf32> to vector<2x32xf32>
    %644 = arith.negf %643 : vector<2x32xf32>
    %645 = math.exp %644 : vector<2x32xf32>
    %cst_235 = arith.constant 1.000000e+00 : f32
    %646 = vector.broadcast %cst_235 : f32 to vector<2x32xf32>
    %647 = arith.addf %646, %645 : vector<2x32xf32>
    %648 = arith.divf %646, %647 : vector<2x32xf32>
    %649 = vector.extract_strided_slice %636 {offsets = [0, 64], sizes = [2, 32], strides = [1, 1]} : vector<2x128xf32> to vector<2x32xf32>
    %650 = math.tanh %649 : vector<2x32xf32>
    %651 = vector.extract_strided_slice %636 {offsets = [0, 96], sizes = [2, 32], strides = [1, 1]} : vector<2x128xf32> to vector<2x32xf32>
    %652 = arith.negf %651 : vector<2x32xf32>
    %653 = math.exp %652 : vector<2x32xf32>
    %cst_236 = arith.constant 1.000000e+00 : f32
    %654 = vector.broadcast %cst_236 : f32 to vector<2x32xf32>
    %655 = arith.addf %654, %653 : vector<2x32xf32>
    %656 = arith.divf %654, %655 : vector<2x32xf32>
    %657 = arith.mulf %648, %622 : vector<2x32xf32>
    %658 = arith.mulf %642, %650 : vector<2x32xf32>
    %659 = arith.addf %657, %658 : vector<2x32xf32>
    %660 = math.tanh %659 : vector<2x32xf32>
    %661 = arith.mulf %656, %660 : vector<2x32xf32>
    %662 = arith.index_cast %c5_i32 : i32 to index
    %c0_237 = arith.constant 0 : index
    %c0_238 = arith.constant 0 : index
    %663 = vector.load %arg30[%662, %c0_237, %c0_238] : memref<8x2x32xf32, #tpu.memory_space<vmem>>, vector<1x2x32xf32>
    %664 = vector.shape_cast %663 : vector<1x2x32xf32> to vector<2x32xf32>
    %665 = vector.shape_cast %661 : vector<2x32xf32> to vector<1x2x32xf32>
    tpu.vector_store %arg30[%662, %c0_237, %c0_238], %665 {strides = array<i32>} : memref<8x2x32xf32, #tpu.memory_space<vmem>>, vector<1x2x32xf32>,
    %c6_i32 = arith.constant 6 : i32
    %666 = arith.index_cast %c6_i32 : i32 to index
    %c0_239 = arith.constant 0 : index
    %c0_240 = arith.constant 0 : index
    %667 = vector.load %arg29[%666, %c0_239, %c0_240] : memref<8x2x32xf32, #tpu.memory_space<vmem>>, vector<1x2x32xf32>
    %668 = vector.shape_cast %667 : vector<1x2x32xf32> to vector<2x32xf32>
    %669 = tpu.concatenate %661, %668, %661 in 1 : vector<2x32xf32>, vector<2x32xf32>, vector<2x32xf32> -> vector<2x96xf32>
    %670 = arith.truncf %669 : vector<2x96xf32> to vector<2x96xbf16>
    %cst_241 = arith.constant dense<0.000000e+00> : vector<2x128xf32>
    %671 = tpu.matmul %670, %435, %cst_241 {dimension_numbers = #tpu.dot_dimension_numbers<[1], [0], [0], [1], [0, 0, 1, 1], [], []>} : vector<2x96xbf16>, vector<96x128xbf16>, vector<2x128xf32> -> vector<2x128xf32>
    %672 = vector.broadcast %436 : vector<1x128xf32> to vector<2x128xf32>
    %673 = arith.addf %671, %672 : vector<2x128xf32>
    %674 = vector.extract_strided_slice %673 {offsets = [0, 0], sizes = [2, 32], strides = [1, 1]} : vector<2x128xf32> to vector<2x32xf32>
    %675 = arith.negf %674 : vector<2x32xf32>
    %676 = math.exp %675 : vector<2x32xf32>
    %cst_242 = arith.constant 1.000000e+00 : f32
    %677 = vector.broadcast %cst_242 : f32 to vector<2x32xf32>
    %678 = arith.addf %677, %676 : vector<2x32xf32>
    %679 = arith.divf %677, %678 : vector<2x32xf32>
    %680 = vector.extract_strided_slice %673 {offsets = [0, 32], sizes = [2, 32], strides = [1, 1]} : vector<2x128xf32> to vector<2x32xf32>
    %681 = arith.negf %680 : vector<2x32xf32>
    %682 = math.exp %681 : vector<2x32xf32>
    %cst_243 = arith.constant 1.000000e+00 : f32
    %683 = vector.broadcast %cst_243 : f32 to vector<2x32xf32>
    %684 = arith.addf %683, %682 : vector<2x32xf32>
    %685 = arith.divf %683, %684 : vector<2x32xf32>
    %686 = vector.extract_strided_slice %673 {offsets = [0, 64], sizes = [2, 32], strides = [1, 1]} : vector<2x128xf32> to vector<2x32xf32>
    %687 = math.tanh %686 : vector<2x32xf32>
    %688 = vector.extract_strided_slice %673 {offsets = [0, 96], sizes = [2, 32], strides = [1, 1]} : vector<2x128xf32> to vector<2x32xf32>
    %689 = arith.negf %688 : vector<2x32xf32>
    %690 = math.exp %689 : vector<2x32xf32>
    %cst_244 = arith.constant 1.000000e+00 : f32
    %691 = vector.broadcast %cst_244 : f32 to vector<2x32xf32>
    %692 = arith.addf %691, %690 : vector<2x32xf32>
    %693 = arith.divf %691, %692 : vector<2x32xf32>
    %694 = arith.mulf %685, %659 : vector<2x32xf32>
    %695 = arith.mulf %679, %687 : vector<2x32xf32>
    %696 = arith.addf %694, %695 : vector<2x32xf32>
    %697 = math.tanh %696 : vector<2x32xf32>
    %698 = arith.mulf %693, %697 : vector<2x32xf32>
    %699 = arith.index_cast %c6_i32 : i32 to index
    %c0_245 = arith.constant 0 : index
    %c0_246 = arith.constant 0 : index
    %700 = vector.load %arg30[%699, %c0_245, %c0_246] : memref<8x2x32xf32, #tpu.memory_space<vmem>>, vector<1x2x32xf32>
    %701 = vector.shape_cast %700 : vector<1x2x32xf32> to vector<2x32xf32>
    %702 = vector.shape_cast %698 : vector<2x32xf32> to vector<1x2x32xf32>
    tpu.vector_store %arg30[%699, %c0_245, %c0_246], %702 {strides = array<i32>} : memref<8x2x32xf32, #tpu.memory_space<vmem>>, vector<1x2x32xf32>,
    %c7_i32 = arith.constant 7 : i32
    %703 = arith.index_cast %c7_i32 : i32 to index
    %c0_247 = arith.constant 0 : index
    %c0_248 = arith.constant 0 : index
    %704 = vector.load %arg29[%703, %c0_247, %c0_248] : memref<8x2x32xf32, #tpu.memory_space<vmem>>, vector<1x2x32xf32>
    %705 = vector.shape_cast %704 : vector<1x2x32xf32> to vector<2x32xf32>
    %706 = tpu.concatenate %698, %705, %698 in 1 : vector<2x32xf32>, vector<2x32xf32>, vector<2x32xf32> -> vector<2x96xf32>
    %707 = arith.truncf %706 : vector<2x96xf32> to vector<2x96xbf16>
    %cst_249 = arith.constant dense<0.000000e+00> : vector<2x128xf32>
    %708 = tpu.matmul %707, %435, %cst_249 {dimension_numbers = #tpu.dot_dimension_numbers<[1], [0], [0], [1], [0, 0, 1, 1], [], []>} : vector<2x96xbf16>, vector<96x128xbf16>, vector<2x128xf32> -> vector<2x128xf32>
    %709 = vector.broadcast %436 : vector<1x128xf32> to vector<2x128xf32>
    %710 = arith.addf %708, %709 : vector<2x128xf32>
    %711 = vector.extract_strided_slice %710 {offsets = [0, 0], sizes = [2, 32], strides = [1, 1]} : vector<2x128xf32> to vector<2x32xf32>
    %712 = arith.negf %711 : vector<2x32xf32>
    %713 = math.exp %712 : vector<2x32xf32>
    %cst_250 = arith.constant 1.000000e+00 : f32
    %714 = vector.broadcast %cst_250 : f32 to vector<2x32xf32>
    %715 = arith.addf %714, %713 : vector<2x32xf32>
    %716 = arith.divf %714, %715 : vector<2x32xf32>
    %717 = vector.extract_strided_slice %710 {offsets = [0, 32], sizes = [2, 32], strides = [1, 1]} : vector<2x128xf32> to vector<2x32xf32>
    %718 = arith.negf %717 : vector<2x32xf32>
    %719 = math.exp %718 : vector<2x32xf32>
    %cst_251 = arith.constant 1.000000e+00 : f32
    %720 = vector.broadcast %cst_251 : f32 to vector<2x32xf32>
    %721 = arith.addf %720, %719 : vector<2x32xf32>
    %722 = arith.divf %720, %721 : vector<2x32xf32>
    %723 = vector.extract_strided_slice %710 {offsets = [0, 64], sizes = [2, 32], strides = [1, 1]} : vector<2x128xf32> to vector<2x32xf32>
    %724 = math.tanh %723 : vector<2x32xf32>
    %725 = vector.extract_strided_slice %710 {offsets = [0, 96], sizes = [2, 32], strides = [1, 1]} : vector<2x128xf32> to vector<2x32xf32>
    %726 = arith.negf %725 : vector<2x32xf32>
    %727 = math.exp %726 : vector<2x32xf32>
    %cst_252 = arith.constant 1.000000e+00 : f32
    %728 = vector.broadcast %cst_252 : f32 to vector<2x32xf32>
    %729 = arith.addf %728, %727 : vector<2x32xf32>
    %730 = arith.divf %728, %729 : vector<2x32xf32>
    %731 = arith.mulf %722, %696 : vector<2x32xf32>
    %732 = arith.mulf %716, %724 : vector<2x32xf32>
    %733 = arith.addf %731, %732 : vector<2x32xf32>
    %734 = math.tanh %733 : vector<2x32xf32>
    %735 = arith.mulf %730, %734 : vector<2x32xf32>
    %736 = arith.index_cast %c7_i32 : i32 to index
    %c0_253 = arith.constant 0 : index
    %c0_254 = arith.constant 0 : index
    %737 = vector.load %arg30[%736, %c0_253, %c0_254] : memref<8x2x32xf32, #tpu.memory_space<vmem>>, vector<1x2x32xf32>
    %738 = vector.shape_cast %737 : vector<1x2x32xf32> to vector<2x32xf32>
    %739 = vector.shape_cast %735 : vector<2x32xf32> to vector<1x2x32xf32>
    tpu.vector_store %arg30[%736, %c0_253, %c0_254], %739 {strides = array<i32>} : memref<8x2x32xf32, #tpu.memory_space<vmem>>, vector<1x2x32xf32>,
    %c8_i32 = arith.constant 8 : i32
    %c0_255 = arith.constant 0 : index
    %c0_256 = arith.constant 0 : index
    %c0_257 = arith.constant 0 : index
    %740 = vector.load %arg30[%c0_255, %c0_256, %c0_257] : memref<8x2x32xf32, #tpu.memory_space<vmem>>, vector<8x2x32xf32>
    %741 = vector.shape_cast %740 : vector<8x2x32xf32> to vector<16x32xf32>
    %c0_258 = arith.constant 0 : index
    %c0_259 = arith.constant 0 : index
    %742 = vector.load %arg24[%c0_258, %c0_259] : memref<32x16xbf16, #tpu.memory_space<vmem>>, vector<32x16xbf16>
    %743 = arith.truncf %741 : vector<16x32xf32> to vector<16x32xbf16>
    %cst_260 = arith.constant dense<0.000000e+00> : vector<16x16xf32>
    %744 = tpu.matmul %743, %742, %cst_260 {dimension_numbers = #tpu.dot_dimension_numbers<[1], [0], [0], [1], [0, 0, 1, 1], [], []>} : vector<16x32xbf16>, vector<32x16xbf16>, vector<16x16xf32> -> vector<16x16xf32>
    %c0_261 = arith.constant 0 : index
    %c0_262 = arith.constant 0 : index
    %745 = vector.load %arg25[%c0_261, %c0_262] : memref<1x16xf32, #tpu.memory_space<vmem>>, vector<1x16xf32>
    %746 = vector.broadcast %745 : vector<1x16xf32> to vector<16x16xf32>
    %747 = arith.addf %744, %746 : vector<16x16xf32>
    %cst_263 = arith.constant 0.000000e+00 : f32
    %748 = vector.broadcast %cst_263 : f32 to vector<16x16xf32>
    %749 = arith.maximumf %747, %748 : vector<16x16xf32>
    %c0_264 = arith.constant 0 : index
    %c0_265 = arith.constant 0 : index
    %750 = vector.load %arg26[%c0_264, %c0_265] : memref<16x1xbf16, #tpu.memory_space<vmem>>, vector<16x1xbf16>
    %751 = arith.truncf %749 : vector<16x16xf32> to vector<16x16xbf16>
    %cst_266 = arith.constant dense<0.000000e+00> : vector<16x1xf32>
    %752 = tpu.matmul %751, %750, %cst_266 {dimension_numbers = #tpu.dot_dimension_numbers<[1], [0], [0], [1], [0, 0, 1, 1], [], []>} : vector<16x16xbf16>, vector<16x1xbf16>, vector<16x1xf32> -> vector<16x1xf32>
    %c0_267 = arith.constant 0 : index
    %c0_268 = arith.constant 0 : index
    %753 = vector.load %arg27[%c0_267, %c0_268] : memref<1x1xf32, #tpu.memory_space<vmem>>, vector<1x1xf32>
    %754 = vector.broadcast %753 : vector<1x1xf32> to vector<16x1xf32>
    %755 = arith.addf %752, %754 : vector<16x1xf32>
    %c0_269 = arith.constant 0 : index
    %c0_270 = arith.constant 0 : index
    %756 = vector.load %arg2[%c0_269, %c0_270] : memref<16x1xf32, #tpu.memory_space<vmem>>, vector<16x1xf32>
    %757 = arith.mulf %755, %756 : vector<16x1xf32>
    %758 = vector.shape_cast %757 : vector<16x1xf32> to vector<16x1xf32>
    %759 = vector.broadcast %758 : vector<16x1xf32> to vector<16x128xf32>
    %c0_271 = arith.constant 0 : index
    %c0_272 = arith.constant 0 : index
    %760 = vector.load %arg28[%c0_271, %c0_272] : memref<16x128xf32, #tpu.memory_space<vmem>>, vector<16x128xf32>
    tpu.vector_store %arg28[%c0_271, %c0_272], %759 {strides = array<i32>} : memref<16x128xf32, #tpu.memory_space<vmem>>, vector<16x128xf32>,
    return
  }
}

</mosaic_0001>

<llo_original>
// kernel: tpu_custom_call.1
$region0: #{tpu_custom_call.1}
  #allocation0 [shape = 'u32[]', space=smem, size = 0x4, offset = 0x4, fixed_abs, tag = 'smem constant byte address 0x4 - core index']
  #allocation1 [shape = 'u32[144,128]{1,0:T(1,128)}', space=vmem, size = 0x12000, scoped, tag = 'internal scratch']
  #allocation2 [shape = 'f32[8,2,32]{2,1,0:T(2,128)}', space=vmem, size = 0x2000, scoped, tag = 'scratch operand']
  #allocation3 [shape = 'f32[8,2,32]{2,1,0:T(2,128)}', space=vmem, size = 0x2000, scoped, tag = 'scratch operand']
  #allocation4 [shape = 'f32[1,1]{1,0:T(1,128)S(1)}', space=vmem, size = 0x200, scoped, tag = 'scoped memory for tpu_custom_call.1']
  %s0 = inlined_call_operand.hbm [shape: f32[16,16], index: 0, kind: input, shape index: {}]
  %s1 = inlined_call_operand.hbm [shape: f32[2,8], index: 1, kind: input, shape index: {}]
  %s2 = inlined_call_operand.vmem [shape: f32[16,1], index: 2, kind: input, shape index: {}]
  %s3 = inlined_call_operand.hbm [shape: f32[8,32], index: 3, kind: input, shape index: {}]
  %s4 = inlined_call_operand.hbm [shape: bf16[16,32], index: 4, kind: input, shape index: {}]
  %s5 = inlined_call_operand.hbm [shape: f32[1,32], index: 5, kind: input, shape index: {}]
  %s6 = inlined_call_operand.hbm [shape: f32[2,1,32], index: 6, kind: input, shape index: {}]
  %s7 = inlined_call_operand.hbm [shape: f32[2,1,32], index: 7, kind: input, shape index: {}]
  %s8 = inlined_call_operand.vmem [shape: bf16[2,32,96], index: 8, kind: input, shape index: {}]
  %s9 = inlined_call_operand.hbm [shape: f32[2,1,96], index: 9, kind: input, shape index: {}]
  %s10 = inlined_call_operand.hbm [shape: bf16[2,32,32], index: 10, kind: input, shape index: {}]
  %s11 = inlined_call_operand.hbm [shape: f32[2,1,32], index: 11, kind: input, shape index: {}]
  %s12 = inlined_call_operand.hbm [shape: f32[2,1,32], index: 12, kind: input, shape index: {}]
  %s13 = inlined_call_operand.hbm [shape: f32[2,1,32], index: 13, kind: input, shape index: {}]
  %s14 = inlined_call_operand.hbm [shape: bf16[2,32,32], index: 14, kind: input, shape index: {}]
  %s15 = inlined_call_operand.hbm [shape: f32[2,1,32], index: 15, kind: input, shape index: {}]
  %s16 = inlined_call_operand.hbm [shape: bf16[2,32,32], index: 16, kind: input, shape index: {}]
  %s17 = inlined_call_operand.hbm [shape: f32[2,1,32], index: 17, kind: input, shape index: {}]
  %s18 = inlined_call_operand.hbm [shape: f32[1,32], index: 18, kind: input, shape index: {}]
  %s19 = inlined_call_operand.hbm [shape: f32[1,32], index: 19, kind: input, shape index: {}]
  %s20 = inlined_call_operand.vmem [shape: bf16[96,128], index: 20, kind: input, shape index: {}]
  %s21 = inlined_call_operand.vmem [shape: f32[1,128], index: 21, kind: input, shape index: {}]
  %s22 = inlined_call_operand.vmem [shape: f32[1,32], index: 22, kind: input, shape index: {}]
  %s23 = inlined_call_operand.vmem [shape: f32[1,32], index: 23, kind: input, shape index: {}]
  %s24 = inlined_call_operand.vmem [shape: bf16[32,16], index: 24, kind: input, shape index: {}]
  %s25 = inlined_call_operand.vmem [shape: f32[1,16], index: 25, kind: input, shape index: {}]
  %s26 = inlined_call_operand.vmem [shape: bf16[16,1], index: 26, kind: input, shape index: {}]
  %s27 = inlined_call_operand.<no memory space> [shape: f32[1,1], index: 27, kind: input, shape index: {}]
  %s28 = inlined_call_operand.hbm [shape: f32[16,128], index: 28, kind: output, shape index: {}]
  %s29 = sld [smem:[#allocation0]]
  $region194: #{tpu_custom_call.1} parent=0
    _
  %s31 = ssub.s32 1, %s29
  %s32 = scalar_select 0, %s31, %s29
  %v33 = vstv %s27
  %34 = vst [vmem:[#allocation4] sm:$0x1] %v33
  $region1: #{tpu_custom_call.1} parent=0
    #allocation5 [shape = 'u8[8192]{0}', space=vmem, size = 0x2000, scoped, tag = 'input window, operand 0, single buffered']
    #allocation6 [shape = 's32[1]{0}', space=sflag, size = 0x4, scoped, tag = 'scoped memory for tpu_custom_call.1']
    #allocation7 [shape = 's32[1]{0}', space=sflag, size = 0x4, scoped, tag = 'scoped memory for tpu_custom_call.1']
    #allocation8 [shape = 'u8[1024]{0}', space=vmem, size = 0x400, scoped, tag = 'input window, operand 1, single buffered']
    #allocation9 [shape = 's32[1]{0}', space=sflag, size = 0x4, scoped, tag = 'scoped memory for tpu_custom_call.1']
    #allocation10 [shape = 'u8[4096]{0}', space=vmem, size = 0x1000, scoped, tag = 'input window, operand 3, single buffered']
    #allocation11 [shape = 'u8[4096]{0}', space=vmem, size = 0x1000, scoped, tag = 'input window, operand 4, single buffered']
    #allocation12 [shape = 's32[1]{0}', space=sflag, size = 0x4, scoped, tag = 'scoped memory for tpu_custom_call.1']
    #allocation13 [shape = 'u8[512]{0}', space=vmem, size = 0x400, scoped, tag = 'input window, operand 5, single buffered']
    #allocation14 [shape = 'u8[1024]{0}', space=vmem, size = 0x400, scoped, tag = 'input window, operand 6, single buffered']
    #allocation15 [shape = 's32[1]{0}', space=sflag, size = 0x4, scoped, tag = 'scoped memory for tpu_custom_call.1']
    #allocation16 [shape = 'u8[1024]{0}', space=vmem, size = 0x400, scoped, tag = 'input window, operand 7, single buffered']
    #allocation17 [shape = 'u8[1024]{0}', space=vmem, size = 0x400, scoped, tag = 'input window, operand 9, single buffered']
    #allocation18 [shape = 's32[1]{0}', space=sflag, size = 0x4, scoped, tag = 'scoped memory for tpu_custom_call.1']
    #allocation19 [shape = 'u8[16384]{0}', space=vmem, size = 0x4000, scoped, tag = 'input window, operand 10, single buffered']
    #allocation20 [shape = 'u8[1024]{0}', space=vmem, size = 0x400, scoped, tag = 'input window, operand 11, single buffered']
    #allocation21 [shape = 's32[1]{0}', space=sflag, size = 0x4, scoped, tag = 'scoped memory for tpu_custom_call.1']
    #allocation22 [shape = 'u8[1024]{0}', space=vmem, size = 0x400, scoped, tag = 'input window, operand 12, single buffered']
    #allocation23 [shape = 'u8[1024]{0}', space=vmem, size = 0x400, scoped, tag = 'input window, operand 13, single buffered']
    #allocation24 [shape = 's32[1]{0}', space=sflag, size = 0x4, scoped, tag = 'scoped memory for tpu_custom_call.1']
    #allocation25 [shape = 'u8[16384]{0}', space=vmem, size = 0x4000, scoped, tag = 'input window, operand 14, single buffered']
    #allocation26 [shape = 'u8[1024]{0}', space=vmem, size = 0x400, scoped, tag = 'input window, operand 15, single buffered']
    #allocation27 [shape = 's32[1]{0}', space=sflag, size = 0x4, scoped, tag = 'scoped memory for tpu_custom_call.1']
    #allocation28 [shape = 'u8[16384]{0}', space=vmem, size = 0x4000, scoped, tag = 'input window, operand 16, single buffered']
    #allocation29 [shape = 'u8[1024]{0}', space=vmem, size = 0x400, scoped, tag = 'input window, operand 17, single buffered']
    #allocation30 [shape = 's32[1]{0}', space=sflag, size = 0x4, scoped, tag = 'scoped memory for tpu_custom_call.1']
    #allocation31 [shape = 'u8[512]{0}', space=vmem, size = 0x400, scoped, tag = 'input window, operand 18, single buffered']
    #allocation32 [shape = 'u8[512]{0}', space=vmem, size = 0x400, scoped, tag = 'input window, operand 19, single buffered']
    #allocation33 [shape = 's32[1]{0}', space=sflag, size = 0x4, scoped, tag = 'scoped memory for tpu_custom_call.1']
    #allocation34 [shape = 'u8[8192]{0}', space=vmem, size = 0x2000, scoped, tag = 'output window, operand 0, single buffered']
    %35 = vsyncpa [#allocation6], 0
    %36 = vsyncpa [#allocation9], 0
    %37 = vsyncpa [#allocation12], 0
    %38 = vsyncpa [#allocation15], 0
    %39 = vsyncpa [#allocation18], 0
    %40 = vsyncpa [#allocation21], 0
    %41 = vsyncpa [#allocation24], 0
    %42 = vsyncpa [#allocation27], 0
    %43 = vsyncpa [#allocation30], 0
    %44 = vsyncpa [#allocation33], 0
    %45 = vsyncpa [#allocation7], 0
    // Predicated region
    $region2: #{tpu_custom_call.1} parent=1 // pred_check
      _
    $region3: #{tpu_custom_call.1} parent=1 // pred_check_branch
      %47 = sbr.rel (0) target = $region5
    $region4: #{tpu_custom_call.1} parent=1 // pred_region
      %s49 = ssub.s32 256, 256
      %50 = vsyncadd [#allocation6], %s49
      %s51 = sshll.u32 [#allocation5], 4
      %s52 = int_to_ptr.vmem [resolvable:$true] %s51
      %57 = dma.hbm_to_vmem [thread:$0]  %s0, 256, %s52, [#allocation6], 128, 128, 8
    $region5: #{tpu_custom_call.1} parent=1 // pred_fallthru
      _
    // Predicated region
    $region6: #{tpu_custom_call.1} parent=1 // pred_check
      _
    $region7: #{tpu_custom_call.1} parent=1 // pred_check_branch
      %59 = sbr.rel (0) target = $region9
    $region8: #{tpu_custom_call.1} parent=1 // pred_region
      %s61 = ssub.s32 32, 32
      %62 = vsyncadd [#allocation9], %s61
      %s64 = sshll.u32 [#allocation8], 4
      %s65 = int_to_ptr.vmem [resolvable:$true] %s64
      %67 = dma.hbm_to_vmem [thread:$0]  %s1, 32, %s65, [#allocation9]
    $region9: #{tpu_custom_call.1} parent=1 // pred_fallthru
      _
    // Predicated region
    $region10: #{tpu_custom_call.1} parent=1 // pred_check
      _
    $region11: #{tpu_custom_call.1} parent=1 // pred_check_branch
      %69 = sbr.rel (0) target = $region13
    $region12: #{tpu_custom_call.1} parent=1 // pred_region
      _
    $region13: #{tpu_custom_call.1} parent=1 // pred_fallthru
      _
    // Predicated region
    $region14: #{tpu_custom_call.1} parent=1 // pred_check
      _
    $region15: #{tpu_custom_call.1} parent=1 // pred_check_branch
      %71 = sbr.rel (0) target = $region17
    $region16: #{tpu_custom_call.1} parent=1 // pred_region
      %s73 = ssub.s32 128, 128
      %74 = vsyncadd [#allocation9], %s73
      %s76 = sshll.u32 [#allocation10], 4
      %s77 = int_to_ptr.vmem [resolvable:$true] %s76
      %79 = dma.hbm_to_vmem [thread:$0]  %s3, 128, %s77, [#allocation9]
    $region17: #{tpu_custom_call.1} parent=1 // pred_fallthru
      _
    // Predicated region
    $region18: #{tpu_custom_call.1} parent=1 // pred_check
      _
    $region19: #{tpu_custom_call.1} parent=1 // pred_check_branch
      %81 = sbr.rel (0) target = $region21
    $region20: #{tpu_custom_call.1} parent=1 // pred_region
      %s83 = ssub.s32 128, 128
      %84 = vsyncadd [#allocation12], %s83
      %s85 = sshll.u32 [#allocation11], 4
      %s86 = int_to_ptr.vmem [resolvable:$true] %s85
      %91 = dma.hbm_to_vmem [thread:$0]  %s4, 128, %s86, [#allocation12], 64, 64, 4
    $region21: #{tpu_custom_call.1} parent=1 // pred_fallthru
      _
    // Predicated region
    $region22: #{tpu_custom_call.1} parent=1 // pred_check
      _
    $region23: #{tpu_custom_call.1} parent=1 // pred_check_branch
      %93 = sbr.rel (0) target = $region25
    $region24: #{tpu_custom_call.1} parent=1 // pred_region
      %s95 = ssub.s32 16, 16
      %96 = vsyncadd [#allocation12], %s95
      %s98 = sshll.u32 [#allocation13], 4
      %s99 = int_to_ptr.vmem [resolvable:$true] %s98
      %101 = dma.hbm_to_vmem [thread:$0]  %s5, 16, %s99, [#allocation12]
    $region25: #{tpu_custom_call.1} parent=1 // pred_fallthru
      _
    // Predicated region
    $region26: #{tpu_custom_call.1} parent=1 // pred_check
      _
    $region27: #{tpu_custom_call.1} parent=1 // pred_check_branch
      %103 = sbr.rel (0) target = $region29
    $region28: #{tpu_custom_call.1} parent=1 // pred_region
      %s105 = ssub.s32 32, 32
      %106 = vsyncadd [#allocation15], %s105
      %s107 = sshll.u32 [#allocation14], 4
      %s108 = int_to_ptr.vmem [resolvable:$true] %s107
      %113 = dma.hbm_to_vmem [thread:$0]  %s6, 32, %s108, [#allocation15], 16, 16, 1
    $region29: #{tpu_custom_call.1} parent=1 // pred_fallthru
      _
    // Predicated region
    $region30: #{tpu_custom_call.1} parent=1 // pred_check
      _
    $region31: #{tpu_custom_call.1} parent=1 // pred_check_branch
      %115 = sbr.rel (0) target = $region33
    $region32: #{tpu_custom_call.1} parent=1 // pred_region
      %s117 = ssub.s32 32, 32
      %118 = vsyncadd [#allocation15], %s117
      %s119 = sshll.u32 [#allocation16], 4
      %s120 = int_to_ptr.vmem [resolvable:$true] %s119
      %125 = dma.hbm_to_vmem [thread:$0]  %s7, 32, %s120, [#allocation15], 16, 16, 1
    $region33: #{tpu_custom_call.1} parent=1 // pred_fallthru
      _
    // Predicated region
    $region34: #{tpu_custom_call.1} parent=1 // pred_check
      _
    $region35: #{tpu_custom_call.1} parent=1 // pred_check_branch
      %127 = sbr.rel (0) target = $region37
    $region36: #{tpu_custom_call.1} parent=1 // pred_region
      _
    $region37: #{tpu_custom_call.1} parent=1 // pred_fallthru
      _
    // Predicated region
    $region38: #{tpu_custom_call.1} parent=1 // pred_check
      _
    $region39: #{tpu_custom_call.1} parent=1 // pred_check_branch
      %129 = sbr.rel (0) target = $region41
    $region40: #{tpu_custom_call.1} parent=1 // pred_region
      %s131 = ssub.s32 32, 32
      %132 = vsyncadd [#allocation18], %s131
      %s133 = sshll.u32 [#allocation17], 4
      %s134 = int_to_ptr.vmem [resolvable:$true] %s133
      %139 = dma.hbm_to_vmem [thread:$0]  %s9, 32, %s134, [#allocation18], 16, 16, 1
    $region41: #{tpu_custom_call.1} parent=1 // pred_fallthru
      _
    // Predicated region
    $region42: #{tpu_custom_call.1} parent=1 // pred_check
      _
    $region43: #{tpu_custom_call.1} parent=1 // pred_check_branch
      %141 = sbr.rel (0) target = $region45
    $region44: #{tpu_custom_call.1} parent=1 // pred_region
      %s143 = ssub.s32 512, 512
      %144 = vsyncadd [#allocation18], %s143
      %s145 = sshll.u32 [#allocation19], 4
      %s146 = int_to_ptr.vmem [resolvable:$true] %s145
      %151 = dma.hbm_to_vmem [thread:$0]  %s10, 512, %s146, [#allocation18], 64, 64, 4
    $region45: #{tpu_custom_call.1} parent=1 // pred_fallthru
      _
    // Predicated region
    $region46: #{tpu_custom_call.1} parent=1 // pred_check
      _
    $region47: #{tpu_custom_call.1} parent=1 // pred_check_branch
      %153 = sbr.rel (0) target = $region49
    $region48: #{tpu_custom_call.1} parent=1 // pred_region
      %s155 = ssub.s32 32, 32
      %156 = vsyncadd [#allocation21], %s155
      %s157 = sshll.u32 [#allocation20], 4
      %s158 = int_to_ptr.vmem [resolvable:$true] %s157
      %163 = dma.hbm_to_vmem [thread:$0]  %s11, 32, %s158, [#allocation21], 16, 16, 1
    $region49: #{tpu_custom_call.1} parent=1 // pred_fallthru
      _
    // Predicated region
    $region50: #{tpu_custom_call.1} parent=1 // pred_check
      _
    $region51: #{tpu_custom_call.1} parent=1 // pred_check_branch
      %165 = sbr.rel (0) target = $region53
    $region52: #{tpu_custom_call.1} parent=1 // pred_region
      %s167 = ssub.s32 32, 32
      %168 = vsyncadd [#allocation21], %s167
      %s169 = sshll.u32 [#allocation22], 4
      %s170 = int_to_ptr.vmem [resolvable:$true] %s169
      %175 = dma.hbm_to_vmem [thread:$0]  %s12, 32, %s170, [#allocation21], 16, 16, 1
    $region53: #{tpu_custom_call.1} parent=1 // pred_fallthru
      _
    // Predicated region
    $region54: #{tpu_custom_call.1} parent=1 // pred_check
      _
    $region55: #{tpu_custom_call.1} parent=1 // pred_check_branch
      %177 = sbr.rel (0) target = $region57
    $region56: #{tpu_custom_call.1} parent=1 // pred_region
      %s179 = ssub.s32 32, 32
      %180 = vsyncadd [#allocation24], %s179
      %s181 = sshll.u32 [#allocation23], 4
      %s182 = int_to_ptr.vmem [resolvable:$true] %s181
      %187 = dma.hbm_to_vmem [thread:$0]  %s13, 32, %s182, [#allocation24], 16, 16, 1
    $region57: #{tpu_custom_call.1} parent=1 // pred_fallthru
      _
    // Predicated region
    $region58: #{tpu_custom_call.1} parent=1 // pred_check
      _
    $region59: #{tpu_custom_call.1} parent=1 // pred_check_branch
      %189 = sbr.rel (0) target = $region61
    $region60: #{tpu_custom_call.1} parent=1 // pred_region
      %s191 = ssub.s32 512, 512
      %192 = vsyncadd [#allocation24], %s191
      %s193 = sshll.u32 [#allocation25], 4
      %s194 = int_to_ptr.vmem [resolvable:$true] %s193
      %199 = dma.hbm_to_vmem [thread:$0]  %s14, 512, %s194, [#allocation24], 64, 64, 4
    $region61: #{tpu_custom_call.1} parent=1 // pred_fallthru
      _
    // Predicated region
    $region62: #{tpu_custom_call.1} parent=1 // pred_check
      _
    $region63: #{tpu_custom_call.1} parent=1 // pred_check_branch
      %201 = sbr.rel (0) target = $region65
    $region64: #{tpu_custom_call.1} parent=1 // pred_region
      %s203 = ssub.s32 32, 32
      %204 = vsyncadd [#allocation27], %s203
      %s205 = sshll.u32 [#allocation26], 4
      %s206 = int_to_ptr.vmem [resolvable:$true] %s205
      %211 = dma.hbm_to_vmem [thread:$0]  %s15, 32, %s206, [#allocation27], 16, 16, 1
    $region65: #{tpu_custom_call.1} parent=1 // pred_fallthru
      _
    // Predicated region
    $region66: #{tpu_custom_call.1} parent=1 // pred_check
      _
    $region67: #{tpu_custom_call.1} parent=1 // pred_check_branch
      %213 = sbr.rel (0) target = $region69
    $region68: #{tpu_custom_call.1} parent=1 // pred_region
      %s215 = ssub.s32 512, 512
      %216 = vsyncadd [#allocation27], %s215
      %s217 = sshll.u32 [#allocation28], 4
      %s218 = int_to_ptr.vmem [resolvable:$true] %s217
      %223 = dma.hbm_to_vmem [thread:$0]  %s16, 512, %s218, [#allocation27], 64, 64, 4
    $region69: #{tpu_custom_call.1} parent=1 // pred_fallthru
      _
    // Predicated region
    $region70: #{tpu_custom_call.1} parent=1 // pred_check
      _
    $region71: #{tpu_custom_call.1} parent=1 // pred_check_branch
      %225 = sbr.rel (0) target = $region73
    $region72: #{tpu_custom_call.1} parent=1 // pred_region
      %s227 = ssub.s32 32, 32
      %228 = vsyncadd [#allocation30], %s227
      %s229 = sshll.u32 [#allocation29], 4
      %s230 = int_to_ptr.vmem [resolvable:$true] %s229
      %235 = dma.hbm_to_vmem [thread:$0]  %s17, 32, %s230, [#allocation30], 16, 16, 1
    $region73: #{tpu_custom_call.1} parent=1 // pred_fallthru
      _
    // Predicated region
    $region74: #{tpu_custom_call.1} parent=1 // pred_check
      _
    $region75: #{tpu_custom_call.1} parent=1 // pred_check_branch
      %237 = sbr.rel (0) target = $region77
    $region76: #{tpu_custom_call.1} parent=1 // pred_region
      %s239 = ssub.s32 16, 16
      %240 = vsyncadd [#allocation30], %s239
      %s242 = sshll.u32 [#allocation31], 4
      %s243 = int_to_ptr.vmem [resolvable:$true] %s242
      %245 = dma.hbm_to_vmem [thread:$0]  %s18, 16, %s243, [#allocation30]
    $region77: #{tpu_custom_call.1} parent=1 // pred_fallthru
      _
    // Predicated region
    $region78: #{tpu_custom_call.1} parent=1 // pred_check
      _
    $region79: #{tpu_custom_call.1} parent=1 // pred_check_branch
      %247 = sbr.rel (0) target = $region81
    $region80: #{tpu_custom_call.1} parent=1 // pred_region
      %s249 = ssub.s32 16, 16
      %250 = vsyncadd [#allocation33], %s249
      %s252 = sshll.u32 [#allocation32], 4
      %s253 = int_to_ptr.vmem [resolvable:$true] %s252
      %255 = dma.hbm_to_vmem [thread:$0]  %s19, 16, %s253, [#allocation33]
    $region81: #{tpu_custom_call.1} parent=1 // pred_fallthru
      _
    // Predicated region
    $region82: #{tpu_custom_call.1} parent=1 // pred_check
      _
    $region83: #{tpu_custom_call.1} parent=1 // pred_check_branch
      %257 = sbr.rel (0) target = $region85
    $region84: #{tpu_custom_call.1} parent=1 // pred_region
      _
    $region85: #{tpu_custom_call.1} parent=1 // pred_fallthru
      _
    // Predicated region
    $region86: #{tpu_custom_call.1} parent=1 // pred_check
      _
    $region87: #{tpu_custom_call.1} parent=1 // pred_check_branch
      %259 = sbr.rel (0) target = $region89
    $region88: #{tpu_custom_call.1} parent=1 // pred_region
      _
    $region89: #{tpu_custom_call.1} parent=1 // pred_fallthru
      _
    // Predicated region
    $region90: #{tpu_custom_call.1} parent=1 // pred_check
      _
    $region91: #{tpu_custom_call.1} parent=1 // pred_check_branch
      %261 = sbr.rel (0) target = $region93
    $region92: #{tpu_custom_call.1} parent=1 // pred_region
      _
    $region93: #{tpu_custom_call.1} parent=1 // pred_fallthru
      _
    // Predicated region
    $region94: #{tpu_custom_call.1} parent=1 // pred_check
      _
    $region95: #{tpu_custom_call.1} parent=1 // pred_check_branch
      %263 = sbr.rel (0) target = $region97
    $region96: #{tpu_custom_call.1} parent=1 // pred_region
      _
    $region97: #{tpu_custom_call.1} parent=1 // pred_fallthru
      _
    // Predicated region
    $region98: #{tpu_custom_call.1} parent=1 // pred_check
      _
    $region99: #{tpu_custom_call.1} parent=1 // pred_check_branch
      %265 = sbr.rel (0) target = $region101
    $region100: #{tpu_custom_call.1} parent=1 // pred_region
      _
    $region101: #{tpu_custom_call.1} parent=1 // pred_fallthru
      _
    // Predicated region
    $region102: #{tpu_custom_call.1} parent=1 // pred_check
      _
    $region103: #{tpu_custom_call.1} parent=1 // pred_check_branch
      %267 = sbr.rel (0) target = $region105
    $region104: #{tpu_custom_call.1} parent=1 // pred_region
      _
    $region105: #{tpu_custom_call.1} parent=1 // pred_fallthru
      _
    // Predicated region
    $region106: #{tpu_custom_call.1} parent=1 // pred_check
      _
    $region107: #{tpu_custom_call.1} parent=1 // pred_check_branch
      %269 = sbr.rel (0) target = $region109
    $region108: #{tpu_custom_call.1} parent=1 // pred_region
      _
    $region109: #{tpu_custom_call.1} parent=1 // pred_fallthru
      _
    // Predicated region
    $region110: #{tpu_custom_call.1} parent=1 // pred_check
      _
    $region111: #{tpu_custom_call.1} parent=1 // pred_check_branch
      %271 = sbr.rel (0) target = $region113
    $region112: #{tpu_custom_call.1} parent=1 // pred_region
      _
    $region113: #{tpu_custom_call.1} parent=1 // pred_fallthru
      _
    // Predicated region
    $region114: #{tpu_custom_call.1} parent=1 // pred_check
      _
    $region115: #{tpu_custom_call.1} parent=1 // pred_check_branch
      %273 = sbr.rel (0) target = $region117
    $region116: #{tpu_custom_call.1} parent=1 // pred_region
      %274 = dma.done [#allocation6], 256
    $region117: #{tpu_custom_call.1} parent=1 // pred_fallthru
      _
    // Predicated region
    $region118: #{tpu_custom_call.1} parent=1 // pred_check
      _
    $region119: #{tpu_custom_call.1} parent=1 // pred_check_branch
      %276 = sbr.rel (0) target = $region121
    $region120: #{tpu_custom_call.1} parent=1 // pred_region
      %277 = dma.done [#allocation9], 32
    $region121: #{tpu_custom_call.1} parent=1 // pred_fallthru
      _
    // Predicated region
    $region122: #{tpu_custom_call.1} parent=1 // pred_check
      _
    $region123: #{tpu_custom_call.1} parent=1 // pred_check_branch
      %279 = sbr.rel (0) target = $region125
    $region124: #{tpu_custom_call.1} parent=1 // pred_region
      %280 = dma.done [#allocation9], 128
    $region125: #{tpu_custom_call.1} parent=1 // pred_fallthru
      _
    // Predicated region
    $region126: #{tpu_custom_call.1} parent=1 // pred_check
      _
    $region127: #{tpu_custom_call.1} parent=1 // pred_check_branch
      %282 = sbr.rel (0) target = $region129
    $region128: #{tpu_custom_call.1} parent=1 // pred_region
      %283 = dma.done [#allocation12], 128
    $region129: #{tpu_custom_call.1} parent=1 // pred_fallthru
      _
    // Predicated region
    $region130: #{tpu_custom_call.1} parent=1 // pred_check
      _
    $region131: #{tpu_custom_call.1} parent=1 // pred_check_branch
      %285 = sbr.rel (0) target = $region133
    $region132: #{tpu_custom_call.1} parent=1 // pred_region
      %286 = dma.done [#allocation12], 16
    $region133: #{tpu_custom_call.1} parent=1 // pred_fallthru
      _
    // Predicated region
    $region134: #{tpu_custom_call.1} parent=1 // pred_check
      _
    $region135: #{tpu_custom_call.1} parent=1 // pred_check_branch
      %288 = sbr.rel (0) target = $region137
    $region136: #{tpu_custom_call.1} parent=1 // pred_region
      %289 = dma.done [#allocation15], 32
    $region137: #{tpu_custom_call.1} parent=1 // pred_fallthru
      _
    // Predicated region
    $region138: #{tpu_custom_call.1} parent=1 // pred_check
      _
    $region139: #{tpu_custom_call.1} parent=1 // pred_check_branch
      %291 = sbr.rel (0) target = $region141
    $region140: #{tpu_custom_call.1} parent=1 // pred_region
      %292 = dma.done [#allocation15], 32
    $region141: #{tpu_custom_call.1} parent=1 // pred_fallthru
      _
    // Predicated region
    $region142: #{tpu_custom_call.1} parent=1 // pred_check
      _
    $region143: #{tpu_custom_call.1} parent=1 // pred_check_branch
      %294 = sbr.rel (0) target = $region145
    $region144: #{tpu_custom_call.1} parent=1 // pred_region
      %295 = dma.done [#allocation18], 32
    $region145: #{tpu_custom_call.1} parent=1 // pred_fallthru
      _
    // Predicated region
    $region146: #{tpu_custom_call.1} parent=1 // pred_check
      _
    $region147: #{tpu_custom_call.1} parent=1 // pred_check_branch
      %297 = sbr.rel (0) target = $region149
    $region148: #{tpu_custom_call.1} parent=1 // pred_region
      %298 = dma.done [#allocation18], 512
    $region149: #{tpu_custom_call.1} parent=1 // pred_fallthru
      _
    // Predicated region
    $region150: #{tpu_custom_call.1} parent=1 // pred_check
      _
    $region151: #{tpu_custom_call.1} parent=1 // pred_check_branch
      %300 = sbr.rel (0) target = $region153
    $region152: #{tpu_custom_call.1} parent=1 // pred_region
      %301 = dma.done [#allocation21], 32
    $region153: #{tpu_custom_call.1} parent=1 // pred_fallthru
      _
    // Predicated region
    $region154: #{tpu_custom_call.1} parent=1 // pred_check
      _
    $region155: #{tpu_custom_call.1} parent=1 // pred_check_branch
      %303 = sbr.rel (0) target = $region157
    $region156: #{tpu_custom_call.1} parent=1 // pred_region
      %304 = dma.done [#allocation21], 32
    $region157: #{tpu_custom_call.1} parent=1 // pred_fallthru
      _
    // Predicated region
    $region158: #{tpu_custom_call.1} parent=1 // pred_check
      _
    $region159: #{tpu_custom_call.1} parent=1 // pred_check_branch
      %306 = sbr.rel (0) target = $region161
    $region160: #{tpu_custom_call.1} parent=1 // pred_region
      %307 = dma.done [#allocation24], 32
    $region161: #{tpu_custom_call.1} parent=1 // pred_fallthru
      _
    // Predicated region
    $region162: #{tpu_custom_call.1} parent=1 // pred_check
      _
    $region163: #{tpu_custom_call.1} parent=1 // pred_check_branch
      %309 = sbr.rel (0) target = $region165
    $region164: #{tpu_custom_call.1} parent=1 // pred_region
      %310 = dma.done [#allocation24], 512
    $region165: #{tpu_custom_call.1} parent=1 // pred_fallthru
      _
    // Predicated region
    $region166: #{tpu_custom_call.1} parent=1 // pred_check
      _
    $region167: #{tpu_custom_call.1} parent=1 // pred_check_branch
      %312 = sbr.rel (0) target = $region169
    $region168: #{tpu_custom_call.1} parent=1 // pred_region
      %313 = dma.done [#allocation27], 32
    $region169: #{tpu_custom_call.1} parent=1 // pred_fallthru
      _
    // Predicated region
    $region170: #{tpu_custom_call.1} parent=1 // pred_check
      _
    $region171: #{tpu_custom_call.1} parent=1 // pred_check_branch
      %315 = sbr.rel (0) target = $region173
    $region172: #{tpu_custom_call.1} parent=1 // pred_region
      %316 = dma.done [#allocation27], 512
    $region173: #{tpu_custom_call.1} parent=1 // pred_fallthru
      _
    // Predicated region
    $region174: #{tpu_custom_call.1} parent=1 // pred_check
      _
    $region175: #{tpu_custom_call.1} parent=1 // pred_check_branch
      %318 = sbr.rel (0) target = $region177
    $region176: #{tpu_custom_call.1} parent=1 // pred_region
      %319 = dma.done [#allocation30], 32
    $region177: #{tpu_custom_call.1} parent=1 // pred_fallthru
      _
    // Predicated region
    $region178: #{tpu_custom_call.1} parent=1 // pred_check
      _
    $region179: #{tpu_custom_call.1} parent=1 // pred_check_branch
      %321 = sbr.rel (0) target = $region181
    $region180: #{tpu_custom_call.1} parent=1 // pred_region
      %322 = dma.done [#allocation30], 16
    $region181: #{tpu_custom_call.1} parent=1 // pred_fallthru
      _
    // Predicated region
    $region182: #{tpu_custom_call.1} parent=1 // pred_check
      _
    $region183: #{tpu_custom_call.1} parent=1 // pred_check_branch
      %324 = sbr.rel (0) target = $region185
    $region184: #{tpu_custom_call.1} parent=1 // pred_region
      %325 = dma.done [#allocation33], 16
    $region185: #{tpu_custom_call.1} parent=1 // pred_fallthru
      _
    %v327 = vld [vmem:[#allocation5] sm:$0xff]
    %v328 = vld [vmem:[#allocation5 + $0x8] sm:$0xff]
    %v329 = vld [vmem:[#allocation11] sm:$0xf]
    %v330 = vld [vmem:[#allocation11 + $0x4] sm:$0xf]
    %v331 = vpack.c.bf16 %v328, %v327
    %v332 = vld [vmem:[#allocation13] sm:$0x1]
    %v334 = vlaneseq
    %v335 = vshrl.u32 %v334, 7
    %v336 = vsub.s32 0, %v335
    %v337 = vrot.slane %v332, %v336
    %v341 = vunpack.c.l.b16 %v329
    %v342 = vunpack.c.l.b16 %v330
    %v343 = vpack.c.b16 %v342, %v341
    %vm345 = vcmask 130048
    %v347 = vsel %vm345, %v331, 0
    %349 = vmatprep.subr.bf16.mxu0 0
    %350 = vmatpush1.bf16.msra.mxu0 0
    %351 = vmatprep.subr.bf16.mxu0 0
    %352 = vmatpush1.bf16.msra.mxu0 0
    %353 = vmatprep.subr.bf16.mxu0 0
    %354 = vmatpush1.bf16.msra.mxu0 0
    %355 = vmatprep.subr.bf16.mxu0 0
    %356 = vmatpush1.bf16.msra.mxu0 0
    %357 = vmatprep.subr.bf16.mxu0 0
    %358 = vmatpush1.bf16.msra.mxu0 0
    %359 = vmatprep.subr.bf16.mxu0 0
    %360 = vmatpush1.bf16.msra.mxu0 0
    %361 = vmatprep.subr.bf16.mxu0 0
    %362 = vmatpush1.bf16.msra.mxu0 0
    %363 = vmatprep.subr.bf16.mxu0 0
    %364 = vmatpush1.bf16.msra.mxu0 %v343
    %365 = vmatprep.subr.bf16.mxu0 0
    %366 = vmatpush2.bf16.msra.mxu0 0
    %367 = vmatprep.subr.bf16.mxu0 0
    %368 = vmatpush2.bf16.msra.mxu0 0
    %369 = vmatprep.subr.bf16.mxu0 0
    %370 = vmatpush2.bf16.msra.mxu0 0
    %371 = vmatprep.subr.bf16.mxu0 0
    %372 = vmatpush2.bf16.msra.mxu0 0
    %373 = vmatprep.subr.bf16.mxu0 0
    %374 = vmatpush2.bf16.msra.mxu0 0
    %375 = vmatprep.subr.bf16.mxu0 0
    %376 = vmatpush2.bf16.msra.mxu0 0
    %377 = vmatprep.subr.bf16.mxu0 0
    %378 = vmatpush2.bf16.msra.mxu0 0
    %379 = vmatprep.subr.bf16.mxu0 0
    %380 = vmatpush2.bf16.msra.mxu0 0
    %381 = vmatprep.mubr.bf16.mxu0 0
    %382 = vmatmul.mubr.bf16.gmra.mxu0 %v347
    %v383 = vpop.f32.mrf.mxu0
    %v384 = vadd.f32 %v337, %v383
    %v385 = vpop.f32.mrf.mxu0
    %v386 = vpop.f32.mrf.mxu0
    %v387 = vadd.f32 %v337, %v386
    %v388 = vpop.f32.mrf.mxu0
    %389 = vdwg.mxu0
    %v390 = vmul.f32 %v384, 5.656854
    %v391 = vmul.f32 %v387, 5.656854
    %v392 = vld [vmem:[#allocation10] sm:$0xff]
    %v393 = vadd.f32 %v390, %v392
    %v394 = vadd.f32 %v391, %v392
    %v395 = vld [vmem:[#allocation8] sm:$0x3]
    %v396 = vlaneseq
    %v397 = vshrl.u32 %v396, 7
    %v398 = vsub.s32 0, %v397
    %v399 = vrot.slane %v395, %v398
    %401 = vbcast.lane.b32.xlu0 %v399, 256
    %v402 = vpop.permute.xlu0 %401
    %v403 = vlaneseq
    %v404 = vshrl.u32 %v403, 7
    %v405 = vsub.s32 1, %v404
    %v406 = vrot.slane %v395, %v405
    %408 = vbcast.lane.b32.xlu0 %v406, 256
    %v409 = vpop.permute.xlu0 %408
    %v410 = vld [vmem:[#allocation14] sm:$0x1]
    %v411 = vld [vmem:[#allocation16] sm:$0x1]
    %vm412 = vcmask 261120
    %v413 = vsel %vm412, %v393, 0.0
    %414 = vadd.xlane.f32.xlu0 %v413
    %v415 = vpop.xlane.xlu0 %414
    %v416 = vsel %vm412, %v394, 0.0
    %417 = vadd.xlane.f32.xlu0 %v416
    %v418 = vpop.xlane.xlu0 %417
    %v419 = vrcp.pop 32.0
    %v420 = vmul.f32 %v415, %v419
    %v421 = vmul.f32 %v418, %v419
    %v422 = vsub.f32 %v393, %v420
    %v423 = vsub.f32 %v394, %v421
    %v424 = vmul.f32 %v422, %v422
    %v425 = vmul.f32 %v423, %v423
    %v426 = vsel %vm412, %v424, 0.0
    %427 = vadd.xlane.f32.xlu0 %v426
    %v428 = vpop.xlane.xlu0 %427
    %v429 = vsel %vm412, %v425, 0.0
    %430 = vadd.xlane.f32.xlu0 %v429
    %v431 = vpop.xlane.xlu0 %430
    %v432 = vrcp.pop 31.0
    %v433 = vmul.f32 %v428, %v432
    %v434 = vmul.f32 %v431, %v432
    %v436 = vlaneseq
    %v437 = vshrl.u32 %v436, 7
    %v438 = vsub.s32 0, %v437
    %v439 = vrot.slane %v410, %v438
    %v441 = vmul.f32 %v439, %v422
    %v442 = vmul.f32 %v439, %v423
    %v443 = vrsqrt.pop %v433
    %v444 = vmul.f32 %v433, %v443
    %vm445 = vcmp.eq.f32.partialorder %v433, inf
    %v446 = vsel %vm445, %v433, %v444
    %vm447 = vcmp.eq.f32.partialorder %v433, 0.0
    %v448 = vand.u32 %v433, 2147483648
    %v449 = vsel %vm447, %v448, %v446
    %v450 = vrsqrt.pop %v434
    %v451 = vmul.f32 %v434, %v450
    %vm452 = vcmp.eq.f32.partialorder %v434, inf
    %v453 = vsel %vm452, %v434, %v451
    %vm454 = vcmp.eq.f32.partialorder %v434, 0.0
    %v455 = vand.u32 %v434, 2147483648
    %v456 = vsel %vm454, %v455, %v453
    %v457 = vadd.f32 %v449, 1e-06
    %v458 = vadd.f32 %v456, 1e-06
    %v459 = vrcp.pop %v457
    %v460 = vmul.f32 %v441, %v459
    %v461 = vrcp.pop %v458
    %v462 = vmul.f32 %v442, %v461
    %v464 = vlaneseq
    %v465 = vshrl.u32 %v464, 7
    %v466 = vsub.s32 0, %v465
    %v467 = vrot.slane %v411, %v466
    %v469 = vadd.f32 %v460, %v467
    %v470 = vadd.f32 %v462, %v467
    %v471 = vld [vmem:[%s8] sm:$0xf]
    %v472 = vld [vmem:[%s8 + $0x4] sm:$0xf]
    %v473 = vld [vmem:[%s8 + $0x8] sm:$0xf]
    %v474 = vld [vmem:[%s8 + $0xc] sm:$0xf]
    %v475 = vpack.c.bf16 %v470, %v469
    %v476 = vld [vmem:[#allocation17] sm:$0x1]
    %v478 = vlaneseq
    %v479 = vshrl.u32 %v478, 7
    %v480 = vsub.s32 0, %v479
    %v481 = vrot.slane %v476, %v480
    %v487 = vunpack.c.l.b16 %v471
    %v488 = vunpack.c.l.b16 %v472
    %v489 = vunpack.c.l.b16 %v473
    %v490 = vunpack.c.l.b16 %v474
    %v491 = vpack.c.b16 %v488, %v487
    %v492 = vpack.c.b16 %v490, %v489
    %v496 = vsel %vm412, %v475, 0
    %498 = vmatprep.subr.bf16.mxu0 0
    %499 = vmatpush1.bf16.msra.mxu0 0
    %500 = vmatprep.subr.bf16.mxu0 0
    %501 = vmatpush1.bf16.msra.mxu0 0
    %502 = vmatprep.subr.bf16.mxu0 0
    %503 = vmatpush1.bf16.msra.mxu0 0
    %504 = vmatprep.subr.bf16.mxu0 0
    %505 = vmatpush1.bf16.msra.mxu0 0
    %506 = vmatprep.subr.bf16.mxu0 0
    %507 = vmatpush1.bf16.msra.mxu0 0
    %508 = vmatprep.subr.bf16.mxu0 0
    %509 = vmatpush1.bf16.msra.mxu0 0
    %510 = vmatprep.subr.bf16.mxu0 0
    %511 = vmatpush1.bf16.msra.mxu0 %v492
    %512 = vmatprep.subr.bf16.mxu0 0
    %513 = vmatpush1.bf16.msra.mxu0 %v491
    %514 = vmatprep.subr.bf16.mxu0 0
    %515 = vmatpush2.bf16.msra.mxu0 0
    %516 = vmatprep.subr.bf16.mxu0 0
    %517 = vmatpush2.bf16.msra.mxu0 0
    %518 = vmatprep.subr.bf16.mxu0 0
    %519 = vmatpush2.bf16.msra.mxu0 0
    %520 = vmatprep.subr.bf16.mxu0 0
    %521 = vmatpush2.bf16.msra.mxu0 0
    %522 = vmatprep.subr.bf16.mxu0 0
    %523 = vmatpush2.bf16.msra.mxu0 0
    %524 = vmatprep.subr.bf16.mxu0 0
    %525 = vmatpush2.bf16.msra.mxu0 0
    %526 = vmatprep.subr.bf16.mxu0 0
    %527 = vmatpush2.bf16.msra.mxu0 0
    %528 = vmatprep.subr.bf16.mxu0 0
    %529 = vmatpush2.bf16.msra.mxu0 0
    %530 = vmatprep.mubr.bf16.mxu0 0
    %531 = vmatmul.mubr.bf16.gmra.mxu0 %v496
    %v532 = vpop.f32.mrf.mxu0
    %v533 = vadd.f32 %v481, %v532
    %v534 = vpop.f32.mrf.mxu0
    %v535 = vpop.f32.mrf.mxu0
    %v536 = vadd.f32 %v481, %v535
    %v537 = vpop.f32.mrf.mxu0
    %538 = vdwg.mxu0
    %v539 = vpack.c.bf16 %v533, %v533
    %v540 = vpack.c.bf16 %v536, %v536
    %542 = vrot.lane.b32.xlu0 %v539, 96
    %v543 = vpop.permute.xlu0 %542
    %vm544 = vcmask 64512
    %v546 = vsel %vm544, %v539, 0
    %v549 = vsel %vm544, %v543, 0
    %551 = vmatprep.subr.bf16.mxu0 0
    %552 = vmatpush1.bf16.xpose.msra.mxu0 0
    %553 = vmatprep.subr.bf16.mxu0 0
    %554 = vmatpush1.bf16.xpose.msra.mxu0 0
    %555 = vmatprep.subr.bf16.mxu0 0
    %556 = vmatpush1.bf16.xpose.msra.mxu0 0
    %557 = vmatprep.subr.bf16.mxu0 0
    %558 = vmatpush1.bf16.xpose.msra.mxu0 0
    %559 = vmatprep.subr.bf16.mxu0 0
    %560 = vmatpush1.bf16.xpose.msra.mxu0 0
    %561 = vmatprep.subr.bf16.mxu0 0
    %562 = vmatpush1.bf16.xpose.msra.mxu0 0
    %563 = vmatprep.subr.bf16.mxu0 0
    %564 = vmatpush1.bf16.xpose.msra.mxu0 0
    %565 = vmatprep.subr.bf16.mxu0 0
    %566 = vmatpush1.bf16.xpose.msra.mxu0 %v549
    %567 = vmatprep.subr.bf16.mxu0 0
    %568 = vmatpush2.bf16.xpose.msra.mxu0 0
    %569 = vmatprep.subr.bf16.mxu0 0
    %570 = vmatpush2.bf16.xpose.msra.mxu0 0
    %571 = vmatprep.subr.bf16.mxu0 0
    %572 = vmatpush2.bf16.xpose.msra.mxu0 0
    %573 = vmatprep.subr.bf16.mxu0 0
    %574 = vmatpush2.bf16.xpose.msra.mxu0 0
    %575 = vmatprep.subr.bf16.mxu0 0
    %576 = vmatpush2.bf16.xpose.msra.mxu0 0
    %577 = vmatprep.subr.bf16.mxu0 0
    %578 = vmatpush2.bf16.xpose.msra.mxu0 0
    %579 = vmatprep.subr.bf16.mxu0 0
    %580 = vmatpush2.bf16.xpose.msra.mxu0 0
    %581 = vmatprep.subr.bf16.mxu0 0
    %582 = vmatpush2.bf16.xpose.msra.mxu0 0
    %583 = vmatprep.mubr.bf16.mxu0 0
    %584 = vmatmul.mubr.bf16.gmra.mxu0 %v546
    %v585 = vpop.f32.mrf.mxu0
    %v586 = vadd.f32 0.0, %v585
    %v587 = vpop.f32.mrf.mxu0
    %v588 = vpop.f32.mrf.mxu0
    %v589 = vpop.f32.mrf.mxu0
    %590 = vdwg.mxu0
    %592 = vrot.lane.b32.xlu0 %v540, 96
    %v593 = vpop.permute.xlu0 %592
    %v595 = vsel %vm544, %v540, 0
    %v598 = vsel %vm544, %v593, 0
    %600 = vmatprep.subr.bf16.mxu0 0
    %601 = vmatpush1.bf16.xpose.msra.mxu0 0
    %602 = vmatprep.subr.bf16.mxu0 0
    %603 = vmatpush1.bf16.xpose.msra.mxu0 0
    %604 = vmatprep.subr.bf16.mxu0 0
    %605 = vmatpush1.bf16.xpose.msra.mxu0 0
    %606 = vmatprep.subr.bf16.mxu0 0
    %607 = vmatpush1.bf16.xpose.msra.mxu0 0
    %608 = vmatprep.subr.bf16.mxu0 0
    %609 = vmatpush1.bf16.xpose.msra.mxu0 0
    %610 = vmatprep.subr.bf16.mxu0 0
    %611 = vmatpush1.bf16.xpose.msra.mxu0 0
    %612 = vmatprep.subr.bf16.mxu0 0
    %613 = vmatpush1.bf16.xpose.msra.mxu0 0
    %614 = vmatprep.subr.bf16.mxu0 0
    %615 = vmatpush1.bf16.xpose.msra.mxu0 %v598
    %616 = vmatprep.subr.bf16.mxu0 0
    %617 = vmatpush2.bf16.xpose.msra.mxu0 0
    %618 = vmatprep.subr.bf16.mxu0 0
    %619 = vmatpush2.bf16.xpose.msra.mxu0 0
    %620 = vmatprep.subr.bf16.mxu0 0
    %621 = vmatpush2.bf16.xpose.msra.mxu0 0
    %622 = vmatprep.subr.bf16.mxu0 0
    %623 = vmatpush2.bf16.xpose.msra.mxu0 0
    %624 = vmatprep.subr.bf16.mxu0 0
    %625 = vmatpush2.bf16.xpose.msra.mxu0 0
    %626 = vmatprep.subr.bf16.mxu0 0
    %627 = vmatpush2.bf16.xpose.msra.mxu0 0
    %628 = vmatprep.subr.bf16.mxu0 0
    %629 = vmatpush2.bf16.xpose.msra.mxu0 0
    %630 = vmatprep.subr.bf16.mxu0 0
    %631 = vmatpush2.bf16.xpose.msra.mxu0 0
    %632 = vmatprep.mubr.bf16.mxu0 0
    %633 = vmatmul.mubr.bf16.gmra.mxu0 %v595
    %v634 = vpop.f32.mrf.mxu0
    %v635 = vadd.f32 0.0, %v634
    %v636 = vpop.f32.mrf.mxu0
    %v637 = vpop.f32.mrf.mxu0
    %v638 = vpop.f32.mrf.mxu0
    %639 = vdwg.mxu0
    %v640 = vmul.f32 %v586, 0.35355338
    %v641 = vmul.f32 %v635, 0.35355338
    %vm642 = vcmp.eq.f32.partialorder %v402, 0.0
    %vm643 = vcmp.eq.f32.partialorder %v409, 0.0
    %v644 = vsel %vm642, 1, 0
    %v645 = vsel %vm643, 1, 0
    %vm646 = vcmp.eq.s32.totalorder %v644, 1
    %vm647 = vcmp.eq.s32.totalorder %v645, 1
    %v648 = vsel %vm646, -1e+09, %v640
    %v649 = vsel %vm647, -1e+09, %v641
    %v650 = vsel %vm544, %v648, -inf
    %651 = vmax.xlane.f32.xlu0 %v650
    %v652 = vpop.xlane.xlu0 %651
    %v653 = vsel %vm544, %v649, -inf
    %654 = vmax.xlane.f32.xlu0 %v653
    %v655 = vpop.xlane.xlu0 %654
    %v656 = vsub.f32 %v648, %v652
    %v657 = vsub.f32 %v649, %v655
    %v658 = vmul.f32 %v656, 1.442695
    %v659 = vpow.pop %v658
    %v660 = vmul.f32 %v657, 1.442695
    %v661 = vpow.pop %v660
    %v662 = vsel %vm544, %v659, 0.0
    %663 = vadd.xlane.f32.xlu0 %v662
    %v664 = vpop.xlane.xlu0 %663
    %v665 = vsel %vm544, %v661, 0.0
    %666 = vadd.xlane.f32.xlu0 %v665
    %v667 = vpop.xlane.xlu0 %666
    %v668 = vrcp.pop %v664
    %v669 = vrcp.pop %v667
    %v670 = vmul.f32 %v659, %v668
    %v671 = vmul.f32 %v661, %v669
    %v672 = vpack.c.bf16 %v670, %v670
    %v673 = vpack.c.bf16 %v671, %v671
    %674 = vrot.lane.b32.xlu0 %v539, 64
    %v675 = vpop.permute.xlu0 %674
    %v677 = vsel %vm544, %v672, 0
    %vm679 = vcmask 1043456
    %v681 = vsel %vm679, %v675, 0
    %683 = vmatprep.subr.bf16.mxu0 0
    %684 = vmatpush1.bf16.msra.mxu0 0
    %685 = vmatprep.subr.bf16.mxu0 0
    %686 = vmatpush1.bf16.msra.mxu0 0
    %687 = vmatprep.subr.bf16.mxu0 0
    %688 = vmatpush1.bf16.msra.mxu0 0
    %689 = vmatprep.subr.bf16.mxu0 0
    %690 = vmatpush1.bf16.msra.mxu0 0
    %691 = vmatprep.subr.bf16.mxu0 0
    %692 = vmatpush1.bf16.msra.mxu0 0
    %693 = vmatprep.subr.bf16.mxu0 0
    %694 = vmatpush1.bf16.msra.mxu0 0
    %695 = vmatprep.subr.bf16.mxu0 0
    %696 = vmatpush1.bf16.msra.mxu0 0
    %697 = vmatprep.subr.bf16.mxu0 0
    %698 = vmatpush1.bf16.msra.mxu0 %v681
    %699 = vmatprep.subr.bf16.mxu0 0
    %700 = vmatpush2.bf16.msra.mxu0 0
    %701 = vmatprep.subr.bf16.mxu0 0
    %702 = vmatpush2.bf16.msra.mxu0 0
    %703 = vmatprep.subr.bf16.mxu0 0
    %704 = vmatpush2.bf16.msra.mxu0 0
    %705 = vmatprep.subr.bf16.mxu0 0
    %706 = vmatpush2.bf16.msra.mxu0 0
    %707 = vmatprep.subr.bf16.mxu0 0
    %708 = vmatpush2.bf16.msra.mxu0 0
    %709 = vmatprep.subr.bf16.mxu0 0
    %710 = vmatpush2.bf16.msra.mxu0 0
    %711 = vmatprep.subr.bf16.mxu0 0
    %712 = vmatpush2.bf16.msra.mxu0 0
    %713 = vmatprep.subr.bf16.mxu0 0
    %714 = vmatpush2.bf16.msra.mxu0 0
    %715 = vmatprep.mubr.bf16.mxu0 0
    %716 = vmatmul.mubr.bf16.gmra.mxu0 %v677
    %v717 = vpop.f32.mrf.mxu0
    %v718 = vadd.f32 0.0, %v717
    %v719 = vpop.f32.mrf.mxu0
    %v720 = vpop.f32.mrf.mxu0
    %v721 = vpop.f32.mrf.mxu0
    %722 = vdwg.mxu0
    %723 = vrot.lane.b32.xlu0 %v540, 64
    %v724 = vpop.permute.xlu0 %723
    %v726 = vsel %vm544, %v673, 0
    %v729 = vsel %vm679, %v724, 0
    %731 = vmatprep.subr.bf16.mxu0 0
    %732 = vmatpush1.bf16.msra.mxu0 0
    %733 = vmatprep.subr.bf16.mxu0 0
    %734 = vmatpush1.bf16.msra.mxu0 0
    %735 = vmatprep.subr.bf16.mxu0 0
    %736 = vmatpush1.bf16.msra.mxu0 0
    %737 = vmatprep.subr.bf16.mxu0 0
    %738 = vmatpush1.bf16.msra.mxu0 0
    %739 = vmatprep.subr.bf16.mxu0 0
    %740 = vmatpush1.bf16.msra.mxu0 0
    %741 = vmatprep.subr.bf16.mxu0 0
    %742 = vmatpush1.bf16.msra.mxu0 0
    %743 = vmatprep.subr.bf16.mxu0 0
    %744 = vmatpush1.bf16.msra.mxu0 0
    %745 = vmatprep.subr.bf16.mxu0 0
    %746 = vmatpush1.bf16.msra.mxu0 %v729
    %747 = vmatprep.subr.bf16.mxu0 0
    %748 = vmatpush2.bf16.msra.mxu0 0
    %749 = vmatprep.subr.bf16.mxu0 0
    %750 = vmatpush2.bf16.msra.mxu0 0
    %751 = vmatprep.subr.bf16.mxu0 0
    %752 = vmatpush2.bf16.msra.mxu0 0
    %753 = vmatprep.subr.bf16.mxu0 0
    %754 = vmatpush2.bf16.msra.mxu0 0
    %755 = vmatprep.subr.bf16.mxu0 0
    %756 = vmatpush2.bf16.msra.mxu0 0
    %757 = vmatprep.subr.bf16.mxu0 0
    %758 = vmatpush2.bf16.msra.mxu0 0
    %759 = vmatprep.subr.bf16.mxu0 0
    %760 = vmatpush2.bf16.msra.mxu0 0
    %761 = vmatprep.subr.bf16.mxu0 0
    %762 = vmatpush2.bf16.msra.mxu0 0
    %763 = vmatprep.mubr.bf16.mxu0 0
    %764 = vmatmul.mubr.bf16.gmra.mxu0 %v726
    %v765 = vpop.f32.mrf.mxu0
    %v766 = vadd.f32 0.0, %v765
    %v767 = vpop.f32.mrf.mxu0
    %v768 = vpop.f32.mrf.mxu0
    %v769 = vpop.f32.mrf.mxu0
    %770 = vdwg.mxu0
    %771 = vrot.lane.b32.xlu0 %v539, 120
    %v772 = vpop.permute.xlu0 %771
    %773 = vrot.lane.b32.xlu0 %v539, 88
    %v774 = vpop.permute.xlu0 %773
    %v776 = vsel %vm544, %v772, 0
    %v779 = vsel %vm544, %v774, 0
    %781 = vmatprep.subr.bf16.mxu0 0
    %782 = vmatpush1.bf16.xpose.msra.mxu0 0
    %783 = vmatprep.subr.bf16.mxu0 0
    %784 = vmatpush1.bf16.xpose.msra.mxu0 0
    %785 = vmatprep.subr.bf16.mxu0 0
    %786 = vmatpush1.bf16.xpose.msra.mxu0 0
    %787 = vmatprep.subr.bf16.mxu0 0
    %788 = vmatpush1.bf16.xpose.msra.mxu0 0
    %789 = vmatprep.subr.bf16.mxu0 0
    %790 = vmatpush1.bf16.xpose.msra.mxu0 0
    %791 = vmatprep.subr.bf16.mxu0 0
    %792 = vmatpush1.bf16.xpose.msra.mxu0 0
    %793 = vmatprep.subr.bf16.mxu0 0
    %794 = vmatpush1.bf16.xpose.msra.mxu0 0
    %795 = vmatprep.subr.bf16.mxu0 0
    %796 = vmatpush1.bf16.xpose.msra.mxu0 %v779
    %797 = vmatprep.subr.bf16.mxu0 0
    %798 = vmatpush2.bf16.xpose.msra.mxu0 0
    %799 = vmatprep.subr.bf16.mxu0 0
    %800 = vmatpush2.bf16.xpose.msra.mxu0 0
    %801 = vmatprep.subr.bf16.mxu0 0
    %802 = vmatpush2.bf16.xpose.msra.mxu0 0
    %803 = vmatprep.subr.bf16.mxu0 0
    %804 = vmatpush2.bf16.xpose.msra.mxu0 0
    %805 = vmatprep.subr.bf16.mxu0 0
    %806 = vmatpush2.bf16.xpose.msra.mxu0 0
    %807 = vmatprep.subr.bf16.mxu0 0
    %808 = vmatpush2.bf16.xpose.msra.mxu0 0
    %809 = vmatprep.subr.bf16.mxu0 0
    %810 = vmatpush2.bf16.xpose.msra.mxu0 0
    %811 = vmatprep.subr.bf16.mxu0 0
    %812 = vmatpush2.bf16.xpose.msra.mxu0 0
    %813 = vmatprep.mubr.bf16.mxu0 0
    %814 = vmatmul.mubr.bf16.gmra.mxu0 %v776
    %v815 = vpop.f32.mrf.mxu0
    %v816 = vadd.f32 0.0, %v815
    %v817 = vpop.f32.mrf.mxu0
    %v818 = vpop.f32.mrf.mxu0
    %v819 = vpop.f32.mrf.mxu0
    %820 = vdwg.mxu0
    %821 = vrot.lane.b32.xlu0 %v540, 120
    %v822 = vpop.permute.xlu0 %821
    %823 = vrot.lane.b32.xlu0 %v540, 88
    %v824 = vpop.permute.xlu0 %823
    %v826 = vsel %vm544, %v822, 0
    %v829 = vsel %vm544, %v824, 0
    %831 = vmatprep.subr.bf16.mxu0 0
    %832 = vmatpush1.bf16.xpose.msra.mxu0 0
    %833 = vmatprep.subr.bf16.mxu0 0
    %834 = vmatpush1.bf16.xpose.msra.mxu0 0
    %835 = vmatprep.subr.bf16.mxu0 0
    %836 = vmatpush1.bf16.xpose.msra.mxu0 0
    %837 = vmatprep.subr.bf16.mxu0 0
    %838 = vmatpush1.bf16.xpose.msra.mxu0 0
    %839 = vmatprep.subr.bf16.mxu0 0
    %840 = vmatpush1.bf16.xpose.msra.mxu0 0
    %841 = vmatprep.subr.bf16.mxu0 0
    %842 = vmatpush1.bf16.xpose.msra.mxu0 0
    %843 = vmatprep.subr.bf16.mxu0 0
    %844 = vmatpush1.bf16.xpose.msra.mxu0 0
    %845 = vmatprep.subr.bf16.mxu0 0
    %846 = vmatpush1.bf16.xpose.msra.mxu0 %v829
    %847 = vmatprep.subr.bf16.mxu0 0
    %848 = vmatpush2.bf16.xpose.msra.mxu0 0
    %849 = vmatprep.subr.bf16.mxu0 0
    %850 = vmatpush2.bf16.xpose.msra.mxu0 0
    %851 = vmatprep.subr.bf16.mxu0 0
    %852 = vmatpush2.bf16.xpose.msra.mxu0 0
    %853 = vmatprep.subr.bf16.mxu0 0
    %854 = vmatpush2.bf16.xpose.msra.mxu0 0
    %855 = vmatprep.subr.bf16.mxu0 0
    %856 = vmatpush2.bf16.xpose.msra.mxu0 0
    %857 = vmatprep.subr.bf16.mxu0 0
    %858 = vmatpush2.bf16.xpose.msra.mxu0 0
    %859 = vmatprep.subr.bf16.mxu0 0
    %860 = vmatpush2.bf16.xpose.msra.mxu0 0
    %861 = vmatprep.subr.bf16.mxu0 0
    %862 = vmatpush2.bf16.xpose.msra.mxu0 0
    %863 = vmatprep.mubr.bf16.mxu0 0
    %864 = vmatmul.mubr.bf16.gmra.mxu0 %v826
    %v865 = vpop.f32.mrf.mxu0
    %v866 = vadd.f32 0.0, %v865
    %v867 = vpop.f32.mrf.mxu0
    %v868 = vpop.f32.mrf.mxu0
    %v869 = vpop.f32.mrf.mxu0
    %870 = vdwg.mxu0
    %v871 = vmul.f32 %v816, 0.35355338
    %v872 = vmul.f32 %v866, 0.35355338
    %v873 = vsel %vm646, -1e+09, %v871
    %v874 = vsel %vm647, -1e+09, %v872
    %v875 = vsel %vm544, %v873, -inf
    %876 = vmax.xlane.f32.xlu0 %v875
    %v877 = vpop.xlane.xlu0 %876
    %v878 = vsel %vm544, %v874, -inf
    %879 = vmax.xlane.f32.xlu0 %v878
    %v880 = vpop.xlane.xlu0 %879
    %v881 = vsub.f32 %v873, %v877
    %v882 = vsub.f32 %v874, %v880
    %v883 = vmul.f32 %v881, 1.442695
    %v884 = vpow.pop %v883
    %v885 = vmul.f32 %v882, 1.442695
    %v886 = vpow.pop %v885
    %v887 = vsel %vm544, %v884, 0.0
    %888 = vadd.xlane.f32.xlu0 %v887
    %v889 = vpop.xlane.xlu0 %888
    %v890 = vsel %vm544, %v886, 0.0
    %891 = vadd.xlane.f32.xlu0 %v890
    %v892 = vpop.xlane.xlu0 %891
    %v893 = vrcp.pop %v889
    %v894 = vrcp.pop %v892
    %v895 = vmul.f32 %v884, %v893
    %v896 = vmul.f32 %v886, %v894
    %v897 = vpack.c.bf16 %v895, %v895
    %v898 = vpack.c.bf16 %v896, %v896
    %899 = vrot.lane.b32.xlu0 %v539, 56
    %v900 = vpop.permute.xlu0 %899
    %v902 = vsel %vm544, %v897, 0
    %v905 = vsel %vm679, %v900, 0
    %907 = vmatprep.subr.bf16.mxu0 0
    %908 = vmatpush1.bf16.msra.mxu0 0
    %909 = vmatprep.subr.bf16.mxu0 0
    %910 = vmatpush1.bf16.msra.mxu0 0
    %911 = vmatprep.subr.bf16.mxu0 0
    %912 = vmatpush1.bf16.msra.mxu0 0
    %913 = vmatprep.subr.bf16.mxu0 0
    %914 = vmatpush1.bf16.msra.mxu0 0
    %915 = vmatprep.subr.bf16.mxu0 0
    %916 = vmatpush1.bf16.msra.mxu0 0
    %917 = vmatprep.subr.bf16.mxu0 0
    %918 = vmatpush1.bf16.msra.mxu0 0
    %919 = vmatprep.subr.bf16.mxu0 0
    %920 = vmatpush1.bf16.msra.mxu0 0
    %921 = vmatprep.subr.bf16.mxu0 0
    %922 = vmatpush1.bf16.msra.mxu0 %v905
    %923 = vmatprep.subr.bf16.mxu0 0
    %924 = vmatpush2.bf16.msra.mxu0 0
    %925 = vmatprep.subr.bf16.mxu0 0
    %926 = vmatpush2.bf16.msra.mxu0 0
    %927 = vmatprep.subr.bf16.mxu0 0
    %928 = vmatpush2.bf16.msra.mxu0 0
    %929 = vmatprep.subr.bf16.mxu0 0
    %930 = vmatpush2.bf16.msra.mxu0 0
    %931 = vmatprep.subr.bf16.mxu0 0
    %932 = vmatpush2.bf16.msra.mxu0 0
    %933 = vmatprep.subr.bf16.mxu0 0
    %934 = vmatpush2.bf16.msra.mxu0 0
    %935 = vmatprep.subr.bf16.mxu0 0
    %936 = vmatpush2.bf16.msra.mxu0 0
    %937 = vmatprep.subr.bf16.mxu0 0
    %938 = vmatpush2.bf16.msra.mxu0 0
    %939 = vmatprep.mubr.bf16.mxu0 0
    %940 = vmatmul.mubr.bf16.gmra.mxu0 %v902
    %v941 = vpop.f32.mrf.mxu0
    %v942 = vadd.f32 0.0, %v941
    %v943 = vpop.f32.mrf.mxu0
    %v944 = vpop.f32.mrf.mxu0
    %v945 = vpop.f32.mrf.mxu0
    %946 = vdwg.mxu0
    %947 = vrot.lane.b32.xlu0 %v540, 56
    %v948 = vpop.permute.xlu0 %947
    %v950 = vsel %vm544, %v898, 0
    %v953 = vsel %vm679, %v948, 0
    %955 = vmatprep.subr.bf16.mxu0 0
    %956 = vmatpush1.bf16.msra.mxu0 0
    %957 = vmatprep.subr.bf16.mxu0 0
    %958 = vmatpush1.bf16.msra.mxu0 0
    %959 = vmatprep.subr.bf16.mxu0 0
    %960 = vmatpush1.bf16.msra.mxu0 0
    %961 = vmatprep.subr.bf16.mxu0 0
    %962 = vmatpush1.bf16.msra.mxu0 0
    %963 = vmatprep.subr.bf16.mxu0 0
    %964 = vmatpush1.bf16.msra.mxu0 0
    %965 = vmatprep.subr.bf16.mxu0 0
    %966 = vmatpush1.bf16.msra.mxu0 0
    %967 = vmatprep.subr.bf16.mxu0 0
    %968 = vmatpush1.bf16.msra.mxu0 0
    %969 = vmatprep.subr.bf16.mxu0 0
    %970 = vmatpush1.bf16.msra.mxu0 %v953
    %971 = vmatprep.subr.bf16.mxu0 0
    %972 = vmatpush2.bf16.msra.mxu0 0
    %973 = vmatprep.subr.bf16.mxu0 0
    %974 = vmatpush2.bf16.msra.mxu0 0
    %975 = vmatprep.subr.bf16.mxu0 0
    %976 = vmatpush2.bf16.msra.mxu0 0
    %977 = vmatprep.subr.bf16.mxu0 0
    %978 = vmatpush2.bf16.msra.mxu0 0
    %979 = vmatprep.subr.bf16.mxu0 0
    %980 = vmatpush2.bf16.msra.mxu0 0
    %981 = vmatprep.subr.bf16.mxu0 0
    %982 = vmatpush2.bf16.msra.mxu0 0
    %983 = vmatprep.subr.bf16.mxu0 0
    %984 = vmatpush2.bf16.msra.mxu0 0
    %985 = vmatprep.subr.bf16.mxu0 0
    %986 = vmatpush2.bf16.msra.mxu0 0
    %987 = vmatprep.mubr.bf16.mxu0 0
    %988 = vmatmul.mubr.bf16.gmra.mxu0 %v950
    %v989 = vpop.f32.mrf.mxu0
    %v990 = vadd.f32 0.0, %v989
    %v991 = vpop.f32.mrf.mxu0
    %v992 = vpop.f32.mrf.mxu0
    %v993 = vpop.f32.mrf.mxu0
    %994 = vdwg.mxu0
    %995 = vrot.lane.b32.xlu0 %v539, 112
    %v996 = vpop.permute.xlu0 %995
    %997 = vrot.lane.b32.xlu0 %v539, 80
    %v998 = vpop.permute.xlu0 %997
    %v1000 = vsel %vm544, %v996, 0
    %v1003 = vsel %vm544, %v998, 0
    %1005 = vmatprep.subr.bf16.mxu0 0
    %1006 = vmatpush1.bf16.xpose.msra.mxu0 0
    %1007 = vmatprep.subr.bf16.mxu0 0
    %1008 = vmatpush1.bf16.xpose.msra.mxu0 0
    %1009 = vmatprep.subr.bf16.mxu0 0
    %1010 = vmatpush1.bf16.xpose.msra.mxu0 0
    %1011 = vmatprep.subr.bf16.mxu0 0
    %1012 = vmatpush1.bf16.xpose.msra.mxu0 0
    %1013 = vmatprep.subr.bf16.mxu0 0
    %1014 = vmatpush1.bf16.xpose.msra.mxu0 0
    %1015 = vmatprep.subr.bf16.mxu0 0
    %1016 = vmatpush1.bf16.xpose.msra.mxu0 0
    %1017 = vmatprep.subr.bf16.mxu0 0
    %1018 = vmatpush1.bf16.xpose.msra.mxu0 0
    %1019 = vmatprep.subr.bf16.mxu0 0
    %1020 = vmatpush1.bf16.xpose.msra.mxu0 %v1003
    %1021 = vmatprep.subr.bf16.mxu0 0
    %1022 = vmatpush2.bf16.xpose.msra.mxu0 0
    %1023 = vmatprep.subr.bf16.mxu0 0
    %1024 = vmatpush2.bf16.xpose.msra.mxu0 0
    %1025 = vmatprep.subr.bf16.mxu0 0
    %1026 = vmatpush2.bf16.xpose.msra.mxu0 0
    %1027 = vmatprep.subr.bf16.mxu0 0
    %1028 = vmatpush2.bf16.xpose.msra.mxu0 0
    %1029 = vmatprep.subr.bf16.mxu0 0
    %1030 = vmatpush2.bf16.xpose.msra.mxu0 0
    %1031 = vmatprep.subr.bf16.mxu0 0
    %1032 = vmatpush2.bf16.xpose.msra.mxu0 0
    %1033 = vmatprep.subr.bf16.mxu0 0
    %1034 = vmatpush2.bf16.xpose.msra.mxu0 0
    %1035 = vmatprep.subr.bf16.mxu0 0
    %1036 = vmatpush2.bf16.xpose.msra.mxu0 0
    %1037 = vmatprep.mubr.bf16.mxu0 0
    %1038 = vmatmul.mubr.bf16.gmra.mxu0 %v1000
    %v1039 = vpop.f32.mrf.mxu0
    %v1040 = vadd.f32 0.0, %v1039
    %v1041 = vpop.f32.mrf.mxu0
    %v1042 = vpop.f32.mrf.mxu0
    %v1043 = vpop.f32.mrf.mxu0
    %1044 = vdwg.mxu0
    %1045 = vrot.lane.b32.xlu0 %v540, 112
    %v1046 = vpop.permute.xlu0 %1045
    %1047 = vrot.lane.b32.xlu0 %v540, 80
    %v1048 = vpop.permute.xlu0 %1047
    %v1050 = vsel %vm544, %v1046, 0
    %v1053 = vsel %vm544, %v1048, 0
    %1055 = vmatprep.subr.bf16.mxu0 0
    %1056 = vmatpush1.bf16.xpose.msra.mxu0 0
    %1057 = vmatprep.subr.bf16.mxu0 0
    %1058 = vmatpush1.bf16.xpose.msra.mxu0 0
    %1059 = vmatprep.subr.bf16.mxu0 0
    %1060 = vmatpush1.bf16.xpose.msra.mxu0 0
    %1061 = vmatprep.subr.bf16.mxu0 0
    %1062 = vmatpush1.bf16.xpose.msra.mxu0 0
    %1063 = vmatprep.subr.bf16.mxu0 0
    %1064 = vmatpush1.bf16.xpose.msra.mxu0 0
    %1065 = vmatprep.subr.bf16.mxu0 0
    %1066 = vmatpush1.bf16.xpose.msra.mxu0 0
    %1067 = vmatprep.subr.bf16.mxu0 0
    %1068 = vmatpush1.bf16.xpose.msra.mxu0 0
    %1069 = vmatprep.subr.bf16.mxu0 0
    %1070 = vmatpush1.bf16.xpose.msra.mxu0 %v1053
    %1071 = vmatprep.subr.bf16.mxu0 0
    %1072 = vmatpush2.bf16.xpose.msra.mxu0 0
    %1073 = vmatprep.subr.bf16.mxu0 0
    %1074 = vmatpush2.bf16.xpose.msra.mxu0 0
    %1075 = vmatprep.subr.bf16.mxu0 0
    %1076 = vmatpush2.bf16.xpose.msra.mxu0 0
    %1077 = vmatprep.subr.bf16.mxu0 0
    %1078 = vmatpush2.bf16.xpose.msra.mxu0 0
    %1079 = vmatprep.subr.bf16.mxu0 0
    %1080 = vmatpush2.bf16.xpose.msra.mxu0 0
    %1081 = vmatprep.subr.bf16.mxu0 0
    %1082 = vmatpush2.bf16.xpose.msra.mxu0 0
    %1083 = vmatprep.subr.bf16.mxu0 0
    %1084 = vmatpush2.bf16.xpose.msra.mxu0 0
    %1085 = vmatprep.subr.bf16.mxu0 0
    %1086 = vmatpush2.bf16.xpose.msra.mxu0 0
    %1087 = vmatprep.mubr.bf16.mxu0 0
    %1088 = vmatmul.mubr.bf16.gmra.mxu0 %v1050
    %v1089 = vpop.f32.mrf.mxu0
    %v1090 = vadd.f32 0.0, %v1089
    %v1091 = vpop.f32.mrf.mxu0
    %v1092 = vpop.f32.mrf.mxu0
    %v1093 = vpop.f32.mrf.mxu0
    %1094 = vdwg.mxu0
    %v1095 = vmul.f32 %v1040, 0.35355338
    %v1096 = vmul.f32 %v1090, 0.35355338
    %v1097 = vsel %vm646, -1e+09, %v1095
    %v1098 = vsel %vm647, -1e+09, %v1096
    %v1099 = vsel %vm544, %v1097, -inf
    %1100 = vmax.xlane.f32.xlu0 %v1099
    %v1101 = vpop.xlane.xlu0 %1100
    %v1102 = vsel %vm544, %v1098, -inf
    %1103 = vmax.xlane.f32.xlu0 %v1102
    %v1104 = vpop.xlane.xlu0 %1103
    %v1105 = vsub.f32 %v1097, %v1101
    %v1106 = vsub.f32 %v1098, %v1104
    %v1107 = vmul.f32 %v1105, 1.442695
    %v1108 = vpow.pop %v1107
    %v1109 = vmul.f32 %v1106, 1.442695
    %v1110 = vpow.pop %v1109
    %v1111 = vsel %vm544, %v1108, 0.0
    %1112 = vadd.xlane.f32.xlu0 %v1111
    %v1113 = vpop.xlane.xlu0 %1112
    %v1114 = vsel %vm544, %v1110, 0.0
    %1115 = vadd.xlane.f32.xlu0 %v1114
    %v1116 = vpop.xlane.xlu0 %1115
    %v1117 = vrcp.pop %v1113
    %v1118 = vrcp.pop %v1116
    %v1119 = vmul.f32 %v1108, %v1117
    %v1120 = vmul.f32 %v1110, %v1118
    %v1121 = vpack.c.bf16 %v1119, %v1119
    %v1122 = vpack.c.bf16 %v1120, %v1120
    %1123 = vrot.lane.b32.xlu0 %v539, 48
    %v1124 = vpop.permute.xlu0 %1123
    %v1126 = vsel %vm544, %v1121, 0
    %v1129 = vsel %vm679, %v1124, 0
    %1131 = vmatprep.subr.bf16.mxu0 0
    %1132 = vmatpush1.bf16.msra.mxu0 0
    %1133 = vmatprep.subr.bf16.mxu0 0
    %1134 = vmatpush1.bf16.msra.mxu0 0
    %1135 = vmatprep.subr.bf16.mxu0 0
    %1136 = vmatpush1.bf16.msra.mxu0 0
    %1137 = vmatprep.subr.bf16.mxu0 0
    %1138 = vmatpush1.bf16.msra.mxu0 0
    %1139 = vmatprep.subr.bf16.mxu0 0
    %1140 = vmatpush1.bf16.msra.mxu0 0
    %1141 = vmatprep.subr.bf16.mxu0 0
    %1142 = vmatpush1.bf16.msra.mxu0 0
    %1143 = vmatprep.subr.bf16.mxu0 0
    %1144 = vmatpush1.bf16.msra.mxu0 0
    %1145 = vmatprep.subr.bf16.mxu0 0
    %1146 = vmatpush1.bf16.msra.mxu0 %v1129
    %1147 = vmatprep.subr.bf16.mxu0 0
    %1148 = vmatpush2.bf16.msra.mxu0 0
    %1149 = vmatprep.subr.bf16.mxu0 0
    %1150 = vmatpush2.bf16.msra.mxu0 0
    %1151 = vmatprep.subr.bf16.mxu0 0
    %1152 = vmatpush2.bf16.msra.mxu0 0
    %1153 = vmatprep.subr.bf16.mxu0 0
    %1154 = vmatpush2.bf16.msra.mxu0 0
    %1155 = vmatprep.subr.bf16.mxu0 0
    %1156 = vmatpush2.bf16.msra.mxu0 0
    %1157 = vmatprep.subr.bf16.mxu0 0
    %1158 = vmatpush2.bf16.msra.mxu0 0
    %1159 = vmatprep.subr.bf16.mxu0 0
    %1160 = vmatpush2.bf16.msra.mxu0 0
    %1161 = vmatprep.subr.bf16.mxu0 0
    %1162 = vmatpush2.bf16.msra.mxu0 0
    %1163 = vmatprep.mubr.bf16.mxu0 0
    %1164 = vmatmul.mubr.bf16.gmra.mxu0 %v1126
    %v1165 = vpop.f32.mrf.mxu0
    %v1166 = vadd.f32 0.0, %v1165
    %v1167 = vpop.f32.mrf.mxu0
    %v1168 = vpop.f32.mrf.mxu0
    %v1169 = vpop.f32.mrf.mxu0
    %1170 = vdwg.mxu0
    %1171 = vrot.lane.b32.xlu0 %v540, 48
    %v1172 = vpop.permute.xlu0 %1171
    %v1174 = vsel %vm544, %v1122, 0
    %v1177 = vsel %vm679, %v1172, 0
    %1179 = vmatprep.subr.bf16.mxu0 0
    %1180 = vmatpush1.bf16.msra.mxu0 0
    %1181 = vmatprep.subr.bf16.mxu0 0
    %1182 = vmatpush1.bf16.msra.mxu0 0
    %1183 = vmatprep.subr.bf16.mxu0 0
    %1184 = vmatpush1.bf16.msra.mxu0 0
    %1185 = vmatprep.subr.bf16.mxu0 0
    %1186 = vmatpush1.bf16.msra.mxu0 0
    %1187 = vmatprep.subr.bf16.mxu0 0
    %1188 = vmatpush1.bf16.msra.mxu0 0
    %1189 = vmatprep.subr.bf16.mxu0 0
    %1190 = vmatpush1.bf16.msra.mxu0 0
    %1191 = vmatprep.subr.bf16.mxu0 0
    %1192 = vmatpush1.bf16.msra.mxu0 0
    %1193 = vmatprep.subr.bf16.mxu0 0
    %1194 = vmatpush1.bf16.msra.mxu0 %v1177
    %1195 = vmatprep.subr.bf16.mxu0 0
    %1196 = vmatpush2.bf16.msra.mxu0 0
    %1197 = vmatprep.subr.bf16.mxu0 0
    %1198 = vmatpush2.bf16.msra.mxu0 0
    %1199 = vmatprep.subr.bf16.mxu0 0
    %1200 = vmatpush2.bf16.msra.mxu0 0
    %1201 = vmatprep.subr.bf16.mxu0 0
    %1202 = vmatpush2.bf16.msra.mxu0 0
    %1203 = vmatprep.subr.bf16.mxu0 0
    %1204 = vmatpush2.bf16.msra.mxu0 0
    %1205 = vmatprep.subr.bf16.mxu0 0
    %1206 = vmatpush2.bf16.msra.mxu0 0
    %1207 = vmatprep.subr.bf16.mxu0 0
    %1208 = vmatpush2.bf16.msra.mxu0 0
    %1209 = vmatprep.subr.bf16.mxu0 0
    %1210 = vmatpush2.bf16.msra.mxu0 0
    %1211 = vmatprep.mubr.bf16.mxu0 0
    %1212 = vmatmul.mubr.bf16.gmra.mxu0 %v1174
    %v1213 = vpop.f32.mrf.mxu0
    %v1214 = vadd.f32 0.0, %v1213
    %v1215 = vpop.f32.mrf.mxu0
    %v1216 = vpop.f32.mrf.mxu0
    %v1217 = vpop.f32.mrf.mxu0
    %1218 = vdwg.mxu0
    %1219 = vrot.lane.b32.xlu0 %v539, 104
    %v1220 = vpop.permute.xlu0 %1219
    %1221 = vrot.lane.b32.xlu0 %v539, 72
    %v1222 = vpop.permute.xlu0 %1221
    %v1224 = vsel %vm544, %v1220, 0
    %v1227 = vsel %vm544, %v1222, 0
    %1229 = vmatprep.subr.bf16.mxu0 0
    %1230 = vmatpush1.bf16.xpose.msra.mxu0 0
    %1231 = vmatprep.subr.bf16.mxu0 0
    %1232 = vmatpush1.bf16.xpose.msra.mxu0 0
    %1233 = vmatprep.subr.bf16.mxu0 0
    %1234 = vmatpush1.bf16.xpose.msra.mxu0 0
    %1235 = vmatprep.subr.bf16.mxu0 0
    %1236 = vmatpush1.bf16.xpose.msra.mxu0 0
    %1237 = vmatprep.subr.bf16.mxu0 0
    %1238 = vmatpush1.bf16.xpose.msra.mxu0 0
    %1239 = vmatprep.subr.bf16.mxu0 0
    %1240 = vmatpush1.bf16.xpose.msra.mxu0 0
    %1241 = vmatprep.subr.bf16.mxu0 0
    %1242 = vmatpush1.bf16.xpose.msra.mxu0 0
    %1243 = vmatprep.subr.bf16.mxu0 0
    %1244 = vmatpush1.bf16.xpose.msra.mxu0 %v1227
    %1245 = vmatprep.subr.bf16.mxu0 0
    %1246 = vmatpush2.bf16.xpose.msra.mxu0 0
    %1247 = vmatprep.subr.bf16.mxu0 0
    %1248 = vmatpush2.bf16.xpose.msra.mxu0 0
    %1249 = vmatprep.subr.bf16.mxu0 0
    %1250 = vmatpush2.bf16.xpose.msra.mxu0 0
    %1251 = vmatprep.subr.bf16.mxu0 0
    %1252 = vmatpush2.bf16.xpose.msra.mxu0 0
    %1253 = vmatprep.subr.bf16.mxu0 0
    %1254 = vmatpush2.bf16.xpose.msra.mxu0 0
    %1255 = vmatprep.subr.bf16.mxu0 0
    %1256 = vmatpush2.bf16.xpose.msra.mxu0 0
    %1257 = vmatprep.subr.bf16.mxu0 0
    %1258 = vmatpush2.bf16.xpose.msra.mxu0 0
    %1259 = vmatprep.subr.bf16.mxu0 0
    %1260 = vmatpush2.bf16.xpose.msra.mxu0 0
    %1261 = vmatprep.mubr.bf16.mxu0 0
    %1262 = vmatmul.mubr.bf16.gmra.mxu0 %v1224
    %v1263 = vpop.f32.mrf.mxu0
    %v1264 = vadd.f32 0.0, %v1263
    %v1265 = vpop.f32.mrf.mxu0
    %v1266 = vpop.f32.mrf.mxu0
    %v1267 = vpop.f32.mrf.mxu0
    %1268 = vdwg.mxu0
    %1269 = vrot.lane.b32.xlu0 %v540, 104
    %v1270 = vpop.permute.xlu0 %1269
    %1271 = vrot.lane.b32.xlu0 %v540, 72
    %v1272 = vpop.permute.xlu0 %1271
    %v1274 = vsel %vm544, %v1270, 0
    %v1277 = vsel %vm544, %v1272, 0
    %1279 = vmatprep.subr.bf16.mxu0 0
    %1280 = vmatpush1.bf16.xpose.msra.mxu0 0
    %1281 = vmatprep.subr.bf16.mxu0 0
    %1282 = vmatpush1.bf16.xpose.msra.mxu0 0
    %1283 = vmatprep.subr.bf16.mxu0 0
    %1284 = vmatpush1.bf16.xpose.msra.mxu0 0
    %1285 = vmatprep.subr.bf16.mxu0 0
    %1286 = vmatpush1.bf16.xpose.msra.mxu0 0
    %1287 = vmatprep.subr.bf16.mxu0 0
    %1288 = vmatpush1.bf16.xpose.msra.mxu0 0
    %1289 = vmatprep.subr.bf16.mxu0 0
    %1290 = vmatpush1.bf16.xpose.msra.mxu0 0
    %1291 = vmatprep.subr.bf16.mxu0 0
    %1292 = vmatpush1.bf16.xpose.msra.mxu0 0
    %1293 = vmatprep.subr.bf16.mxu0 0
    %1294 = vmatpush1.bf16.xpose.msra.mxu0 %v1277
    %1295 = vmatprep.subr.bf16.mxu0 0
    %1296 = vmatpush2.bf16.xpose.msra.mxu0 0
    %1297 = vmatprep.subr.bf16.mxu0 0
    %1298 = vmatpush2.bf16.xpose.msra.mxu0 0
    %1299 = vmatprep.subr.bf16.mxu0 0
    %1300 = vmatpush2.bf16.xpose.msra.mxu0 0
    %1301 = vmatprep.subr.bf16.mxu0 0
    %1302 = vmatpush2.bf16.xpose.msra.mxu0 0
    %1303 = vmatprep.subr.bf16.mxu0 0
    %1304 = vmatpush2.bf16.xpose.msra.mxu0 0
    %1305 = vmatprep.subr.bf16.mxu0 0
    %1306 = vmatpush2.bf16.xpose.msra.mxu0 0
    %1307 = vmatprep.subr.bf16.mxu0 0
    %1308 = vmatpush2.bf16.xpose.msra.mxu0 0
    %1309 = vmatprep.subr.bf16.mxu0 0
    %1310 = vmatpush2.bf16.xpose.msra.mxu0 0
    %1311 = vmatprep.mubr.bf16.mxu0 0
    %1312 = vmatmul.mubr.bf16.gmra.mxu0 %v1274
    %v1313 = vpop.f32.mrf.mxu0
    %v1314 = vadd.f32 0.0, %v1313
    %v1315 = vpop.f32.mrf.mxu0
    %v1316 = vpop.f32.mrf.mxu0
    %v1317 = vpop.f32.mrf.mxu0
    %1318 = vdwg.mxu0
    %v1319 = vmul.f32 %v1264, 0.35355338
    %v1320 = vmul.f32 %v1314, 0.35355338
    %v1321 = vsel %vm646, -1e+09, %v1319
    %v1322 = vsel %vm647, -1e+09, %v1320
    %v1323 = vsel %vm544, %v1321, -inf
    %1324 = vmax.xlane.f32.xlu0 %v1323
    %v1325 = vpop.xlane.xlu0 %1324
    %v1326 = vsel %vm544, %v1322, -inf
    %1327 = vmax.xlane.f32.xlu0 %v1326
    %v1328 = vpop.xlane.xlu0 %1327
    %v1329 = vsub.f32 %v1321, %v1325
    %v1330 = vsub.f32 %v1322, %v1328
    %v1331 = vmul.f32 %v1329, 1.442695
    %v1332 = vpow.pop %v1331
    %v1333 = vmul.f32 %v1330, 1.442695
    %v1334 = vpow.pop %v1333
    %v1335 = vsel %vm544, %v1332, 0.0
    %1336 = vadd.xlane.f32.xlu0 %v1335
    %v1337 = vpop.xlane.xlu0 %1336
    %v1338 = vsel %vm544, %v1334, 0.0
    %1339 = vadd.xlane.f32.xlu0 %v1338
    %v1340 = vpop.xlane.xlu0 %1339
    %v1341 = vrcp.pop %v1337
    %v1342 = vrcp.pop %v1340
    %v1343 = vmul.f32 %v1332, %v1341
    %v1344 = vmul.f32 %v1334, %v1342
    %v1345 = vpack.c.bf16 %v1343, %v1343
    %v1346 = vpack.c.bf16 %v1344, %v1344
    %1347 = vrot.lane.b32.xlu0 %v539, 40
    %v1348 = vpop.permute.xlu0 %1347
    %v1350 = vsel %vm544, %v1345, 0
    %v1353 = vsel %vm679, %v1348, 0
    %1355 = vmatprep.subr.bf16.mxu0 0
    %1356 = vmatpush1.bf16.msra.mxu0 0
    %1357 = vmatprep.subr.bf16.mxu0 0
    %1358 = vmatpush1.bf16.msra.mxu0 0
    %1359 = vmatprep.subr.bf16.mxu0 0
    %1360 = vmatpush1.bf16.msra.mxu0 0
    %1361 = vmatprep.subr.bf16.mxu0 0
    %1362 = vmatpush1.bf16.msra.mxu0 0
    %1363 = vmatprep.subr.bf16.mxu0 0
    %1364 = vmatpush1.bf16.msra.mxu0 0
    %1365 = vmatprep.subr.bf16.mxu0 0
    %1366 = vmatpush1.bf16.msra.mxu0 0
    %1367 = vmatprep.subr.bf16.mxu0 0
    %1368 = vmatpush1.bf16.msra.mxu0 0
    %1369 = vmatprep.subr.bf16.mxu0 0
    %1370 = vmatpush1.bf16.msra.mxu0 %v1353
    %1371 = vmatprep.subr.bf16.mxu0 0
    %1372 = vmatpush2.bf16.msra.mxu0 0
    %1373 = vmatprep.subr.bf16.mxu0 0
    %1374 = vmatpush2.bf16.msra.mxu0 0
    %1375 = vmatprep.subr.bf16.mxu0 0
    %1376 = vmatpush2.bf16.msra.mxu0 0
    %1377 = vmatprep.subr.bf16.mxu0 0
    %1378 = vmatpush2.bf16.msra.mxu0 0
    %1379 = vmatprep.subr.bf16.mxu0 0
    %1380 = vmatpush2.bf16.msra.mxu0 0
    %1381 = vmatprep.subr.bf16.mxu0 0
    %1382 = vmatpush2.bf16.msra.mxu0 0
    %1383 = vmatprep.subr.bf16.mxu0 0
    %1384 = vmatpush2.bf16.msra.mxu0 0
    %1385 = vmatprep.subr.bf16.mxu0 0
    %1386 = vmatpush2.bf16.msra.mxu0 0
    %1387 = vmatprep.mubr.bf16.mxu0 0
    %1388 = vmatmul.mubr.bf16.gmra.mxu0 %v1350
    %v1389 = vpop.f32.mrf.mxu0
    %v1390 = vadd.f32 0.0, %v1389
    %v1391 = vpop.f32.mrf.mxu0
    %v1392 = vpop.f32.mrf.mxu0
    %v1393 = vpop.f32.mrf.mxu0
    %1394 = vdwg.mxu0
    %1395 = vrot.lane.b32.xlu0 %v540, 40
    %v1396 = vpop.permute.xlu0 %1395
    %v1398 = vsel %vm544, %v1346, 0
    %v1401 = vsel %vm679, %v1396, 0
    %1403 = vmatprep.subr.bf16.mxu0 0
    %1404 = vmatpush1.bf16.msra.mxu0 0
    %1405 = vmatprep.subr.bf16.mxu0 0
    %1406 = vmatpush1.bf16.msra.mxu0 0
    %1407 = vmatprep.subr.bf16.mxu0 0
    %1408 = vmatpush1.bf16.msra.mxu0 0
    %1409 = vmatprep.subr.bf16.mxu0 0
    %1410 = vmatpush1.bf16.msra.mxu0 0
    %1411 = vmatprep.subr.bf16.mxu0 0
    %1412 = vmatpush1.bf16.msra.mxu0 0
    %1413 = vmatprep.subr.bf16.mxu0 0
    %1414 = vmatpush1.bf16.msra.mxu0 0
    %1415 = vmatprep.subr.bf16.mxu0 0
    %1416 = vmatpush1.bf16.msra.mxu0 0
    %1417 = vmatprep.subr.bf16.mxu0 0
    %1418 = vmatpush1.bf16.msra.mxu0 %v1401
    %1419 = vmatprep.subr.bf16.mxu0 0
    %1420 = vmatpush2.bf16.msra.mxu0 0
    %1421 = vmatprep.subr.bf16.mxu0 0
    %1422 = vmatpush2.bf16.msra.mxu0 0
    %1423 = vmatprep.subr.bf16.mxu0 0
    %1424 = vmatpush2.bf16.msra.mxu0 0
    %1425 = vmatprep.subr.bf16.mxu0 0
    %1426 = vmatpush2.bf16.msra.mxu0 0
    %1427 = vmatprep.subr.bf16.mxu0 0
    %1428 = vmatpush2.bf16.msra.mxu0 0
    %1429 = vmatprep.subr.bf16.mxu0 0
    %1430 = vmatpush2.bf16.msra.mxu0 0
    %1431 = vmatprep.subr.bf16.mxu0 0
    %1432 = vmatpush2.bf16.msra.mxu0 0
    %1433 = vmatprep.subr.bf16.mxu0 0
    %1434 = vmatpush2.bf16.msra.mxu0 0
    %1435 = vmatprep.mubr.bf16.mxu0 0
    %1436 = vmatmul.mubr.bf16.gmra.mxu0 %v1398
    %v1437 = vpop.f32.mrf.mxu0
    %v1438 = vadd.f32 0.0, %v1437
    %v1439 = vpop.f32.mrf.mxu0
    %v1440 = vpop.f32.mrf.mxu0
    %v1441 = vpop.f32.mrf.mxu0
    %1442 = vdwg.mxu0
    %1445 = vrot.lane.b32.xlu0 %v942, 8
    %v1446 = vpop.permute.xlu0 %1445
    %1447 = vrot.lane.b32.xlu0 %v990, 8
    %v1448 = vpop.permute.xlu0 %1447
    %1453 = vrot.lane.b32.xlu0 %v1166, 16
    %v1454 = vpop.permute.xlu0 %1453
    %1455 = vrot.lane.b32.xlu0 %v1214, 16
    %v1456 = vpop.permute.xlu0 %1455
    %1461 = vrot.lane.b32.xlu0 %v1390, 24
    %v1462 = vpop.permute.xlu0 %1461
    %1463 = vrot.lane.b32.xlu0 %v1438, 24
    %v1464 = vpop.permute.xlu0 %1463
    %v1467 = vsel %vm544, %v718, %v1446
    %v1468 = vsel %vm544, %v766, %v1448
    %v1469 = vsel %vm345, %v1467, %v1454
    %v1470 = vsel %vm345, %v1468, %v1456
    %vm1471 = vcmask 195584
    %v1472 = vsel %vm1471, %v1469, %v1462
    %v1473 = vsel %vm1471, %v1470, %v1464
    %v1474 = vld [vmem:[#allocation19] sm:$0xf]
    %v1475 = vld [vmem:[#allocation19 + $0x4] sm:$0xf]
    %v1476 = vld [vmem:[#allocation19 + $0x8] sm:$0xf]
    %v1477 = vld [vmem:[#allocation19 + $0xc] sm:$0xf]
    %v1478 = vpack.c.bf16 %v1473, %v1472
    %v1483 = vunpack.c.l.b16 %v1474
    %v1484 = vunpack.c.l.b16 %v1475
    %v1485 = vunpack.c.l.b16 %v1476
    %v1486 = vunpack.c.l.b16 %v1477
    %v1487 = vpack.c.b16 %v1484, %v1483
    %v1488 = vpack.c.b16 %v1486, %v1485
    %v1492 = vsel %vm412, %v1478, 0
    %1494 = vmatprep.subr.bf16.mxu0 0
    %1495 = vmatpush1.bf16.msra.mxu0 0
    %1496 = vmatprep.subr.bf16.mxu0 0
    %1497 = vmatpush1.bf16.msra.mxu0 0
    %1498 = vmatprep.subr.bf16.mxu0 0
    %1499 = vmatpush1.bf16.msra.mxu0 0
    %1500 = vmatprep.subr.bf16.mxu0 0
    %1501 = vmatpush1.bf16.msra.mxu0 0
    %1502 = vmatprep.subr.bf16.mxu0 0
    %1503 = vmatpush1.bf16.msra.mxu0 0
    %1504 = vmatprep.subr.bf16.mxu0 0
    %1505 = vmatpush1.bf16.msra.mxu0 0
    %1506 = vmatprep.subr.bf16.mxu0 0
    %1507 = vmatpush1.bf16.msra.mxu0 %v1488
    %1508 = vmatprep.subr.bf16.mxu0 0
    %1509 = vmatpush1.bf16.msra.mxu0 %v1487
    %1510 = vmatprep.subr.bf16.mxu0 0
    %1511 = vmatpush2.bf16.msra.mxu0 0
    %1512 = vmatprep.subr.bf16.mxu0 0
    %1513 = vmatpush2.bf16.msra.mxu0 0
    %1514 = vmatprep.subr.bf16.mxu0 0
    %1515 = vmatpush2.bf16.msra.mxu0 0
    %1516 = vmatprep.subr.bf16.mxu0 0
    %1517 = vmatpush2.bf16.msra.mxu0 0
    %1518 = vmatprep.subr.bf16.mxu0 0
    %1519 = vmatpush2.bf16.msra.mxu0 0
    %1520 = vmatprep.subr.bf16.mxu0 0
    %1521 = vmatpush2.bf16.msra.mxu0 0
    %1522 = vmatprep.subr.bf16.mxu0 0
    %1523 = vmatpush2.bf16.msra.mxu0 0
    %1524 = vmatprep.subr.bf16.mxu0 0
    %1525 = vmatpush2.bf16.msra.mxu0 0
    %1526 = vmatprep.mubr.bf16.mxu0 0
    %1527 = vmatmul.mubr.bf16.gmra.mxu0 %v1492
    %v1528 = vpop.f32.mrf.mxu0
    %v1529 = vadd.f32 0.0, %v1528
    %v1530 = vpop.f32.mrf.mxu0
    %v1531 = vpop.f32.mrf.mxu0
    %v1532 = vadd.f32 0.0, %v1531
    %v1533 = vpop.f32.mrf.mxu0
    %1534 = vdwg.mxu0
    %v1535 = vadd.f32 %v393, %v1529
    %v1536 = vadd.f32 %v394, %v1532
    %v1537 = vld [vmem:[#allocation20] sm:$0x1]
    %v1539 = vlaneseq
    %v1540 = vshrl.u32 %v1539, 7
    %v1541 = vsub.s32 0, %v1540
    %v1542 = vrot.slane %v1537, %v1541
    %v1544 = vadd.f32 %v1535, %v1542
    %v1545 = vadd.f32 %v1536, %v1542
    %v1546 = vld [vmem:[#allocation22] sm:$0x1]
    %v1547 = vld [vmem:[#allocation23] sm:$0x1]
    %v1548 = vsel %vm412, %v1544, 0.0
    %1549 = vadd.xlane.f32.xlu0 %v1548
    %v1550 = vpop.xlane.xlu0 %1549
    %v1551 = vsel %vm412, %v1545, 0.0
    %1552 = vadd.xlane.f32.xlu0 %v1551
    %v1553 = vpop.xlane.xlu0 %1552
    %v1554 = vmul.f32 %v1550, %v419
    %v1555 = vmul.f32 %v1553, %v419
    %v1556 = vsub.f32 %v1544, %v1554
    %v1557 = vsub.f32 %v1545, %v1555
    %v1558 = vmul.f32 %v1556, %v1556
    %v1559 = vmul.f32 %v1557, %v1557
    %v1560 = vsel %vm412, %v1558, 0.0
    %1561 = vadd.xlane.f32.xlu0 %v1560
    %v1562 = vpop.xlane.xlu0 %1561
    %v1563 = vsel %vm412, %v1559, 0.0
    %1564 = vadd.xlane.f32.xlu0 %v1563
    %v1565 = vpop.xlane.xlu0 %1564
    %v1566 = vmul.f32 %v1562, %v432
    %v1567 = vmul.f32 %v1565, %v432
    %v1569 = vlaneseq
    %v1570 = vshrl.u32 %v1569, 7
    %v1571 = vsub.s32 0, %v1570
    %v1572 = vrot.slane %v1546, %v1571
    %v1574 = vmul.f32 %v1572, %v1556
    %v1575 = vmul.f32 %v1572, %v1557
    %v1576 = vrsqrt.pop %v1566
    %v1577 = vmul.f32 %v1566, %v1576
    %vm1578 = vcmp.eq.f32.partialorder %v1566, inf
    %v1579 = vsel %vm1578, %v1566, %v1577
    %vm1580 = vcmp.eq.f32.partialorder %v1566, 0.0
    %v1581 = vand.u32 %v1566, 2147483648
    %v1582 = vsel %vm1580, %v1581, %v1579
    %v1583 = vrsqrt.pop %v1567
    %v1584 = vmul.f32 %v1567, %v1583
    %vm1585 = vcmp.eq.f32.partialorder %v1567, inf
    %v1586 = vsel %vm1585, %v1567, %v1584
    %vm1587 = vcmp.eq.f32.partialorder %v1567, 0.0
    %v1588 = vand.u32 %v1567, 2147483648
    %v1589 = vsel %vm1587, %v1588, %v1586
    %v1590 = vadd.f32 %v1582, 1e-06
    %v1591 = vadd.f32 %v1589, 1e-06
    %v1592 = vrcp.pop %v1590
    %v1593 = vmul.f32 %v1574, %v1592
    %v1594 = vrcp.pop %v1591
    %v1595 = vmul.f32 %v1575, %v1594
    %v1597 = vlaneseq
    %v1598 = vshrl.u32 %v1597, 7
    %v1599 = vsub.s32 0, %v1598
    %v1600 = vrot.slane %v1547, %v1599
    %v1602 = vadd.f32 %v1593, %v1600
    %v1603 = vadd.f32 %v1595, %v1600
    %v1604 = vld [vmem:[#allocation25] sm:$0xf]
    %v1605 = vld [vmem:[#allocation25 + $0x4] sm:$0xf]
    %v1606 = vld [vmem:[#allocation25 + $0x8] sm:$0xf]
    %v1607 = vld [vmem:[#allocation25 + $0xc] sm:$0xf]
    %v1608 = vpack.c.bf16 %v1603, %v1602
    %v1609 = vld [vmem:[#allocation26] sm:$0x1]
    %v1611 = vlaneseq
    %v1612 = vshrl.u32 %v1611, 7
    %v1613 = vsub.s32 0, %v1612
    %v1614 = vrot.slane %v1609, %v1613
    %v1620 = vunpack.c.l.b16 %v1604
    %v1621 = vunpack.c.l.b16 %v1605
    %v1622 = vunpack.c.l.b16 %v1606
    %v1623 = vunpack.c.l.b16 %v1607
    %v1624 = vpack.c.b16 %v1621, %v1620
    %v1625 = vpack.c.b16 %v1623, %v1622
    %v1629 = vsel %vm412, %v1608, 0
    %1631 = vmatprep.subr.bf16.mxu0 0
    %1632 = vmatpush1.bf16.msra.mxu0 0
    %1633 = vmatprep.subr.bf16.mxu0 0
    %1634 = vmatpush1.bf16.msra.mxu0 0
    %1635 = vmatprep.subr.bf16.mxu0 0
    %1636 = vmatpush1.bf16.msra.mxu0 0
    %1637 = vmatprep.subr.bf16.mxu0 0
    %1638 = vmatpush1.bf16.msra.mxu0 0
    %1639 = vmatprep.subr.bf16.mxu0 0
    %1640 = vmatpush1.bf16.msra.mxu0 0
    %1641 = vmatprep.subr.bf16.mxu0 0
    %1642 = vmatpush1.bf16.msra.mxu0 0
    %1643 = vmatprep.subr.bf16.mxu0 0
    %1644 = vmatpush1.bf16.msra.mxu0 %v1625
    %1645 = vmatprep.subr.bf16.mxu0 0
    %1646 = vmatpush1.bf16.msra.mxu0 %v1624
    %1647 = vmatprep.subr.bf16.mxu0 0
    %1648 = vmatpush2.bf16.msra.mxu0 0
    %1649 = vmatprep.subr.bf16.mxu0 0
    %1650 = vmatpush2.bf16.msra.mxu0 0
    %1651 = vmatprep.subr.bf16.mxu0 0
    %1652 = vmatpush2.bf16.msra.mxu0 0
    %1653 = vmatprep.subr.bf16.mxu0 0
    %1654 = vmatpush2.bf16.msra.mxu0 0
    %1655 = vmatprep.subr.bf16.mxu0 0
    %1656 = vmatpush2.bf16.msra.mxu0 0
    %1657 = vmatprep.subr.bf16.mxu0 0
    %1658 = vmatpush2.bf16.msra.mxu0 0
    %1659 = vmatprep.subr.bf16.mxu0 0
    %1660 = vmatpush2.bf16.msra.mxu0 0
    %1661 = vmatprep.subr.bf16.mxu0 0
    %1662 = vmatpush2.bf16.msra.mxu0 0
    %1663 = vmatprep.mubr.bf16.mxu0 0
    %1664 = vmatmul.mubr.bf16.gmra.mxu0 %v1629
    %v1665 = vpop.f32.mrf.mxu0
    %v1666 = vadd.f32 %v1614, %v1665
    %v1667 = vpop.f32.mrf.mxu0
    %v1668 = vpop.f32.mrf.mxu0
    %v1669 = vadd.f32 %v1614, %v1668
    %v1670 = vpop.f32.mrf.mxu0
    %1671 = vdwg.mxu0
    %v1672 = vmax.f32 %v1666, 0.0
    %v1673 = vmax.f32 %v1669, 0.0
    %v1674 = vld [vmem:[#allocation28] sm:$0xf]
    %v1675 = vld [vmem:[#allocation28 + $0x4] sm:$0xf]
    %v1676 = vld [vmem:[#allocation28 + $0x8] sm:$0xf]
    %v1677 = vld [vmem:[#allocation28 + $0xc] sm:$0xf]
    %v1678 = vpack.c.bf16 %v1673, %v1672
    %v1683 = vunpack.c.l.b16 %v1674
    %v1684 = vunpack.c.l.b16 %v1675
    %v1685 = vunpack.c.l.b16 %v1676
    %v1686 = vunpack.c.l.b16 %v1677
    %v1687 = vpack.c.b16 %v1684, %v1683
    %v1688 = vpack.c.b16 %v1686, %v1685
    %v1692 = vsel %vm412, %v1678, 0
    %1694 = vmatprep.subr.bf16.mxu0 0
    %1695 = vmatpush1.bf16.msra.mxu0 0
    %1696 = vmatprep.subr.bf16.mxu0 0
    %1697 = vmatpush1.bf16.msra.mxu0 0
    %1698 = vmatprep.subr.bf16.mxu0 0
    %1699 = vmatpush1.bf16.msra.mxu0 0
    %1700 = vmatprep.subr.bf16.mxu0 0
    %1701 = vmatpush1.bf16.msra.mxu0 0
    %1702 = vmatprep.subr.bf16.mxu0 0
    %1703 = vmatpush1.bf16.msra.mxu0 0
    %1704 = vmatprep.subr.bf16.mxu0 0
    %1705 = vmatpush1.bf16.msra.mxu0 0
    %1706 = vmatprep.subr.bf16.mxu0 0
    %1707 = vmatpush1.bf16.msra.mxu0 %v1688
    %1708 = vmatprep.subr.bf16.mxu0 0
    %1709 = vmatpush1.bf16.msra.mxu0 %v1687
    %1710 = vmatprep.subr.bf16.mxu0 0
    %1711 = vmatpush2.bf16.msra.mxu0 0
    %1712 = vmatprep.subr.bf16.mxu0 0
    %1713 = vmatpush2.bf16.msra.mxu0 0
    %1714 = vmatprep.subr.bf16.mxu0 0
    %1715 = vmatpush2.bf16.msra.mxu0 0
    %1716 = vmatprep.subr.bf16.mxu0 0
    %1717 = vmatpush2.bf16.msra.mxu0 0
    %1718 = vmatprep.subr.bf16.mxu0 0
    %1719 = vmatpush2.bf16.msra.mxu0 0
    %1720 = vmatprep.subr.bf16.mxu0 0
    %1721 = vmatpush2.bf16.msra.mxu0 0
    %1722 = vmatprep.subr.bf16.mxu0 0
    %1723 = vmatpush2.bf16.msra.mxu0 0
    %1724 = vmatprep.subr.bf16.mxu0 0
    %1725 = vmatpush2.bf16.msra.mxu0 0
    %1726 = vmatprep.mubr.bf16.mxu0 0
    %1727 = vmatmul.mubr.bf16.gmra.mxu0 %v1692
    %v1728 = vpop.f32.mrf.mxu0
    %v1729 = vadd.f32 0.0, %v1728
    %v1730 = vpop.f32.mrf.mxu0
    %v1731 = vpop.f32.mrf.mxu0
    %v1732 = vadd.f32 0.0, %v1731
    %v1733 = vpop.f32.mrf.mxu0
    %1734 = vdwg.mxu0
    %v1735 = vadd.f32 %v1544, %v1729
    %v1736 = vadd.f32 %v1545, %v1732
    %v1737 = vld [vmem:[#allocation29] sm:$0x1]
    %v1739 = vlaneseq
    %v1740 = vshrl.u32 %v1739, 7
    %v1741 = vsub.s32 0, %v1740
    %v1742 = vrot.slane %v1737, %v1741
    %v1744 = vadd.f32 %v1735, %v1742
    %v1745 = vadd.f32 %v1736, %v1742
    %s1746 = scalar_lea.vmem [#allocation14], 1
    %v1747 = vld [vmem:[%s1746] sm:$0x1]
    %s1748 = scalar_lea.vmem [#allocation16], 1
    %v1749 = vld [vmem:[%s1748] sm:$0x1]
    %v1750 = vsel %vm412, %v1744, 0.0
    %1751 = vadd.xlane.f32.xlu0 %v1750
    %v1752 = vpop.xlane.xlu0 %1751
    %v1753 = vsel %vm412, %v1745, 0.0
    %1754 = vadd.xlane.f32.xlu0 %v1753
    %v1755 = vpop.xlane.xlu0 %1754
    %v1756 = vmul.f32 %v1752, %v419
    %v1757 = vmul.f32 %v1755, %v419
    %v1758 = vsub.f32 %v1744, %v1756
    %v1759 = vsub.f32 %v1745, %v1757
    %v1760 = vmul.f32 %v1758, %v1758
    %v1761 = vmul.f32 %v1759, %v1759
    %v1762 = vsel %vm412, %v1760, 0.0
    %1763 = vadd.xlane.f32.xlu0 %v1762
    %v1764 = vpop.xlane.xlu0 %1763
    %v1765 = vsel %vm412, %v1761, 0.0
    %1766 = vadd.xlane.f32.xlu0 %v1765
    %v1767 = vpop.xlane.xlu0 %1766
    %v1768 = vmul.f32 %v1764, %v432
    %v1769 = vmul.f32 %v1767, %v432
    %v1771 = vlaneseq
    %v1772 = vshrl.u32 %v1771, 7
    %v1773 = vsub.s32 0, %v1772
    %v1774 = vrot.slane %v1747, %v1773
    %v1776 = vmul.f32 %v1774, %v1758
    %v1777 = vmul.f32 %v1774, %v1759
    %v1778 = vrsqrt.pop %v1768
    %v1779 = vmul.f32 %v1768, %v1778
    %vm1780 = vcmp.eq.f32.partialorder %v1768, inf
    %v1781 = vsel %vm1780, %v1768, %v1779
    %vm1782 = vcmp.eq.f32.partialorder %v1768, 0.0
    %v1783 = vand.u32 %v1768, 2147483648
    %v1784 = vsel %vm1782, %v1783, %v1781
    %v1785 = vrsqrt.pop %v1769
    %v1786 = vmul.f32 %v1769, %v1785
    %vm1787 = vcmp.eq.f32.partialorder %v1769, inf
    %v1788 = vsel %vm1787, %v1769, %v1786
    %vm1789 = vcmp.eq.f32.partialorder %v1769, 0.0
    %v1790 = vand.u32 %v1769, 2147483648
    %v1791 = vsel %vm1789, %v1790, %v1788
    %v1792 = vadd.f32 %v1784, 1e-06
    %v1793 = vadd.f32 %v1791, 1e-06
    %v1794 = vrcp.pop %v1792
    %v1795 = vmul.f32 %v1776, %v1794
    %v1796 = vrcp.pop %v1793
    %v1797 = vmul.f32 %v1777, %v1796
    %v1799 = vlaneseq
    %v1800 = vshrl.u32 %v1799, 7
    %v1801 = vsub.s32 0, %v1800
    %v1802 = vrot.slane %v1749, %v1801
    %v1804 = vadd.f32 %v1795, %v1802
    %v1805 = vadd.f32 %v1797, %v1802
    %s1806 = scalar_lea.vmem %s8, 16
    %v1807 = vld [vmem:[%s1806] sm:$0xf]
    %v1808 = vld [vmem:[%s1806 + $0x4] sm:$0xf]
    %v1809 = vld [vmem:[%s1806 + $0x8] sm:$0xf]
    %v1810 = vld [vmem:[%s1806 + $0xc] sm:$0xf]
    %v1811 = vpack.c.bf16 %v1805, %v1804
    %s1812 = scalar_lea.vmem [#allocation17], 1
    %v1813 = vld [vmem:[%s1812] sm:$0x1]
    %v1815 = vlaneseq
    %v1816 = vshrl.u32 %v1815, 7
    %v1817 = vsub.s32 0, %v1816
    %v1818 = vrot.slane %v1813, %v1817
    %v1824 = vunpack.c.l.b16 %v1807
    %v1825 = vunpack.c.l.b16 %v1808
    %v1826 = vunpack.c.l.b16 %v1809
    %v1827 = vunpack.c.l.b16 %v1810
    %v1828 = vpack.c.b16 %v1825, %v1824
    %v1829 = vpack.c.b16 %v1827, %v1826
    %v1833 = vsel %vm412, %v1811, 0
    %1835 = vmatprep.subr.bf16.mxu0 0
    %1836 = vmatpush1.bf16.msra.mxu0 0
    %1837 = vmatprep.subr.bf16.mxu0 0
    %1838 = vmatpush1.bf16.msra.mxu0 0
    %1839 = vmatprep.subr.bf16.mxu0 0
    %1840 = vmatpush1.bf16.msra.mxu0 0
    %1841 = vmatprep.subr.bf16.mxu0 0
    %1842 = vmatpush1.bf16.msra.mxu0 0
    %1843 = vmatprep.subr.bf16.mxu0 0
    %1844 = vmatpush1.bf16.msra.mxu0 0
    %1845 = vmatprep.subr.bf16.mxu0 0
    %1846 = vmatpush1.bf16.msra.mxu0 0
    %1847 = vmatprep.subr.bf16.mxu0 0
    %1848 = vmatpush1.bf16.msra.mxu0 %v1829
    %1849 = vmatprep.subr.bf16.mxu0 0
    %1850 = vmatpush1.bf16.msra.mxu0 %v1828
    %1851 = vmatprep.subr.bf16.mxu0 0
    %1852 = vmatpush2.bf16.msra.mxu0 0
    %1853 = vmatprep.subr.bf16.mxu0 0
    %1854 = vmatpush2.bf16.msra.mxu0 0
    %1855 = vmatprep.subr.bf16.mxu0 0
    %1856 = vmatpush2.bf16.msra.mxu0 0
    %1857 = vmatprep.subr.bf16.mxu0 0
    %1858 = vmatpush2.bf16.msra.mxu0 0
    %1859 = vmatprep.subr.bf16.mxu0 0
    %1860 = vmatpush2.bf16.msra.mxu0 0
    %1861 = vmatprep.subr.bf16.mxu0 0
    %1862 = vmatpush2.bf16.msra.mxu0 0
    %1863 = vmatprep.subr.bf16.mxu0 0
    %1864 = vmatpush2.bf16.msra.mxu0 0
    %1865 = vmatprep.subr.bf16.mxu0 0
    %1866 = vmatpush2.bf16.msra.mxu0 0
    %1867 = vmatprep.mubr.bf16.mxu0 0
    %1868 = vmatmul.mubr.bf16.gmra.mxu0 %v1833
    %v1869 = vpop.f32.mrf.mxu0
    %v1870 = vadd.f32 %v1818, %v1869
    %v1871 = vpop.f32.mrf.mxu0
    %v1872 = vpop.f32.mrf.mxu0
    %v1873 = vadd.f32 %v1818, %v1872
    %v1874 = vpop.f32.mrf.mxu0
    %1875 = vdwg.mxu0
    %v1876 = vpack.c.bf16 %v1870, %v1870
    %v1877 = vpack.c.bf16 %v1873, %v1873
    %1879 = vrot.lane.b32.xlu0 %v1876, 96
    %v1880 = vpop.permute.xlu0 %1879
    %v1882 = vsel %vm544, %v1876, 0
    %v1885 = vsel %vm544, %v1880, 0
    %1887 = vmatprep.subr.bf16.mxu0 0
    %1888 = vmatpush1.bf16.xpose.msra.mxu0 0
    %1889 = vmatprep.subr.bf16.mxu0 0
    %1890 = vmatpush1.bf16.xpose.msra.mxu0 0
    %1891 = vmatprep.subr.bf16.mxu0 0
    %1892 = vmatpush1.bf16.xpose.msra.mxu0 0
    %1893 = vmatprep.subr.bf16.mxu0 0
    %1894 = vmatpush1.bf16.xpose.msra.mxu0 0
    %1895 = vmatprep.subr.bf16.mxu0 0
    %1896 = vmatpush1.bf16.xpose.msra.mxu0 0
    %1897 = vmatprep.subr.bf16.mxu0 0
    %1898 = vmatpush1.bf16.xpose.msra.mxu0 0
    %1899 = vmatprep.subr.bf16.mxu0 0
    %1900 = vmatpush1.bf16.xpose.msra.mxu0 0
    %1901 = vmatprep.subr.bf16.mxu0 0
    %1902 = vmatpush1.bf16.xpose.msra.mxu0 %v1885
    %1903 = vmatprep.subr.bf16.mxu0 0
    %1904 = vmatpush2.bf16.xpose.msra.mxu0 0
    %1905 = vmatprep.subr.bf16.mxu0 0
    %1906 = vmatpush2.bf16.xpose.msra.mxu0 0
    %1907 = vmatprep.subr.bf16.mxu0 0
    %1908 = vmatpush2.bf16.xpose.msra.mxu0 0
    %1909 = vmatprep.subr.bf16.mxu0 0
    %1910 = vmatpush2.bf16.xpose.msra.mxu0 0
    %1911 = vmatprep.subr.bf16.mxu0 0
    %1912 = vmatpush2.bf16.xpose.msra.mxu0 0
    %1913 = vmatprep.subr.bf16.mxu0 0
    %1914 = vmatpush2.bf16.xpose.msra.mxu0 0
    %1915 = vmatprep.subr.bf16.mxu0 0
    %1916 = vmatpush2.bf16.xpose.msra.mxu0 0
    %1917 = vmatprep.subr.bf16.mxu0 0
    %1918 = vmatpush2.bf16.xpose.msra.mxu0 0
    %1919 = vmatprep.mubr.bf16.mxu0 0
    %1920 = vmatmul.mubr.bf16.gmra.mxu0 %v1882
    %v1921 = vpop.f32.mrf.mxu0
    %v1922 = vadd.f32 0.0, %v1921
    %v1923 = vpop.f32.mrf.mxu0
    %v1924 = vpop.f32.mrf.mxu0
    %v1925 = vpop.f32.mrf.mxu0
    %1926 = vdwg.mxu0
    %1928 = vrot.lane.b32.xlu0 %v1877, 96
    %v1929 = vpop.permute.xlu0 %1928
    %v1931 = vsel %vm544, %v1877, 0
    %v1934 = vsel %vm544, %v1929, 0
    %1936 = vmatprep.subr.bf16.mxu0 0
    %1937 = vmatpush1.bf16.xpose.msra.mxu0 0
    %1938 = vmatprep.subr.bf16.mxu0 0
    %1939 = vmatpush1.bf16.xpose.msra.mxu0 0
    %1940 = vmatprep.subr.bf16.mxu0 0
    %1941 = vmatpush1.bf16.xpose.msra.mxu0 0
    %1942 = vmatprep.subr.bf16.mxu0 0
    %1943 = vmatpush1.bf16.xpose.msra.mxu0 0
    %1944 = vmatprep.subr.bf16.mxu0 0
    %1945 = vmatpush1.bf16.xpose.msra.mxu0 0
    %1946 = vmatprep.subr.bf16.mxu0 0
    %1947 = vmatpush1.bf16.xpose.msra.mxu0 0
    %1948 = vmatprep.subr.bf16.mxu0 0
    %1949 = vmatpush1.bf16.xpose.msra.mxu0 0
    %1950 = vmatprep.subr.bf16.mxu0 0
    %1951 = vmatpush1.bf16.xpose.msra.mxu0 %v1934
    %1952 = vmatprep.subr.bf16.mxu0 0
    %1953 = vmatpush2.bf16.xpose.msra.mxu0 0
    %1954 = vmatprep.subr.bf16.mxu0 0
    %1955 = vmatpush2.bf16.xpose.msra.mxu0 0
    %1956 = vmatprep.subr.bf16.mxu0 0
    %1957 = vmatpush2.bf16.xpose.msra.mxu0 0
    %1958 = vmatprep.subr.bf16.mxu0 0
    %1959 = vmatpush2.bf16.xpose.msra.mxu0 0
    %1960 = vmatprep.subr.bf16.mxu0 0
    %1961 = vmatpush2.bf16.xpose.msra.mxu0 0
    %1962 = vmatprep.subr.bf16.mxu0 0
    %1963 = vmatpush2.bf16.xpose.msra.mxu0 0
    %1964 = vmatprep.subr.bf16.mxu0 0
    %1965 = vmatpush2.bf16.xpose.msra.mxu0 0
    %1966 = vmatprep.subr.bf16.mxu0 0
    %1967 = vmatpush2.bf16.xpose.msra.mxu0 0
    %1968 = vmatprep.mubr.bf16.mxu0 0
    %1969 = vmatmul.mubr.bf16.gmra.mxu0 %v1931
    %v1970 = vpop.f32.mrf.mxu0
    %v1971 = vadd.f32 0.0, %v1970
    %v1972 = vpop.f32.mrf.mxu0
    %v1973 = vpop.f32.mrf.mxu0
    %v1974 = vpop.f32.mrf.mxu0
    %1975 = vdwg.mxu0
    %v1976 = vmul.f32 %v1922, 0.35355338
    %v1977 = vmul.f32 %v1971, 0.35355338
    %v1978 = vsel %vm646, -1e+09, %v1976
    %v1979 = vsel %vm647, -1e+09, %v1977
    %v1980 = vsel %vm544, %v1978, -inf
    %1981 = vmax.xlane.f32.xlu0 %v1980
    %v1982 = vpop.xlane.xlu0 %1981
    %v1983 = vsel %vm544, %v1979, -inf
    %1984 = vmax.xlane.f32.xlu0 %v1983
    %v1985 = vpop.xlane.xlu0 %1984
    %v1986 = vsub.f32 %v1978, %v1982
    %v1987 = vsub.f32 %v1979, %v1985
    %v1988 = vmul.f32 %v1986, 1.442695
    %v1989 = vpow.pop %v1988
    %v1990 = vmul.f32 %v1987, 1.442695
    %v1991 = vpow.pop %v1990
    %v1992 = vsel %vm544, %v1989, 0.0
    %1993 = vadd.xlane.f32.xlu0 %v1992
    %v1994 = vpop.xlane.xlu0 %1993
    %v1995 = vsel %vm544, %v1991, 0.0
    %1996 = vadd.xlane.f32.xlu0 %v1995
    %v1997 = vpop.xlane.xlu0 %1996
    %v1998 = vrcp.pop %v1994
    %v1999 = vrcp.pop %v1997
    %v2000 = vmul.f32 %v1989, %v1998
    %v2001 = vmul.f32 %v1991, %v1999
    %v2002 = vpack.c.bf16 %v2000, %v2000
    %v2003 = vpack.c.bf16 %v2001, %v2001
    %2004 = vrot.lane.b32.xlu0 %v1876, 64
    %v2005 = vpop.permute.xlu0 %2004
    %v2007 = vsel %vm544, %v2002, 0
    %v2010 = vsel %vm679, %v2005, 0
    %2012 = vmatprep.subr.bf16.mxu0 0
    %2013 = vmatpush1.bf16.msra.mxu0 0
    %2014 = vmatprep.subr.bf16.mxu0 0
    %2015 = vmatpush1.bf16.msra.mxu0 0
    %2016 = vmatprep.subr.bf16.mxu0 0
    %2017 = vmatpush1.bf16.msra.mxu0 0
    %2018 = vmatprep.subr.bf16.mxu0 0
    %2019 = vmatpush1.bf16.msra.mxu0 0
    %2020 = vmatprep.subr.bf16.mxu0 0
    %2021 = vmatpush1.bf16.msra.mxu0 0
    %2022 = vmatprep.subr.bf16.mxu0 0
    %2023 = vmatpush1.bf16.msra.mxu0 0
    %2024 = vmatprep.subr.bf16.mxu0 0
    %2025 = vmatpush1.bf16.msra.mxu0 0
    %2026 = vmatprep.subr.bf16.mxu0 0
    %2027 = vmatpush1.bf16.msra.mxu0 %v2010
    %2028 = vmatprep.subr.bf16.mxu0 0
    %2029 = vmatpush2.bf16.msra.mxu0 0
    %2030 = vmatprep.subr.bf16.mxu0 0
    %2031 = vmatpush2.bf16.msra.mxu0 0
    %2032 = vmatprep.subr.bf16.mxu0 0
    %2033 = vmatpush2.bf16.msra.mxu0 0
    %2034 = vmatprep.subr.bf16.mxu0 0
    %2035 = vmatpush2.bf16.msra.mxu0 0
    %2036 = vmatprep.subr.bf16.mxu0 0
    %2037 = vmatpush2.bf16.msra.mxu0 0
    %2038 = vmatprep.subr.bf16.mxu0 0
    %2039 = vmatpush2.bf16.msra.mxu0 0
    %2040 = vmatprep.subr.bf16.mxu0 0
    %2041 = vmatpush2.bf16.msra.mxu0 0
    %2042 = vmatprep.subr.bf16.mxu0 0
    %2043 = vmatpush2.bf16.msra.mxu0 0
    %2044 = vmatprep.mubr.bf16.mxu0 0
    %2045 = vmatmul.mubr.bf16.gmra.mxu0 %v2007
    %v2046 = vpop.f32.mrf.mxu0
    %v2047 = vadd.f32 0.0, %v2046
    %v2048 = vpop.f32.mrf.mxu0
    %v2049 = vpop.f32.mrf.mxu0
    %v2050 = vpop.f32.mrf.mxu0
    %2051 = vdwg.mxu0
    %2052 = vrot.lane.b32.xlu0 %v1877, 64
    %v2053 = vpop.permute.xlu0 %2052
    %v2055 = vsel %vm544, %v2003, 0
    %v2058 = vsel %vm679, %v2053, 0
    %2060 = vmatprep.subr.bf16.mxu0 0
    %2061 = vmatpush1.bf16.msra.mxu0 0
    %2062 = vmatprep.subr.bf16.mxu0 0
    %2063 = vmatpush1.bf16.msra.mxu0 0
    %2064 = vmatprep.subr.bf16.mxu0 0
    %2065 = vmatpush1.bf16.msra.mxu0 0
    %2066 = vmatprep.subr.bf16.mxu0 0
    %2067 = vmatpush1.bf16.msra.mxu0 0
    %2068 = vmatprep.subr.bf16.mxu0 0
    %2069 = vmatpush1.bf16.msra.mxu0 0
    %2070 = vmatprep.subr.bf16.mxu0 0
    %2071 = vmatpush1.bf16.msra.mxu0 0
    %2072 = vmatprep.subr.bf16.mxu0 0
    %2073 = vmatpush1.bf16.msra.mxu0 0
    %2074 = vmatprep.subr.bf16.mxu0 0
    %2075 = vmatpush1.bf16.msra.mxu0 %v2058
    %2076 = vmatprep.subr.bf16.mxu0 0
    %2077 = vmatpush2.bf16.msra.mxu0 0
    %2078 = vmatprep.subr.bf16.mxu0 0
    %2079 = vmatpush2.bf16.msra.mxu0 0
    %2080 = vmatprep.subr.bf16.mxu0 0
    %2081 = vmatpush2.bf16.msra.mxu0 0
    %2082 = vmatprep.subr.bf16.mxu0 0
    %2083 = vmatpush2.bf16.msra.mxu0 0
    %2084 = vmatprep.subr.bf16.mxu0 0
    %2085 = vmatpush2.bf16.msra.mxu0 0
    %2086 = vmatprep.subr.bf16.mxu0 0
    %2087 = vmatpush2.bf16.msra.mxu0 0
    %2088 = vmatprep.subr.bf16.mxu0 0
    %2089 = vmatpush2.bf16.msra.mxu0 0
    %2090 = vmatprep.subr.bf16.mxu0 0
    %2091 = vmatpush2.bf16.msra.mxu0 0
    %2092 = vmatprep.mubr.bf16.mxu0 0
    %2093 = vmatmul.mubr.bf16.gmra.mxu0 %v2055
    %v2094 = vpop.f32.mrf.mxu0
    %v2095 = vadd.f32 0.0, %v2094
    %v2096 = vpop.f32.mrf.mxu0
    %v2097 = vpop.f32.mrf.mxu0
    %v2098 = vpop.f32.mrf.mxu0
    %2099 = vdwg.mxu0
    %2100 = vrot.lane.b32.xlu0 %v1876, 120
    %v2101 = vpop.permute.xlu0 %2100
    %2102 = vrot.lane.b32.xlu0 %v1876, 88
    %v2103 = vpop.permute.xlu0 %2102
    %v2105 = vsel %vm544, %v2101, 0
    %v2108 = vsel %vm544, %v2103, 0
    %2110 = vmatprep.subr.bf16.mxu0 0
    %2111 = vmatpush1.bf16.xpose.msra.mxu0 0
    %2112 = vmatprep.subr.bf16.mxu0 0
    %2113 = vmatpush1.bf16.xpose.msra.mxu0 0
    %2114 = vmatprep.subr.bf16.mxu0 0
    %2115 = vmatpush1.bf16.xpose.msra.mxu0 0
    %2116 = vmatprep.subr.bf16.mxu0 0
    %2117 = vmatpush1.bf16.xpose.msra.mxu0 0
    %2118 = vmatprep.subr.bf16.mxu0 0
    %2119 = vmatpush1.bf16.xpose.msra.mxu0 0
    %2120 = vmatprep.subr.bf16.mxu0 0
    %2121 = vmatpush1.bf16.xpose.msra.mxu0 0
    %2122 = vmatprep.subr.bf16.mxu0 0
    %2123 = vmatpush1.bf16.xpose.msra.mxu0 0
    %2124 = vmatprep.subr.bf16.mxu0 0
    %2125 = vmatpush1.bf16.xpose.msra.mxu0 %v2108
    %2126 = vmatprep.subr.bf16.mxu0 0
    %2127 = vmatpush2.bf16.xpose.msra.mxu0 0
    %2128 = vmatprep.subr.bf16.mxu0 0
    %2129 = vmatpush2.bf16.xpose.msra.mxu0 0
    %2130 = vmatprep.subr.bf16.mxu0 0
    %2131 = vmatpush2.bf16.xpose.msra.mxu0 0
    %2132 = vmatprep.subr.bf16.mxu0 0
    %2133 = vmatpush2.bf16.xpose.msra.mxu0 0
    %2134 = vmatprep.subr.bf16.mxu0 0
    %2135 = vmatpush2.bf16.xpose.msra.mxu0 0
    %2136 = vmatprep.subr.bf16.mxu0 0
    %2137 = vmatpush2.bf16.xpose.msra.mxu0 0
    %2138 = vmatprep.subr.bf16.mxu0 0
    %2139 = vmatpush2.bf16.xpose.msra.mxu0 0
    %2140 = vmatprep.subr.bf16.mxu0 0
    %2141 = vmatpush2.bf16.xpose.msra.mxu0 0
    %2142 = vmatprep.mubr.bf16.mxu0 0
    %2143 = vmatmul.mubr.bf16.gmra.mxu0 %v2105
    %v2144 = vpop.f32.mrf.mxu0
    %v2145 = vadd.f32 0.0, %v2144
    %v2146 = vpop.f32.mrf.mxu0
    %v2147 = vpop.f32.mrf.mxu0
    %v2148 = vpop.f32.mrf.mxu0
    %2149 = vdwg.mxu0
    %2150 = vrot.lane.b32.xlu0 %v1877, 120
    %v2151 = vpop.permute.xlu0 %2150
    %2152 = vrot.lane.b32.xlu0 %v1877, 88
    %v2153 = vpop.permute.xlu0 %2152
    %v2155 = vsel %vm544, %v2151, 0
    %v2158 = vsel %vm544, %v2153, 0
    %2160 = vmatprep.subr.bf16.mxu0 0
    %2161 = vmatpush1.bf16.xpose.msra.mxu0 0
    %2162 = vmatprep.subr.bf16.mxu0 0
    %2163 = vmatpush1.bf16.xpose.msra.mxu0 0
    %2164 = vmatprep.subr.bf16.mxu0 0
    %2165 = vmatpush1.bf16.xpose.msra.mxu0 0
    %2166 = vmatprep.subr.bf16.mxu0 0
    %2167 = vmatpush1.bf16.xpose.msra.mxu0 0
    %2168 = vmatprep.subr.bf16.mxu0 0
    %2169 = vmatpush1.bf16.xpose.msra.mxu0 0
    %2170 = vmatprep.subr.bf16.mxu0 0
    %2171 = vmatpush1.bf16.xpose.msra.mxu0 0
    %2172 = vmatprep.subr.bf16.mxu0 0
    %2173 = vmatpush1.bf16.xpose.msra.mxu0 0
    %2174 = vmatprep.subr.bf16.mxu0 0
    %2175 = vmatpush1.bf16.xpose.msra.mxu0 %v2158
    %2176 = vmatprep.subr.bf16.mxu0 0
    %2177 = vmatpush2.bf16.xpose.msra.mxu0 0
    %2178 = vmatprep.subr.bf16.mxu0 0
    %2179 = vmatpush2.bf16.xpose.msra.mxu0 0
    %2180 = vmatprep.subr.bf16.mxu0 0
    %2181 = vmatpush2.bf16.xpose.msra.mxu0 0
    %2182 = vmatprep.subr.bf16.mxu0 0
    %2183 = vmatpush2.bf16.xpose.msra.mxu0 0
    %2184 = vmatprep.subr.bf16.mxu0 0
    %2185 = vmatpush2.bf16.xpose.msra.mxu0 0
    %2186 = vmatprep.subr.bf16.mxu0 0
    %2187 = vmatpush2.bf16.xpose.msra.mxu0 0
    %2188 = vmatprep.subr.bf16.mxu0 0
    %2189 = vmatpush2.bf16.xpose.msra.mxu0 0
    %2190 = vmatprep.subr.bf16.mxu0 0
    %2191 = vmatpush2.bf16.xpose.msra.mxu0 0
    %2192 = vmatprep.mubr.bf16.mxu0 0
    %2193 = vmatmul.mubr.bf16.gmra.mxu0 %v2155
    %v2194 = vpop.f32.mrf.mxu0
    %v2195 = vadd.f32 0.0, %v2194
    %v2196 = vpop.f32.mrf.mxu0
    %v2197 = vpop.f32.mrf.mxu0
    %v2198 = vpop.f32.mrf.mxu0
    %2199 = vdwg.mxu0
    %v2200 = vmul.f32 %v2145, 0.35355338
    %v2201 = vmul.f32 %v2195, 0.35355338
    %v2202 = vsel %vm646, -1e+09, %v2200
    %v2203 = vsel %vm647, -1e+09, %v2201
    %v2204 = vsel %vm544, %v2202, -inf
    %2205 = vmax.xlane.f32.xlu0 %v2204
    %v2206 = vpop.xlane.xlu0 %2205
    %v2207 = vsel %vm544, %v2203, -inf
    %2208 = vmax.xlane.f32.xlu0 %v2207
    %v2209 = vpop.xlane.xlu0 %2208
    %v2210 = vsub.f32 %v2202, %v2206
    %v2211 = vsub.f32 %v2203, %v2209
    %v2212 = vmul.f32 %v2210, 1.442695
    %v2213 = vpow.pop %v2212
    %v2214 = vmul.f32 %v2211, 1.442695
    %v2215 = vpow.pop %v2214
    %v2216 = vsel %vm544, %v2213, 0.0
    %2217 = vadd.xlane.f32.xlu0 %v2216
    %v2218 = vpop.xlane.xlu0 %2217
    %v2219 = vsel %vm544, %v2215, 0.0
    %2220 = vadd.xlane.f32.xlu0 %v2219
    %v2221 = vpop.xlane.xlu0 %2220
    %v2222 = vrcp.pop %v2218
    %v2223 = vrcp.pop %v2221
    %v2224 = vmul.f32 %v2213, %v2222
    %v2225 = vmul.f32 %v2215, %v2223
    %v2226 = vpack.c.bf16 %v2224, %v2224
    %v2227 = vpack.c.bf16 %v2225, %v2225
    %2228 = vrot.lane.b32.xlu0 %v1876, 56
    %v2229 = vpop.permute.xlu0 %2228
    %v2231 = vsel %vm544, %v2226, 0
    %v2234 = vsel %vm679, %v2229, 0
    %2236 = vmatprep.subr.bf16.mxu0 0
    %2237 = vmatpush1.bf16.msra.mxu0 0
    %2238 = vmatprep.subr.bf16.mxu0 0
    %2239 = vmatpush1.bf16.msra.mxu0 0
    %2240 = vmatprep.subr.bf16.mxu0 0
    %2241 = vmatpush1.bf16.msra.mxu0 0
    %2242 = vmatprep.subr.bf16.mxu0 0
    %2243 = vmatpush1.bf16.msra.mxu0 0
    %2244 = vmatprep.subr.bf16.mxu0 0
    %2245 = vmatpush1.bf16.msra.mxu0 0
    %2246 = vmatprep.subr.bf16.mxu0 0
    %2247 = vmatpush1.bf16.msra.mxu0 0
    %2248 = vmatprep.subr.bf16.mxu0 0
    %2249 = vmatpush1.bf16.msra.mxu0 0
    %2250 = vmatprep.subr.bf16.mxu0 0
    %2251 = vmatpush1.bf16.msra.mxu0 %v2234
    %2252 = vmatprep.subr.bf16.mxu0 0
    %2253 = vmatpush2.bf16.msra.mxu0 0
    %2254 = vmatprep.subr.bf16.mxu0 0
    %2255 = vmatpush2.bf16.msra.mxu0 0
    %2256 = vmatprep.subr.bf16.mxu0 0
    %2257 = vmatpush2.bf16.msra.mxu0 0
    %2258 = vmatprep.subr.bf16.mxu0 0
    %2259 = vmatpush2.bf16.msra.mxu0 0
    %2260 = vmatprep.subr.bf16.mxu0 0
    %2261 = vmatpush2.bf16.msra.mxu0 0
    %2262 = vmatprep.subr.bf16.mxu0 0
    %2263 = vmatpush2.bf16.msra.mxu0 0
    %2264 = vmatprep.subr.bf16.mxu0 0
    %2265 = vmatpush2.bf16.msra.mxu0 0
    %2266 = vmatprep.subr.bf16.mxu0 0
    %2267 = vmatpush2.bf16.msra.mxu0 0
    %2268 = vmatprep.mubr.bf16.mxu0 0
    %2269 = vmatmul.mubr.bf16.gmra.mxu0 %v2231
    %v2270 = vpop.f32.mrf.mxu0
    %v2271 = vadd.f32 0.0, %v2270
    %v2272 = vpop.f32.mrf.mxu0
    %v2273 = vpop.f32.mrf.mxu0
    %v2274 = vpop.f32.mrf.mxu0
    %2275 = vdwg.mxu0
    %2276 = vrot.lane.b32.xlu0 %v1877, 56
    %v2277 = vpop.permute.xlu0 %2276
    %v2279 = vsel %vm544, %v2227, 0
    %v2282 = vsel %vm679, %v2277, 0
    %2284 = vmatprep.subr.bf16.mxu0 0
    %2285 = vmatpush1.bf16.msra.mxu0 0
    %2286 = vmatprep.subr.bf16.mxu0 0
    %2287 = vmatpush1.bf16.msra.mxu0 0
    %2288 = vmatprep.subr.bf16.mxu0 0
    %2289 = vmatpush1.bf16.msra.mxu0 0
    %2290 = vmatprep.subr.bf16.mxu0 0
    %2291 = vmatpush1.bf16.msra.mxu0 0
    %2292 = vmatprep.subr.bf16.mxu0 0
    %2293 = vmatpush1.bf16.msra.mxu0 0
    %2294 = vmatprep.subr.bf16.mxu0 0
    %2295 = vmatpush1.bf16.msra.mxu0 0
    %2296 = vmatprep.subr.bf16.mxu0 0
    %2297 = vmatpush1.bf16.msra.mxu0 0
    %2298 = vmatprep.subr.bf16.mxu0 0
    %2299 = vmatpush1.bf16.msra.mxu0 %v2282
    %2300 = vmatprep.subr.bf16.mxu0 0
    %2301 = vmatpush2.bf16.msra.mxu0 0
    %2302 = vmatprep.subr.bf16.mxu0 0
    %2303 = vmatpush2.bf16.msra.mxu0 0
    %2304 = vmatprep.subr.bf16.mxu0 0
    %2305 = vmatpush2.bf16.msra.mxu0 0
    %2306 = vmatprep.subr.bf16.mxu0 0
    %2307 = vmatpush2.bf16.msra.mxu0 0
    %2308 = vmatprep.subr.bf16.mxu0 0
    %2309 = vmatpush2.bf16.msra.mxu0 0
    %2310 = vmatprep.subr.bf16.mxu0 0
    %2311 = vmatpush2.bf16.msra.mxu0 0
    %2312 = vmatprep.subr.bf16.mxu0 0
    %2313 = vmatpush2.bf16.msra.mxu0 0
    %2314 = vmatprep.subr.bf16.mxu0 0
    %2315 = vmatpush2.bf16.msra.mxu0 0
    %2316 = vmatprep.mubr.bf16.mxu0 0
    %2317 = vmatmul.mubr.bf16.gmra.mxu0 %v2279
    %v2318 = vpop.f32.mrf.mxu0
    %v2319 = vadd.f32 0.0, %v2318
    %v2320 = vpop.f32.mrf.mxu0
    %v2321 = vpop.f32.mrf.mxu0
    %v2322 = vpop.f32.mrf.mxu0
    %2323 = vdwg.mxu0
    %2324 = vrot.lane.b32.xlu0 %v1876, 112
    %v2325 = vpop.permute.xlu0 %2324
    %2326 = vrot.lane.b32.xlu0 %v1876, 80
    %v2327 = vpop.permute.xlu0 %2326
    %v2329 = vsel %vm544, %v2325, 0
    %v2332 = vsel %vm544, %v2327, 0
    %2334 = vmatprep.subr.bf16.mxu0 0
    %2335 = vmatpush1.bf16.xpose.msra.mxu0 0
    %2336 = vmatprep.subr.bf16.mxu0 0
    %2337 = vmatpush1.bf16.xpose.msra.mxu0 0
    %2338 = vmatprep.subr.bf16.mxu0 0
    %2339 = vmatpush1.bf16.xpose.msra.mxu0 0
    %2340 = vmatprep.subr.bf16.mxu0 0
    %2341 = vmatpush1.bf16.xpose.msra.mxu0 0
    %2342 = vmatprep.subr.bf16.mxu0 0
    %2343 = vmatpush1.bf16.xpose.msra.mxu0 0
    %2344 = vmatprep.subr.bf16.mxu0 0
    %2345 = vmatpush1.bf16.xpose.msra.mxu0 0
    %2346 = vmatprep.subr.bf16.mxu0 0
    %2347 = vmatpush1.bf16.xpose.msra.mxu0 0
    %2348 = vmatprep.subr.bf16.mxu0 0
    %2349 = vmatpush1.bf16.xpose.msra.mxu0 %v2332
    %2350 = vmatprep.subr.bf16.mxu0 0
    %2351 = vmatpush2.bf16.xpose.msra.mxu0 0
    %2352 = vmatprep.subr.bf16.mxu0 0
    %2353 = vmatpush2.bf16.xpose.msra.mxu0 0
    %2354 = vmatprep.subr.bf16.mxu0 0
    %2355 = vmatpush2.bf16.xpose.msra.mxu0 0
    %2356 = vmatprep.subr.bf16.mxu0 0
    %2357 = vmatpush2.bf16.xpose.msra.mxu0 0
    %2358 = vmatprep.subr.bf16.mxu0 0
    %2359 = vmatpush2.bf16.xpose.msra.mxu0 0
    %2360 = vmatprep.subr.bf16.mxu0 0
    %2361 = vmatpush2.bf16.xpose.msra.mxu0 0
    %2362 = vmatprep.subr.bf16.mxu0 0
    %2363 = vmatpush2.bf16.xpose.msra.mxu0 0
    %2364 = vmatprep.subr.bf16.mxu0 0
    %2365 = vmatpush2.bf16.xpose.msra.mxu0 0
    %2366 = vmatprep.mubr.bf16.mxu0 0
    %2367 = vmatmul.mubr.bf16.gmra.mxu0 %v2329
    %v2368 = vpop.f32.mrf.mxu0
    %v2369 = vadd.f32 0.0, %v2368
    %v2370 = vpop.f32.mrf.mxu0
    %v2371 = vpop.f32.mrf.mxu0
    %v2372 = vpop.f32.mrf.mxu0
    %2373 = vdwg.mxu0
    %2374 = vrot.lane.b32.xlu0 %v1877, 112
    %v2375 = vpop.permute.xlu0 %2374
    %2376 = vrot.lane.b32.xlu0 %v1877, 80
    %v2377 = vpop.permute.xlu0 %2376
    %v2379 = vsel %vm544, %v2375, 0
    %v2382 = vsel %vm544, %v2377, 0
    %2384 = vmatprep.subr.bf16.mxu0 0
    %2385 = vmatpush1.bf16.xpose.msra.mxu0 0
    %2386 = vmatprep.subr.bf16.mxu0 0
    %2387 = vmatpush1.bf16.xpose.msra.mxu0 0
    %2388 = vmatprep.subr.bf16.mxu0 0
    %2389 = vmatpush1.bf16.xpose.msra.mxu0 0
    %2390 = vmatprep.subr.bf16.mxu0 0
    %2391 = vmatpush1.bf16.xpose.msra.mxu0 0
    %2392 = vmatprep.subr.bf16.mxu0 0
    %2393 = vmatpush1.bf16.xpose.msra.mxu0 0
    %2394 = vmatprep.subr.bf16.mxu0 0
    %2395 = vmatpush1.bf16.xpose.msra.mxu0 0
    %2396 = vmatprep.subr.bf16.mxu0 0
    %2397 = vmatpush1.bf16.xpose.msra.mxu0 0
    %2398 = vmatprep.subr.bf16.mxu0 0
    %2399 = vmatpush1.bf16.xpose.msra.mxu0 %v2382
    %2400 = vmatprep.subr.bf16.mxu0 0
    %2401 = vmatpush2.bf16.xpose.msra.mxu0 0
    %2402 = vmatprep.subr.bf16.mxu0 0
    %2403 = vmatpush2.bf16.xpose.msra.mxu0 0
    %2404 = vmatprep.subr.bf16.mxu0 0
    %2405 = vmatpush2.bf16.xpose.msra.mxu0 0
    %2406 = vmatprep.subr.bf16.mxu0 0
    %2407 = vmatpush2.bf16.xpose.msra.mxu0 0
    %2408 = vmatprep.subr.bf16.mxu0 0
    %2409 = vmatpush2.bf16.xpose.msra.mxu0 0
    %2410 = vmatprep.subr.bf16.mxu0 0
    %2411 = vmatpush2.bf16.xpose.msra.mxu0 0
    %2412 = vmatprep.subr.bf16.mxu0 0
    %2413 = vmatpush2.bf16.xpose.msra.mxu0 0
    %2414 = vmatprep.subr.bf16.mxu0 0
    %2415 = vmatpush2.bf16.xpose.msra.mxu0 0
    %2416 = vmatprep.mubr.bf16.mxu0 0
    %2417 = vmatmul.mubr.bf16.gmra.mxu0 %v2379
    %v2418 = vpop.f32.mrf.mxu0
    %v2419 = vadd.f32 0.0, %v2418
    %v2420 = vpop.f32.mrf.mxu0
    %v2421 = vpop.f32.mrf.mxu0
    %v2422 = vpop.f32.mrf.mxu0
    %2423 = vdwg.mxu0
    %v2424 = vmul.f32 %v2369, 0.35355338
    %v2425 = vmul.f32 %v2419, 0.35355338
    %v2426 = vsel %vm646, -1e+09, %v2424
    %v2427 = vsel %vm647, -1e+09, %v2425
    %v2428 = vsel %vm544, %v2426, -inf
    %2429 = vmax.xlane.f32.xlu0 %v2428
    %v2430 = vpop.xlane.xlu0 %2429
    %v2431 = vsel %vm544, %v2427, -inf
    %2432 = vmax.xlane.f32.xlu0 %v2431
    %v2433 = vpop.xlane.xlu0 %2432
    %v2434 = vsub.f32 %v2426, %v2430
    %v2435 = vsub.f32 %v2427, %v2433
    %v2436 = vmul.f32 %v2434, 1.442695
    %v2437 = vpow.pop %v2436
    %v2438 = vmul.f32 %v2435, 1.442695
    %v2439 = vpow.pop %v2438
    %v2440 = vsel %vm544, %v2437, 0.0
    %2441 = vadd.xlane.f32.xlu0 %v2440
    %v2442 = vpop.xlane.xlu0 %2441
    %v2443 = vsel %vm544, %v2439, 0.0
    %2444 = vadd.xlane.f32.xlu0 %v2443
    %v2445 = vpop.xlane.xlu0 %2444
    %v2446 = vrcp.pop %v2442
    %v2447 = vrcp.pop %v2445
    %v2448 = vmul.f32 %v2437, %v2446
    %v2449 = vmul.f32 %v2439, %v2447
    %v2450 = vpack.c.bf16 %v2448, %v2448
    %v2451 = vpack.c.bf16 %v2449, %v2449
    %2452 = vrot.lane.b32.xlu0 %v1876, 48
    %v2453 = vpop.permute.xlu0 %2452
    %v2455 = vsel %vm544, %v2450, 0
    %v2458 = vsel %vm679, %v2453, 0
    %2460 = vmatprep.subr.bf16.mxu0 0
    %2461 = vmatpush1.bf16.msra.mxu0 0
    %2462 = vmatprep.subr.bf16.mxu0 0
    %2463 = vmatpush1.bf16.msra.mxu0 0
    %2464 = vmatprep.subr.bf16.mxu0 0
    %2465 = vmatpush1.bf16.msra.mxu0 0
    %2466 = vmatprep.subr.bf16.mxu0 0
    %2467 = vmatpush1.bf16.msra.mxu0 0
    %2468 = vmatprep.subr.bf16.mxu0 0
    %2469 = vmatpush1.bf16.msra.mxu0 0
    %2470 = vmatprep.subr.bf16.mxu0 0
    %2471 = vmatpush1.bf16.msra.mxu0 0
    %2472 = vmatprep.subr.bf16.mxu0 0
    %2473 = vmatpush1.bf16.msra.mxu0 0
    %2474 = vmatprep.subr.bf16.mxu0 0
    %2475 = vmatpush1.bf16.msra.mxu0 %v2458
    %2476 = vmatprep.subr.bf16.mxu0 0
    %2477 = vmatpush2.bf16.msra.mxu0 0
    %2478 = vmatprep.subr.bf16.mxu0 0
    %2479 = vmatpush2.bf16.msra.mxu0 0
    %2480 = vmatprep.subr.bf16.mxu0 0
    %2481 = vmatpush2.bf16.msra.mxu0 0
    %2482 = vmatprep.subr.bf16.mxu0 0
    %2483 = vmatpush2.bf16.msra.mxu0 0
    %2484 = vmatprep.subr.bf16.mxu0 0
    %2485 = vmatpush2.bf16.msra.mxu0 0
    %2486 = vmatprep.subr.bf16.mxu0 0
    %2487 = vmatpush2.bf16.msra.mxu0 0
    %2488 = vmatprep.subr.bf16.mxu0 0
    %2489 = vmatpush2.bf16.msra.mxu0 0
    %2490 = vmatprep.subr.bf16.mxu0 0
    %2491 = vmatpush2.bf16.msra.mxu0 0
    %2492 = vmatprep.mubr.bf16.mxu0 0
    %2493 = vmatmul.mubr.bf16.gmra.mxu0 %v2455
    %v2494 = vpop.f32.mrf.mxu0
    %v2495 = vadd.f32 0.0, %v2494
    %v2496 = vpop.f32.mrf.mxu0
    %v2497 = vpop.f32.mrf.mxu0
    %v2498 = vpop.f32.mrf.mxu0
    %2499 = vdwg.mxu0
    %2500 = vrot.lane.b32.xlu0 %v1877, 48
    %v2501 = vpop.permute.xlu0 %2500
    %v2503 = vsel %vm544, %v2451, 0
    %v2506 = vsel %vm679, %v2501, 0
    %2508 = vmatprep.subr.bf16.mxu0 0
    %2509 = vmatpush1.bf16.msra.mxu0 0
    %2510 = vmatprep.subr.bf16.mxu0 0
    %2511 = vmatpush1.bf16.msra.mxu0 0
    %2512 = vmatprep.subr.bf16.mxu0 0
    %2513 = vmatpush1.bf16.msra.mxu0 0
    %2514 = vmatprep.subr.bf16.mxu0 0
    %2515 = vmatpush1.bf16.msra.mxu0 0
    %2516 = vmatprep.subr.bf16.mxu0 0
    %2517 = vmatpush1.bf16.msra.mxu0 0
    %2518 = vmatprep.subr.bf16.mxu0 0
    %2519 = vmatpush1.bf16.msra.mxu0 0
    %2520 = vmatprep.subr.bf16.mxu0 0
    %2521 = vmatpush1.bf16.msra.mxu0 0
    %2522 = vmatprep.subr.bf16.mxu0 0
    %2523 = vmatpush1.bf16.msra.mxu0 %v2506
    %2524 = vmatprep.subr.bf16.mxu0 0
    %2525 = vmatpush2.bf16.msra.mxu0 0
    %2526 = vmatprep.subr.bf16.mxu0 0
    %2527 = vmatpush2.bf16.msra.mxu0 0
    %2528 = vmatprep.subr.bf16.mxu0 0
    %2529 = vmatpush2.bf16.msra.mxu0 0
    %2530 = vmatprep.subr.bf16.mxu0 0
    %2531 = vmatpush2.bf16.msra.mxu0 0
    %2532 = vmatprep.subr.bf16.mxu0 0
    %2533 = vmatpush2.bf16.msra.mxu0 0
    %2534 = vmatprep.subr.bf16.mxu0 0
    %2535 = vmatpush2.bf16.msra.mxu0 0
    %2536 = vmatprep.subr.bf16.mxu0 0
    %2537 = vmatpush2.bf16.msra.mxu0 0
    %2538 = vmatprep.subr.bf16.mxu0 0
    %2539 = vmatpush2.bf16.msra.mxu0 0
    %2540 = vmatprep.mubr.bf16.mxu0 0
    %2541 = vmatmul.mubr.bf16.gmra.mxu0 %v2503
    %v2542 = vpop.f32.mrf.mxu0
    %v2543 = vadd.f32 0.0, %v2542
    %v2544 = vpop.f32.mrf.mxu0
    %v2545 = vpop.f32.mrf.mxu0
    %v2546 = vpop.f32.mrf.mxu0
    %2547 = vdwg.mxu0
    %2548 = vrot.lane.b32.xlu0 %v1876, 104
    %v2549 = vpop.permute.xlu0 %2548
    %2550 = vrot.lane.b32.xlu0 %v1876, 72
    %v2551 = vpop.permute.xlu0 %2550
    %v2553 = vsel %vm544, %v2549, 0
    %v2556 = vsel %vm544, %v2551, 0
    %2558 = vmatprep.subr.bf16.mxu0 0
    %2559 = vmatpush1.bf16.xpose.msra.mxu0 0
    %2560 = vmatprep.subr.bf16.mxu0 0
    %2561 = vmatpush1.bf16.xpose.msra.mxu0 0
    %2562 = vmatprep.subr.bf16.mxu0 0
    %2563 = vmatpush1.bf16.xpose.msra.mxu0 0
    %2564 = vmatprep.subr.bf16.mxu0 0
    %2565 = vmatpush1.bf16.xpose.msra.mxu0 0
    %2566 = vmatprep.subr.bf16.mxu0 0
    %2567 = vmatpush1.bf16.xpose.msra.mxu0 0
    %2568 = vmatprep.subr.bf16.mxu0 0
    %2569 = vmatpush1.bf16.xpose.msra.mxu0 0
    %2570 = vmatprep.subr.bf16.mxu0 0
    %2571 = vmatpush1.bf16.xpose.msra.mxu0 0
    %2572 = vmatprep.subr.bf16.mxu0 0
    %2573 = vmatpush1.bf16.xpose.msra.mxu0 %v2556
    %2574 = vmatprep.subr.bf16.mxu0 0
    %2575 = vmatpush2.bf16.xpose.msra.mxu0 0
    %2576 = vmatprep.subr.bf16.mxu0 0
    %2577 = vmatpush2.bf16.xpose.msra.mxu0 0
    %2578 = vmatprep.subr.bf16.mxu0 0
    %2579 = vmatpush2.bf16.xpose.msra.mxu0 0
    %2580 = vmatprep.subr.bf16.mxu0 0
    %2581 = vmatpush2.bf16.xpose.msra.mxu0 0
    %2582 = vmatprep.subr.bf16.mxu0 0
    %2583 = vmatpush2.bf16.xpose.msra.mxu0 0
    %2584 = vmatprep.subr.bf16.mxu0 0
    %2585 = vmatpush2.bf16.xpose.msra.mxu0 0
    %2586 = vmatprep.subr.bf16.mxu0 0
    %2587 = vmatpush2.bf16.xpose.msra.mxu0 0
    %2588 = vmatprep.subr.bf16.mxu0 0
    %2589 = vmatpush2.bf16.xpose.msra.mxu0 0
    %2590 = vmatprep.mubr.bf16.mxu0 0
    %2591 = vmatmul.mubr.bf16.gmra.mxu0 %v2553
    %v2592 = vpop.f32.mrf.mxu0
    %v2593 = vadd.f32 0.0, %v2592
    %v2594 = vpop.f32.mrf.mxu0
    %v2595 = vpop.f32.mrf.mxu0
    %v2596 = vpop.f32.mrf.mxu0
    %2597 = vdwg.mxu0
    %2598 = vrot.lane.b32.xlu0 %v1877, 104
    %v2599 = vpop.permute.xlu0 %2598
    %2600 = vrot.lane.b32.xlu0 %v1877, 72
    %v2601 = vpop.permute.xlu0 %2600
    %v2603 = vsel %vm544, %v2599, 0
    %v2606 = vsel %vm544, %v2601, 0
    %2608 = vmatprep.subr.bf16.mxu0 0
    %2609 = vmatpush1.bf16.xpose.msra.mxu0 0
    %2610 = vmatprep.subr.bf16.mxu0 0
    %2611 = vmatpush1.bf16.xpose.msra.mxu0 0
    %2612 = vmatprep.subr.bf16.mxu0 0
    %2613 = vmatpush1.bf16.xpose.msra.mxu0 0
    %2614 = vmatprep.subr.bf16.mxu0 0
    %2615 = vmatpush1.bf16.xpose.msra.mxu0 0
    %2616 = vmatprep.subr.bf16.mxu0 0
    %2617 = vmatpush1.bf16.xpose.msra.mxu0 0
    %2618 = vmatprep.subr.bf16.mxu0 0
    %2619 = vmatpush1.bf16.xpose.msra.mxu0 0
    %2620 = vmatprep.subr.bf16.mxu0 0
    %2621 = vmatpush1.bf16.xpose.msra.mxu0 0
    %2622 = vmatprep.subr.bf16.mxu0 0
    %2623 = vmatpush1.bf16.xpose.msra.mxu0 %v2606
    %2624 = vmatprep.subr.bf16.mxu0 0
    %2625 = vmatpush2.bf16.xpose.msra.mxu0 0
    %2626 = vmatprep.subr.bf16.mxu0 0
    %2627 = vmatpush2.bf16.xpose.msra.mxu0 0
    %2628 = vmatprep.subr.bf16.mxu0 0
    %2629 = vmatpush2.bf16.xpose.msra.mxu0 0
    %2630 = vmatprep.subr.bf16.mxu0 0
    %2631 = vmatpush2.bf16.xpose.msra.mxu0 0
    %2632 = vmatprep.subr.bf16.mxu0 0
    %2633 = vmatpush2.bf16.xpose.msra.mxu0 0
    %2634 = vmatprep.subr.bf16.mxu0 0
    %2635 = vmatpush2.bf16.xpose.msra.mxu0 0
    %2636 = vmatprep.subr.bf16.mxu0 0
    %2637 = vmatpush2.bf16.xpose.msra.mxu0 0
    %2638 = vmatprep.subr.bf16.mxu0 0
    %2639 = vmatpush2.bf16.xpose.msra.mxu0 0
    %2640 = vmatprep.mubr.bf16.mxu0 0
    %2641 = vmatmul.mubr.bf16.gmra.mxu0 %v2603
    %v2642 = vpop.f32.mrf.mxu0
    %v2643 = vadd.f32 0.0, %v2642
    %v2644 = vpop.f32.mrf.mxu0
    %v2645 = vpop.f32.mrf.mxu0
    %v2646 = vpop.f32.mrf.mxu0
    %2647 = vdwg.mxu0
    %v2648 = vmul.f32 %v2593, 0.35355338
    %v2649 = vmul.f32 %v2643, 0.35355338
    %v2650 = vsel %vm646, -1e+09, %v2648
    %v2651 = vsel %vm647, -1e+09, %v2649
    %v2652 = vsel %vm544, %v2650, -inf
    %2653 = vmax.xlane.f32.xlu0 %v2652
    %v2654 = vpop.xlane.xlu0 %2653
    %v2655 = vsel %vm544, %v2651, -inf
    %2656 = vmax.xlane.f32.xlu0 %v2655
    %v2657 = vpop.xlane.xlu0 %2656
    %v2658 = vsub.f32 %v2650, %v2654
    %v2659 = vsub.f32 %v2651, %v2657
    %v2660 = vmul.f32 %v2658, 1.442695
    %v2661 = vpow.pop %v2660
    %v2662 = vmul.f32 %v2659, 1.442695
    %v2663 = vpow.pop %v2662
    %v2664 = vsel %vm544, %v2661, 0.0
    %2665 = vadd.xlane.f32.xlu0 %v2664
    %v2666 = vpop.xlane.xlu0 %2665
    %v2667 = vsel %vm544, %v2663, 0.0
    %2668 = vadd.xlane.f32.xlu0 %v2667
    %v2669 = vpop.xlane.xlu0 %2668
    %v2670 = vrcp.pop %v2666
    %v2671 = vrcp.pop %v2669
    %v2672 = vmul.f32 %v2661, %v2670
    %v2673 = vmul.f32 %v2663, %v2671
    %v2674 = vpack.c.bf16 %v2672, %v2672
    %v2675 = vpack.c.bf16 %v2673, %v2673
    %2676 = vrot.lane.b32.xlu0 %v1876, 40
    %v2677 = vpop.permute.xlu0 %2676
    %v2679 = vsel %vm544, %v2674, 0
    %v2682 = vsel %vm679, %v2677, 0
    %2684 = vmatprep.subr.bf16.mxu0 0
    %2685 = vmatpush1.bf16.msra.mxu0 0
    %2686 = vmatprep.subr.bf16.mxu0 0
    %2687 = vmatpush1.bf16.msra.mxu0 0
    %2688 = vmatprep.subr.bf16.mxu0 0
    %2689 = vmatpush1.bf16.msra.mxu0 0
    %2690 = vmatprep.subr.bf16.mxu0 0
    %2691 = vmatpush1.bf16.msra.mxu0 0
    %2692 = vmatprep.subr.bf16.mxu0 0
    %2693 = vmatpush1.bf16.msra.mxu0 0
    %2694 = vmatprep.subr.bf16.mxu0 0
    %2695 = vmatpush1.bf16.msra.mxu0 0
    %2696 = vmatprep.subr.bf16.mxu0 0
    %2697 = vmatpush1.bf16.msra.mxu0 0
    %2698 = vmatprep.subr.bf16.mxu0 0
    %2699 = vmatpush1.bf16.msra.mxu0 %v2682
    %2700 = vmatprep.subr.bf16.mxu0 0
    %2701 = vmatpush2.bf16.msra.mxu0 0
    %2702 = vmatprep.subr.bf16.mxu0 0
    %2703 = vmatpush2.bf16.msra.mxu0 0
    %2704 = vmatprep.subr.bf16.mxu0 0
    %2705 = vmatpush2.bf16.msra.mxu0 0
    %2706 = vmatprep.subr.bf16.mxu0 0
    %2707 = vmatpush2.bf16.msra.mxu0 0
    %2708 = vmatprep.subr.bf16.mxu0 0
    %2709 = vmatpush2.bf16.msra.mxu0 0
    %2710 = vmatprep.subr.bf16.mxu0 0
    %2711 = vmatpush2.bf16.msra.mxu0 0
    %2712 = vmatprep.subr.bf16.mxu0 0
    %2713 = vmatpush2.bf16.msra.mxu0 0
    %2714 = vmatprep.subr.bf16.mxu0 0
    %2715 = vmatpush2.bf16.msra.mxu0 0
    %2716 = vmatprep.mubr.bf16.mxu0 0
    %2717 = vmatmul.mubr.bf16.gmra.mxu0 %v2679
    %v2718 = vpop.f32.mrf.mxu0
    %v2719 = vadd.f32 0.0, %v2718
    %v2720 = vpop.f32.mrf.mxu0
    %v2721 = vpop.f32.mrf.mxu0
    %v2722 = vpop.f32.mrf.mxu0
    %2723 = vdwg.mxu0
    %2724 = vrot.lane.b32.xlu0 %v1877, 40
    %v2725 = vpop.permute.xlu0 %2724
    %v2727 = vsel %vm544, %v2675, 0
    %v2730 = vsel %vm679, %v2725, 0
    %2732 = vmatprep.subr.bf16.mxu0 0
    %2733 = vmatpush1.bf16.msra.mxu0 0
    %2734 = vmatprep.subr.bf16.mxu0 0
    %2735 = vmatpush1.bf16.msra.mxu0 0
    %2736 = vmatprep.subr.bf16.mxu0 0
    %2737 = vmatpush1.bf16.msra.mxu0 0
    %2738 = vmatprep.subr.bf16.mxu0 0
    %2739 = vmatpush1.bf16.msra.mxu0 0
    %2740 = vmatprep.subr.bf16.mxu0 0
    %2741 = vmatpush1.bf16.msra.mxu0 0
    %2742 = vmatprep.subr.bf16.mxu0 0
    %2743 = vmatpush1.bf16.msra.mxu0 0
    %2744 = vmatprep.subr.bf16.mxu0 0
    %2745 = vmatpush1.bf16.msra.mxu0 0
    %2746 = vmatprep.subr.bf16.mxu0 0
    %2747 = vmatpush1.bf16.msra.mxu0 %v2730
    %2748 = vmatprep.subr.bf16.mxu0 0
    %2749 = vmatpush2.bf16.msra.mxu0 0
    %2750 = vmatprep.subr.bf16.mxu0 0
    %2751 = vmatpush2.bf16.msra.mxu0 0
    %2752 = vmatprep.subr.bf16.mxu0 0
    %2753 = vmatpush2.bf16.msra.mxu0 0
    %2754 = vmatprep.subr.bf16.mxu0 0
    %2755 = vmatpush2.bf16.msra.mxu0 0
    %2756 = vmatprep.subr.bf16.mxu0 0
    %2757 = vmatpush2.bf16.msra.mxu0 0
    %2758 = vmatprep.subr.bf16.mxu0 0
    %2759 = vmatpush2.bf16.msra.mxu0 0
    %2760 = vmatprep.subr.bf16.mxu0 0
    %2761 = vmatpush2.bf16.msra.mxu0 0
    %2762 = vmatprep.subr.bf16.mxu0 0
    %2763 = vmatpush2.bf16.msra.mxu0 0
    %2764 = vmatprep.mubr.bf16.mxu0 0
    %2765 = vmatmul.mubr.bf16.gmra.mxu0 %v2727
    %v2766 = vpop.f32.mrf.mxu0
    %v2767 = vadd.f32 0.0, %v2766
    %v2768 = vpop.f32.mrf.mxu0
    %v2769 = vpop.f32.mrf.mxu0
    %v2770 = vpop.f32.mrf.mxu0
    %2771 = vdwg.mxu0
    %2774 = vrot.lane.b32.xlu0 %v2271, 8
    %v2775 = vpop.permute.xlu0 %2774
    %2776 = vrot.lane.b32.xlu0 %v2319, 8
    %v2777 = vpop.permute.xlu0 %2776
    %2782 = vrot.lane.b32.xlu0 %v2495, 16
    %v2783 = vpop.permute.xlu0 %2782
    %2784 = vrot.lane.b32.xlu0 %v2543, 16
    %v2785 = vpop.permute.xlu0 %2784
    %2790 = vrot.lane.b32.xlu0 %v2719, 24
    %v2791 = vpop.permute.xlu0 %2790
    %2792 = vrot.lane.b32.xlu0 %v2767, 24
    %v2793 = vpop.permute.xlu0 %2792
    %v2796 = vsel %vm544, %v2047, %v2775
    %v2797 = vsel %vm544, %v2095, %v2777
    %v2798 = vsel %vm345, %v2796, %v2783
    %v2799 = vsel %vm345, %v2797, %v2785
    %v2800 = vsel %vm1471, %v2798, %v2791
    %v2801 = vsel %vm1471, %v2799, %v2793
    %s2802 = scalar_lea.vmem [#allocation19], 16
    %v2803 = vld [vmem:[%s2802] sm:$0xf]
    %v2804 = vld [vmem:[%s2802 + $0x4] sm:$0xf]
    %v2805 = vld [vmem:[%s2802 + $0x8] sm:$0xf]
    %v2806 = vld [vmem:[%s2802 + $0xc] sm:$0xf]
    %v2807 = vpack.c.bf16 %v2801, %v2800
    %v2812 = vunpack.c.l.b16 %v2803
    %v2813 = vunpack.c.l.b16 %v2804
    %v2814 = vunpack.c.l.b16 %v2805
    %v2815 = vunpack.c.l.b16 %v2806
    %v2816 = vpack.c.b16 %v2813, %v2812
    %v2817 = vpack.c.b16 %v2815, %v2814
    %v2821 = vsel %vm412, %v2807, 0
    %2823 = vmatprep.subr.bf16.mxu0 0
    %2824 = vmatpush1.bf16.msra.mxu0 0
    %2825 = vmatprep.subr.bf16.mxu0 0
    %2826 = vmatpush1.bf16.msra.mxu0 0
    %2827 = vmatprep.subr.bf16.mxu0 0
    %2828 = vmatpush1.bf16.msra.mxu0 0
    %2829 = vmatprep.subr.bf16.mxu0 0
    %2830 = vmatpush1.bf16.msra.mxu0 0
    %2831 = vmatprep.subr.bf16.mxu0 0
    %2832 = vmatpush1.bf16.msra.mxu0 0
    %2833 = vmatprep.subr.bf16.mxu0 0
    %2834 = vmatpush1.bf16.msra.mxu0 0
    %2835 = vmatprep.subr.bf16.mxu0 0
    %2836 = vmatpush1.bf16.msra.mxu0 %v2817
    %2837 = vmatprep.subr.bf16.mxu0 0
    %2838 = vmatpush1.bf16.msra.mxu0 %v2816
    %2839 = vmatprep.subr.bf16.mxu0 0
    %2840 = vmatpush2.bf16.msra.mxu0 0
    %2841 = vmatprep.subr.bf16.mxu0 0
    %2842 = vmatpush2.bf16.msra.mxu0 0
    %2843 = vmatprep.subr.bf16.mxu0 0
    %2844 = vmatpush2.bf16.msra.mxu0 0
    %2845 = vmatprep.subr.bf16.mxu0 0
    %2846 = vmatpush2.bf16.msra.mxu0 0
    %2847 = vmatprep.subr.bf16.mxu0 0
    %2848 = vmatpush2.bf16.msra.mxu0 0
    %2849 = vmatprep.subr.bf16.mxu0 0
    %2850 = vmatpush2.bf16.msra.mxu0 0
    %2851 = vmatprep.subr.bf16.mxu0 0
    %2852 = vmatpush2.bf16.msra.mxu0 0
    %2853 = vmatprep.subr.bf16.mxu0 0
    %2854 = vmatpush2.bf16.msra.mxu0 0
    %2855 = vmatprep.mubr.bf16.mxu0 0
    %2856 = vmatmul.mubr.bf16.gmra.mxu0 %v2821
    %v2857 = vpop.f32.mrf.mxu0
    %v2858 = vadd.f32 0.0, %v2857
    %v2859 = vpop.f32.mrf.mxu0
    %v2860 = vpop.f32.mrf.mxu0
    %v2861 = vadd.f32 0.0, %v2860
    %v2862 = vpop.f32.mrf.mxu0
    %2863 = vdwg.mxu0
    %v2864 = vadd.f32 %v1744, %v2858
    %v2865 = vadd.f32 %v1745, %v2861
    %s2866 = scalar_lea.vmem [#allocation20], 1
    %v2867 = vld [vmem:[%s2866] sm:$0x1]
    %v2869 = vlaneseq
    %v2870 = vshrl.u32 %v2869, 7
    %v2871 = vsub.s32 0, %v2870
    %v2872 = vrot.slane %v2867, %v2871
    %v2874 = vadd.f32 %v2864, %v2872
    %v2875 = vadd.f32 %v2865, %v2872
    %s2876 = scalar_lea.vmem [#allocation22], 1
    %v2877 = vld [vmem:[%s2876] sm:$0x1]
    %s2878 = scalar_lea.vmem [#allocation23], 1
    %v2879 = vld [vmem:[%s2878] sm:$0x1]
    %v2880 = vsel %vm412, %v2874, 0.0
    %2881 = vadd.xlane.f32.xlu0 %v2880
    %v2882 = vpop.xlane.xlu0 %2881
    %v2883 = vsel %vm412, %v2875, 0.0
    %2884 = vadd.xlane.f32.xlu0 %v2883
    %v2885 = vpop.xlane.xlu0 %2884
    %v2886 = vmul.f32 %v2882, %v419
    %v2887 = vmul.f32 %v2885, %v419
    %v2888 = vsub.f32 %v2874, %v2886
    %v2889 = vsub.f32 %v2875, %v2887
    %v2890 = vmul.f32 %v2888, %v2888
    %v2891 = vmul.f32 %v2889, %v2889
    %v2892 = vsel %vm412, %v2890, 0.0
    %2893 = vadd.xlane.f32.xlu0 %v2892
    %v2894 = vpop.xlane.xlu0 %2893
    %v2895 = vsel %vm412, %v2891, 0.0
    %2896 = vadd.xlane.f32.xlu0 %v2895
    %v2897 = vpop.xlane.xlu0 %2896
    %v2898 = vmul.f32 %v2894, %v432
    %v2899 = vmul.f32 %v2897, %v432
    %v2901 = vlaneseq
    %v2902 = vshrl.u32 %v2901, 7
    %v2903 = vsub.s32 0, %v2902
    %v2904 = vrot.slane %v2877, %v2903
    %v2906 = vmul.f32 %v2904, %v2888
    %v2907 = vmul.f32 %v2904, %v2889
    %v2908 = vrsqrt.pop %v2898
    %v2909 = vmul.f32 %v2898, %v2908
    %vm2910 = vcmp.eq.f32.partialorder %v2898, inf
    %v2911 = vsel %vm2910, %v2898, %v2909
    %vm2912 = vcmp.eq.f32.partialorder %v2898, 0.0
    %v2913 = vand.u32 %v2898, 2147483648
    %v2914 = vsel %vm2912, %v2913, %v2911
    %v2915 = vrsqrt.pop %v2899
    %v2916 = vmul.f32 %v2899, %v2915
    %vm2917 = vcmp.eq.f32.partialorder %v2899, inf
    %v2918 = vsel %vm2917, %v2899, %v2916
    %vm2919 = vcmp.eq.f32.partialorder %v2899, 0.0
    %v2920 = vand.u32 %v2899, 2147483648
    %v2921 = vsel %vm2919, %v2920, %v2918
    %v2922 = vadd.f32 %v2914, 1e-06
    %v2923 = vadd.f32 %v2921, 1e-06
    %v2924 = vrcp.pop %v2922
    %v2925 = vmul.f32 %v2906, %v2924
    %v2926 = vrcp.pop %v2923
    %v2927 = vmul.f32 %v2907, %v2926
    %v2929 = vlaneseq
    %v2930 = vshrl.u32 %v2929, 7
    %v2931 = vsub.s32 0, %v2930
    %v2932 = vrot.slane %v2879, %v2931
    %v2934 = vadd.f32 %v2925, %v2932
    %v2935 = vadd.f32 %v2927, %v2932
    %s2936 = scalar_lea.vmem [#allocation25], 16
    %v2937 = vld [vmem:[%s2936] sm:$0xf]
    %v2938 = vld [vmem:[%s2936 + $0x4] sm:$0xf]
    %v2939 = vld [vmem:[%s2936 + $0x8] sm:$0xf]
    %v2940 = vld [vmem:[%s2936 + $0xc] sm:$0xf]
    %v2941 = vpack.c.bf16 %v2935, %v2934
    %s2942 = scalar_lea.vmem [#allocation26], 1
    %v2943 = vld [vmem:[%s2942] sm:$0x1]
    %v2945 = vlaneseq
    %v2946 = vshrl.u32 %v2945, 7
    %v2947 = vsub.s32 0, %v2946
    %v2948 = vrot.slane %v2943, %v2947
    %v2954 = vunpack.c.l.b16 %v2937
    %v2955 = vunpack.c.l.b16 %v2938
    %v2956 = vunpack.c.l.b16 %v2939
    %v2957 = vunpack.c.l.b16 %v2940
    %v2958 = vpack.c.b16 %v2955, %v2954
    %v2959 = vpack.c.b16 %v2957, %v2956
    %v2963 = vsel %vm412, %v2941, 0
    %2965 = vmatprep.subr.bf16.mxu0 0
    %2966 = vmatpush1.bf16.msra.mxu0 0
    %2967 = vmatprep.subr.bf16.mxu0 0
    %2968 = vmatpush1.bf16.msra.mxu0 0
    %2969 = vmatprep.subr.bf16.mxu0 0
    %2970 = vmatpush1.bf16.msra.mxu0 0
    %2971 = vmatprep.subr.bf16.mxu0 0
    %2972 = vmatpush1.bf16.msra.mxu0 0
    %2973 = vmatprep.subr.bf16.mxu0 0
    %2974 = vmatpush1.bf16.msra.mxu0 0
    %2975 = vmatprep.subr.bf16.mxu0 0
    %2976 = vmatpush1.bf16.msra.mxu0 0
    %2977 = vmatprep.subr.bf16.mxu0 0
    %2978 = vmatpush1.bf16.msra.mxu0 %v2959
    %2979 = vmatprep.subr.bf16.mxu0 0
    %2980 = vmatpush1.bf16.msra.mxu0 %v2958
    %2981 = vmatprep.subr.bf16.mxu0 0
    %2982 = vmatpush2.bf16.msra.mxu0 0
    %2983 = vmatprep.subr.bf16.mxu0 0
    %2984 = vmatpush2.bf16.msra.mxu0 0
    %2985 = vmatprep.subr.bf16.mxu0 0
    %2986 = vmatpush2.bf16.msra.mxu0 0
    %2987 = vmatprep.subr.bf16.mxu0 0
    %2988 = vmatpush2.bf16.msra.mxu0 0
    %2989 = vmatprep.subr.bf16.mxu0 0
    %2990 = vmatpush2.bf16.msra.mxu0 0
    %2991 = vmatprep.subr.bf16.mxu0 0
    %2992 = vmatpush2.bf16.msra.mxu0 0
    %2993 = vmatprep.subr.bf16.mxu0 0
    %2994 = vmatpush2.bf16.msra.mxu0 0
    %2995 = vmatprep.subr.bf16.mxu0 0
    %2996 = vmatpush2.bf16.msra.mxu0 0
    %2997 = vmatprep.mubr.bf16.mxu0 0
    %2998 = vmatmul.mubr.bf16.gmra.mxu0 %v2963
    %v2999 = vpop.f32.mrf.mxu0
    %v3000 = vadd.f32 %v2948, %v2999
    %v3001 = vpop.f32.mrf.mxu0
    %v3002 = vpop.f32.mrf.mxu0
    %v3003 = vadd.f32 %v2948, %v3002
    %v3004 = vpop.f32.mrf.mxu0
    %3005 = vdwg.mxu0
    %v3006 = vmax.f32 %v3000, 0.0
    %v3007 = vmax.f32 %v3003, 0.0
    %s3008 = scalar_lea.vmem [#allocation28], 16
    %v3009 = vld [vmem:[%s3008] sm:$0xf]
    %v3010 = vld [vmem:[%s3008 + $0x4] sm:$0xf]
    %v3011 = vld [vmem:[%s3008 + $0x8] sm:$0xf]
    %v3012 = vld [vmem:[%s3008 + $0xc] sm:$0xf]
    %v3013 = vpack.c.bf16 %v3007, %v3006
    %v3018 = vunpack.c.l.b16 %v3009
    %v3019 = vunpack.c.l.b16 %v3010
    %v3020 = vunpack.c.l.b16 %v3011
    %v3021 = vunpack.c.l.b16 %v3012
    %v3022 = vpack.c.b16 %v3019, %v3018
    %v3023 = vpack.c.b16 %v3021, %v3020
    %v3027 = vsel %vm412, %v3013, 0
    %3029 = vmatprep.subr.bf16.mxu0 0
    %3030 = vmatpush1.bf16.msra.mxu0 0
    %3031 = vmatprep.subr.bf16.mxu0 0
    %3032 = vmatpush1.bf16.msra.mxu0 0
    %3033 = vmatprep.subr.bf16.mxu0 0
    %3034 = vmatpush1.bf16.msra.mxu0 0
    %3035 = vmatprep.subr.bf16.mxu0 0
    %3036 = vmatpush1.bf16.msra.mxu0 0
    %3037 = vmatprep.subr.bf16.mxu0 0
    %3038 = vmatpush1.bf16.msra.mxu0 0
    %3039 = vmatprep.subr.bf16.mxu0 0
    %3040 = vmatpush1.bf16.msra.mxu0 0
    %3041 = vmatprep.subr.bf16.mxu0 0
    %3042 = vmatpush1.bf16.msra.mxu0 %v3023
    %3043 = vmatprep.subr.bf16.mxu0 0
    %3044 = vmatpush1.bf16.msra.mxu0 %v3022
    %3045 = vmatprep.subr.bf16.mxu0 0
    %3046 = vmatpush2.bf16.msra.mxu0 0
    %3047 = vmatprep.subr.bf16.mxu0 0
    %3048 = vmatpush2.bf16.msra.mxu0 0
    %3049 = vmatprep.subr.bf16.mxu0 0
    %3050 = vmatpush2.bf16.msra.mxu0 0
    %3051 = vmatprep.subr.bf16.mxu0 0
    %3052 = vmatpush2.bf16.msra.mxu0 0
    %3053 = vmatprep.subr.bf16.mxu0 0
    %3054 = vmatpush2.bf16.msra.mxu0 0
    %3055 = vmatprep.subr.bf16.mxu0 0
    %3056 = vmatpush2.bf16.msra.mxu0 0
    %3057 = vmatprep.subr.bf16.mxu0 0
    %3058 = vmatpush2.bf16.msra.mxu0 0
    %3059 = vmatprep.subr.bf16.mxu0 0
    %3060 = vmatpush2.bf16.msra.mxu0 0
    %3061 = vmatprep.mubr.bf16.mxu0 0
    %3062 = vmatmul.mubr.bf16.gmra.mxu0 %v3027
    %v3063 = vpop.f32.mrf.mxu0
    %v3064 = vadd.f32 0.0, %v3063
    %v3065 = vpop.f32.mrf.mxu0
    %v3066 = vpop.f32.mrf.mxu0
    %v3067 = vadd.f32 0.0, %v3066
    %v3068 = vpop.f32.mrf.mxu0
    %3069 = vdwg.mxu0
    %v3070 = vadd.f32 %v2874, %v3064
    %v3071 = vadd.f32 %v2875, %v3067
    %s3072 = scalar_lea.vmem [#allocation29], 1
    %v3073 = vld [vmem:[%s3072] sm:$0x1]
    %v3075 = vlaneseq
    %v3076 = vshrl.u32 %v3075, 7
    %v3077 = vsub.s32 0, %v3076
    %v3078 = vrot.slane %v3073, %v3077
    %v3080 = vadd.f32 %v3070, %v3078
    %v3081 = vadd.f32 %v3071, %v3078
    %v3082 = vld [vmem:[#allocation31] sm:$0x1]
    %v3083 = vld [vmem:[#allocation32] sm:$0x1]
    %v3084 = vsel %vm412, %v3080, 0.0
    %3085 = vadd.xlane.f32.xlu0 %v3084
    %v3086 = vpop.xlane.xlu0 %3085
    %v3087 = vsel %vm412, %v3081, 0.0
    %3088 = vadd.xlane.f32.xlu0 %v3087
    %v3089 = vpop.xlane.xlu0 %3088
    %v3090 = vmul.f32 %v3086, %v419
    %v3091 = vmul.f32 %v3089, %v419
    %v3092 = vsub.f32 %v3080, %v3090
    %v3093 = vsub.f32 %v3081, %v3091
    %v3094 = vmul.f32 %v3092, %v3092
    %v3095 = vmul.f32 %v3093, %v3093
    %v3096 = vsel %vm412, %v3094, 0.0
    %3097 = vadd.xlane.f32.xlu0 %v3096
    %v3098 = vpop.xlane.xlu0 %3097
    %v3099 = vsel %vm412, %v3095, 0.0
    %3100 = vadd.xlane.f32.xlu0 %v3099
    %v3101 = vpop.xlane.xlu0 %3100
    %v3102 = vmul.f32 %v3098, %v432
    %v3103 = vmul.f32 %v3101, %v432
    %v3105 = vlaneseq
    %v3106 = vshrl.u32 %v3105, 7
    %v3107 = vsub.s32 0, %v3106
    %v3108 = vrot.slane %v3082, %v3107
    %v3110 = vmul.f32 %v3108, %v3092
    %v3111 = vmul.f32 %v3108, %v3093
    %v3112 = vrsqrt.pop %v3102
    %v3113 = vmul.f32 %v3102, %v3112
    %vm3114 = vcmp.eq.f32.partialorder %v3102, inf
    %v3115 = vsel %vm3114, %v3102, %v3113
    %vm3116 = vcmp.eq.f32.partialorder %v3102, 0.0
    %v3117 = vand.u32 %v3102, 2147483648
    %v3118 = vsel %vm3116, %v3117, %v3115
    %v3119 = vrsqrt.pop %v3103
    %v3120 = vmul.f32 %v3103, %v3119
    %vm3121 = vcmp.eq.f32.partialorder %v3103, inf
    %v3122 = vsel %vm3121, %v3103, %v3120
    %vm3123 = vcmp.eq.f32.partialorder %v3103, 0.0
    %v3124 = vand.u32 %v3103, 2147483648
    %v3125 = vsel %vm3123, %v3124, %v3122
    %v3126 = vadd.f32 %v3118, 1e-06
    %v3127 = vadd.f32 %v3125, 1e-06
    %v3128 = vrcp.pop %v3126
    %v3129 = vmul.f32 %v3110, %v3128
    %v3130 = vrcp.pop %v3127
    %v3131 = vmul.f32 %v3111, %v3130
    %v3133 = vlaneseq
    %v3134 = vshrl.u32 %v3133, 7
    %v3135 = vsub.s32 0, %v3134
    %v3136 = vrot.slane %v3083, %v3135
    %v3138 = vadd.f32 %v3129, %v3136
    %v3139 = vadd.f32 %v3131, %v3136
    %v3141 = vcombine.high %v3138, %v3138
    %v3143 = vunpack.c.l.s4 1966171168
    %v3144 = vunpack.c.0.s8 %v3143
    %v3145 = vlaneseq
    %v3146 = vshrl.u32 %v3145, 7
    %v3147 = vsub.s32 %v3144, %v3146
    %v3148 = vrot.slane %v3138, %v3147
    %v3150 = vunpack.c.l.s4 1966171168
    %v3151 = vunpack.c.0.s8 %v3150
    %v3152 = vlaneseq
    %v3153 = vshrl.u32 %v3152, 7
    %v3154 = vsub.s32 %v3151, %v3153
    %v3155 = vrot.slane %v3141, %v3154
    %v3156 = vcombine.high %v3148, %v3148
    %v3157 = vcombine.high %v3155, %v3155
    %v3159 = vunpack.c.l.s4 1966171168
    %v3160 = vunpack.c.0.s8 %v3159
    %v3161 = vlaneseq
    %v3162 = vshrl.u32 %v3161, 7
    %v3163 = vsub.s32 %v3160, %v3162
    %v3164 = vrot.slane %v3148, %v3163
    %v3166 = vunpack.c.l.s4 1966171168
    %v3167 = vunpack.c.0.s8 %v3166
    %v3168 = vlaneseq
    %v3169 = vshrl.u32 %v3168, 7
    %v3170 = vsub.s32 %v3167, %v3169
    %v3171 = vrot.slane %v3155, %v3170
    %v3173 = vunpack.c.l.s4 1966171168
    %v3174 = vunpack.c.0.s8 %v3173
    %v3175 = vlaneseq
    %v3176 = vshrl.u32 %v3175, 7
    %v3177 = vsub.s32 %v3174, %v3176
    %v3178 = vrot.slane %v3156, %v3177
    %v3180 = vunpack.c.l.s4 1966171168
    %v3181 = vunpack.c.0.s8 %v3180
    %v3182 = vlaneseq
    %v3183 = vshrl.u32 %v3182, 7
    %v3184 = vsub.s32 %v3181, %v3183
    %v3185 = vrot.slane %v3157, %v3184
    %v3186 = vcombine.high %v3164, %v3164
    %v3187 = vcombine.high %v3171, %v3171
    %v3188 = vcombine.high %v3178, %v3178
    %v3189 = vcombine.high %v3185, %v3185
    %vm3198 = vcmask 253952
    %3199 = vst.msk [vmem:[#allocation2] sm:$0x1] %vm3198, %v3164
    %3200 = vst.msk [vmem:[#allocation2 + $0x2] sm:$0x1] %vm3198, %v3178
    %3201 = vst.msk [vmem:[#allocation2 + $0x4] sm:$0x1] %vm3198, %v3186
    %3202 = vst.msk [vmem:[#allocation2 + $0x6] sm:$0x1] %vm3198, %v3188
    %3203 = vst.msk [vmem:[#allocation2 + $0x8] sm:$0x1] %vm3198, %v3171
    %3204 = vst.msk [vmem:[#allocation2 + $0xa] sm:$0x1] %vm3198, %v3185
    %3205 = vst.msk [vmem:[#allocation2 + $0xc] sm:$0x1] %vm3198, %v3187
    %3206 = vst.msk [vmem:[#allocation2 + $0xe] sm:$0x1] %vm3198, %v3189
    %v3208 = vcombine.high %v3139, %v3139
    %v3210 = vunpack.c.l.s4 1966171168
    %v3211 = vunpack.c.0.s8 %v3210
    %v3212 = vlaneseq
    %v3213 = vshrl.u32 %v3212, 7
    %v3214 = vsub.s32 %v3211, %v3213
    %v3215 = vrot.slane %v3139, %v3214
    %v3217 = vunpack.c.l.s4 1966171168
    %v3218 = vunpack.c.0.s8 %v3217
    %v3219 = vlaneseq
    %v3220 = vshrl.u32 %v3219, 7
    %v3221 = vsub.s32 %v3218, %v3220
    %v3222 = vrot.slane %v3208, %v3221
    %v3223 = vcombine.high %v3215, %v3215
    %v3224 = vcombine.high %v3222, %v3222
    %v3226 = vunpack.c.l.s4 1966171168
    %v3227 = vunpack.c.0.s8 %v3226
    %v3228 = vlaneseq
    %v3229 = vshrl.u32 %v3228, 7
    %v3230 = vsub.s32 %v3227, %v3229
    %v3231 = vrot.slane %v3215, %v3230
    %v3233 = vunpack.c.l.s4 1966171168
    %v3234 = vunpack.c.0.s8 %v3233
    %v3235 = vlaneseq
    %v3236 = vshrl.u32 %v3235, 7
    %v3237 = vsub.s32 %v3234, %v3236
    %v3238 = vrot.slane %v3222, %v3237
    %v3240 = vunpack.c.l.s4 1966171168
    %v3241 = vunpack.c.0.s8 %v3240
    %v3242 = vlaneseq
    %v3243 = vshrl.u32 %v3242, 7
    %v3244 = vsub.s32 %v3241, %v3243
    %v3245 = vrot.slane %v3223, %v3244
    %v3247 = vunpack.c.l.s4 1966171168
    %v3248 = vunpack.c.0.s8 %v3247
    %v3249 = vlaneseq
    %v3250 = vshrl.u32 %v3249, 7
    %v3251 = vsub.s32 %v3248, %v3250
    %v3252 = vrot.slane %v3224, %v3251
    %v3253 = vcombine.high %v3231, %v3231
    %v3254 = vcombine.high %v3238, %v3238
    %v3255 = vcombine.high %v3245, %v3245
    %v3256 = vcombine.high %v3252, %v3252
    %3265 = vst.msk [vmem:[#allocation2 + $0x1] sm:$0x1] %vm3198, %v3231
    %3266 = vst.msk [vmem:[#allocation2 + $0x3] sm:$0x1] %vm3198, %v3245
    %3267 = vst.msk [vmem:[#allocation2 + $0x5] sm:$0x1] %vm3198, %v3253
    %3268 = vst.msk [vmem:[#allocation2 + $0x7] sm:$0x1] %vm3198, %v3255
    %3269 = vst.msk [vmem:[#allocation2 + $0x9] sm:$0x1] %vm3198, %v3238
    %3270 = vst.msk [vmem:[#allocation2 + $0xb] sm:$0x1] %vm3198, %v3252
    %3271 = vst.msk [vmem:[#allocation2 + $0xd] sm:$0x1] %vm3198, %v3254
    %3272 = vst.msk [vmem:[#allocation2 + $0xf] sm:$0x1] %vm3198, %v3256
    %v3273 = vld [vmem:[%s20] sm:$0xf]
    %v3274 = vld [vmem:[%s20 + $0x4] sm:$0xf]
    %v3275 = vld [vmem:[%s20 + $0x8] sm:$0xf]
    %v3276 = vld [vmem:[%s20 + $0xc] sm:$0xf]
    %v3277 = vld [vmem:[%s20 + $0x10] sm:$0xf]
    %v3278 = vld [vmem:[%s20 + $0x14] sm:$0xf]
    %v3279 = vld [vmem:[%s20 + $0x18] sm:$0xf]
    %v3280 = vld [vmem:[%s20 + $0x1c] sm:$0xf]
    %v3281 = vld [vmem:[%s20 + $0x20] sm:$0xf]
    %v3282 = vld [vmem:[%s20 + $0x24] sm:$0xf]
    %v3283 = vld [vmem:[%s20 + $0x28] sm:$0xf]
    %v3284 = vld [vmem:[%s20 + $0x2c] sm:$0xf]
    %v3285 = vld [vmem:[%s21] sm:$0x1]
    %v3286 = vld [vmem:[%s22] sm:$0x1]
    %v3288 = vlaneseq
    %v3289 = vshrl.u32 %v3288, 7
    %v3290 = vsub.s32 0, %v3289
    %v3291 = vrot.slane %v3286, %v3290
    %v3292 = vld [vmem:[%s23] sm:$0x1]
    %v3294 = vlaneseq
    %v3295 = vshrl.u32 %v3294, 7
    %v3296 = vsub.s32 0, %v3295
    %v3297 = vrot.slane %v3292, %v3296
    %v3298 = vld [vmem:[#allocation2] sm:$0x3]
    %3300 = vrot.lane.b32.xlu0 %v3298, 32
    %v3301 = vpop.permute.xlu0 %3300
    %3303 = vrot.lane.b32.xlu0 %v3291, 64
    %v3304 = vpop.permute.xlu0 %3303
    %v3306 = vsel %vm412, 0.0, %v3301
    %vm3307 = vcmask 523264
    %v3308 = vsel %vm3307, %v3306, %v3304
    %v3309 = vpack.c.bf16 %v3308, %v3308
    %v3311 = vlaneseq
    %v3312 = vshrl.u32 %v3311, 7
    %v3313 = vsub.s32 0, %v3312
    %v3314 = vrot.slane %v3285, %v3313
    %v3328 = vunpack.c.l.b16 %v3273
    %v3329 = vunpack.c.l.b16 %v3274
    %v3330 = vunpack.c.l.b16 %v3275
    %v3331 = vunpack.c.l.b16 %v3276
    %v3332 = vunpack.c.l.b16 %v3277
    %v3333 = vunpack.c.l.b16 %v3278
    %v3334 = vunpack.c.l.b16 %v3279
    %v3335 = vunpack.c.l.b16 %v3280
    %v3336 = vunpack.c.l.b16 %v3281
    %v3337 = vunpack.c.l.b16 %v3282
    %v3338 = vunpack.c.l.b16 %v3283
    %v3339 = vunpack.c.l.b16 %v3284
    %v3340 = vpack.c.b16 %v3329, %v3328
    %v3341 = vpack.c.b16 %v3331, %v3330
    %v3342 = vpack.c.b16 %v3333, %v3332
    %v3343 = vpack.c.b16 %v3335, %v3334
    %v3344 = vpack.c.b16 %v3337, %v3336
    %v3345 = vpack.c.b16 %v3339, %v3338
    %vm3352 = vcmask 785408
    %v3354 = vsel %vm3352, %v3309, 0
    %3356 = vmatprep.subr.bf16.mxu0 0
    %3357 = vmatpush1.bf16.msra.mxu0 0
    %3358 = vmatprep.subr.bf16.mxu0 0
    %3359 = vmatpush1.bf16.msra.mxu0 0
    %3360 = vmatprep.subr.bf16.mxu0 0
    %3361 = vmatpush1.bf16.msra.mxu0 %v3345
    %3362 = vmatprep.subr.bf16.mxu0 0
    %3363 = vmatpush1.bf16.msra.mxu0 %v3344
    %3364 = vmatprep.subr.bf16.mxu0 0
    %3365 = vmatpush1.bf16.msra.mxu0 %v3343
    %3366 = vmatprep.subr.bf16.mxu0 0
    %3367 = vmatpush1.bf16.msra.mxu0 %v3342
    %3368 = vmatprep.subr.bf16.mxu0 0
    %3369 = vmatpush1.bf16.msra.mxu0 %v3341
    %3370 = vmatprep.subr.bf16.mxu0 0
    %3371 = vmatpush1.bf16.msra.mxu0 %v3340
    %3372 = vmatprep.subr.bf16.mxu0 0
    %3373 = vmatpush2.bf16.msra.mxu0 0
    %3374 = vmatprep.subr.bf16.mxu0 0
    %3375 = vmatpush2.bf16.msra.mxu0 0
    %3376 = vmatprep.subr.bf16.mxu0 0
    %3377 = vmatpush2.bf16.msra.mxu0 0
    %3378 = vmatprep.subr.bf16.mxu0 0
    %3379 = vmatpush2.bf16.msra.mxu0 0
    %3380 = vmatprep.subr.bf16.mxu0 0
    %3381 = vmatpush2.bf16.msra.mxu0 0
    %3382 = vmatprep.subr.bf16.mxu0 0
    %3383 = vmatpush2.bf16.msra.mxu0 0
    %3384 = vmatprep.subr.bf16.mxu0 0
    %3385 = vmatpush2.bf16.msra.mxu0 0
    %3386 = vmatprep.subr.bf16.mxu0 0
    %3387 = vmatpush2.bf16.msra.mxu0 0
    %3388 = vmatprep.mubr.bf16.mxu0 0
    %3389 = vmatmul.mubr.bf16.gmra.mxu0 %v3354
    %v3390 = vpop.f32.mrf.mxu0
    %v3391 = vadd.f32 %v3314, %v3390
    %v3392 = vpop.f32.mrf.mxu0
    %v3393 = vpop.f32.mrf.mxu0
    %v3394 = vpop.f32.mrf.mxu0
    %3395 = vdwg.mxu0
    %v3396 = vxor.u32 %v3391, 2147483648
    %v3397 = vmul.f32 %v3396, 1.442695
    %v3398 = vpow.pop %v3397
    %v3399 = vadd.f32 %v3398, 1.0
    %v3400 = vrcp.pop %v3399
    %v3401 = vmul.f32 1.0, %v3400
    %v3402 = vtanh.pop %v3391
    %3403 = vrot.lane.b32.xlu0 %v3297, 32
    %v3404 = vpop.permute.xlu0 %3403
    %v3406 = vmul.f32 %v3401, %v3404
    %3408 = vrot.lane.b32.xlu0 %v3402, 64
    %v3409 = vpop.permute.xlu0 %3408
    %v3411 = vmul.f32 %v3401, %v3409
    %3413 = vrot.lane.b32.xlu0 %v3411, 32
    %v3414 = vpop.permute.xlu0 %3413
    %v3416 = vadd.f32 %v3406, %v3414
    %v3417 = vtanh.pop %v3416
    %3419 = vrot.lane.b32.xlu0 %v3417, 64
    %v3420 = vpop.permute.xlu0 %3419
    %v3422 = vmul.f32 %v3401, %v3420
    %3424 = vrot.lane.b32.xlu0 %v3422, 32
    %v3425 = vpop.permute.xlu0 %3424
    %vm3427 = vcmask 254976
    %3428 = vst.msk [vmem:[#allocation3] sm:$0x3] %vm3427, %v3425
    %s3429 = scalar_lea.vmem [#allocation2], 2
    %v3430 = vld [vmem:[%s3429] sm:$0x3]
    %3432 = vrot.lane.b32.xlu0 %v3430, 32
    %v3433 = vpop.permute.xlu0 %3432
    %3435 = vrot.lane.b32.xlu0 %v3422, 96
    %v3436 = vpop.permute.xlu0 %3435
    %v3438 = vsel %vm412, %v3425, %v3433
    %v3439 = vsel %vm3307, %v3438, %v3436
    %v3440 = vpack.c.bf16 %v3439, %v3439
    %v3442 = vsel %vm3352, %v3440, 0
    %3444 = vmatprep.subr.bf16.mxu0 0
    %3445 = vmatpush1.bf16.msra.mxu0 0
    %3446 = vmatprep.subr.bf16.mxu0 0
    %3447 = vmatpush1.bf16.msra.mxu0 0
    %3448 = vmatprep.subr.bf16.mxu0 0
    %3449 = vmatpush1.bf16.msra.mxu0 %v3345
    %3450 = vmatprep.subr.bf16.mxu0 0
    %3451 = vmatpush1.bf16.msra.mxu0 %v3344
    %3452 = vmatprep.subr.bf16.mxu0 0
    %3453 = vmatpush1.bf16.msra.mxu0 %v3343
    %3454 = vmatprep.subr.bf16.mxu0 0
    %3455 = vmatpush1.bf16.msra.mxu0 %v3342
    %3456 = vmatprep.subr.bf16.mxu0 0
    %3457 = vmatpush1.bf16.msra.mxu0 %v3341
    %3458 = vmatprep.subr.bf16.mxu0 0
    %3459 = vmatpush1.bf16.msra.mxu0 %v3340
    %3460 = vmatprep.subr.bf16.mxu0 0
    %3461 = vmatpush2.bf16.msra.mxu0 0
    %3462 = vmatprep.subr.bf16.mxu0 0
    %3463 = vmatpush2.bf16.msra.mxu0 0
    %3464 = vmatprep.subr.bf16.mxu0 0
    %3465 = vmatpush2.bf16.msra.mxu0 0
    %3466 = vmatprep.subr.bf16.mxu0 0
    %3467 = vmatpush2.bf16.msra.mxu0 0
    %3468 = vmatprep.subr.bf16.mxu0 0
    %3469 = vmatpush2.bf16.msra.mxu0 0
    %3470 = vmatprep.subr.bf16.mxu0 0
    %3471 = vmatpush2.bf16.msra.mxu0 0
    %3472 = vmatprep.subr.bf16.mxu0 0
    %3473 = vmatpush2.bf16.msra.mxu0 0
    %3474 = vmatprep.subr.bf16.mxu0 0
    %3475 = vmatpush2.bf16.msra.mxu0 0
    %3476 = vmatprep.mubr.bf16.mxu0 0
    %3477 = vmatmul.mubr.bf16.gmra.mxu0 %v3442
    %v3478 = vpop.f32.mrf.mxu0
    %v3479 = vadd.f32 %v3314, %v3478
    %v3480 = vpop.f32.mrf.mxu0
    %v3481 = vpop.f32.mrf.mxu0
    %v3482 = vpop.f32.mrf.mxu0
    %3483 = vdwg.mxu0
    %v3484 = vxor.u32 %v3479, 2147483648
    %v3485 = vmul.f32 %v3484, 1.442695
    %v3486 = vpow.pop %v3485
    %v3487 = vadd.f32 %v3486, 1.0
    %v3488 = vrcp.pop %v3487
    %v3489 = vmul.f32 1.0, %v3488
    %v3490 = vtanh.pop %v3479
    %v3491 = vmul.f32 %v3489, %v3416
    %3493 = vrot.lane.b32.xlu0 %v3490, 64
    %v3494 = vpop.permute.xlu0 %3493
    %v3496 = vmul.f32 %v3489, %v3494
    %3498 = vrot.lane.b32.xlu0 %v3496, 32
    %v3499 = vpop.permute.xlu0 %3498
    %v3501 = vadd.f32 %v3491, %v3499
    %v3502 = vtanh.pop %v3501
    %3504 = vrot.lane.b32.xlu0 %v3502, 64
    %v3505 = vpop.permute.xlu0 %3504
    %v3507 = vmul.f32 %v3489, %v3505
    %3509 = vrot.lane.b32.xlu0 %v3507, 32
    %v3510 = vpop.permute.xlu0 %3509
    %s3512 = scalar_lea.vmem [#allocation3], 2
    %3513 = vst.msk [vmem:[%s3512] sm:$0x3] %vm3427, %v3510
    %s3514 = scalar_lea.vmem [#allocation2], 4
    %v3515 = vld [vmem:[%s3514] sm:$0x3]
    %3517 = vrot.lane.b32.xlu0 %v3515, 32
    %v3518 = vpop.permute.xlu0 %3517
    %3520 = vrot.lane.b32.xlu0 %v3507, 96
    %v3521 = vpop.permute.xlu0 %3520
    %v3523 = vsel %vm412, %v3510, %v3518
    %v3524 = vsel %vm3307, %v3523, %v3521
    %v3525 = vpack.c.bf16 %v3524, %v3524
    %v3527 = vsel %vm3352, %v3525, 0
    %3529 = vmatprep.subr.bf16.mxu0 0
    %3530 = vmatpush1.bf16.msra.mxu0 0
    %3531 = vmatprep.subr.bf16.mxu0 0
    %3532 = vmatpush1.bf16.msra.mxu0 0
    %3533 = vmatprep.subr.bf16.mxu0 0
    %3534 = vmatpush1.bf16.msra.mxu0 %v3345
    %3535 = vmatprep.subr.bf16.mxu0 0
    %3536 = vmatpush1.bf16.msra.mxu0 %v3344
    %3537 = vmatprep.subr.bf16.mxu0 0
    %3538 = vmatpush1.bf16.msra.mxu0 %v3343
    %3539 = vmatprep.subr.bf16.mxu0 0
    %3540 = vmatpush1.bf16.msra.mxu0 %v3342
    %3541 = vmatprep.subr.bf16.mxu0 0
    %3542 = vmatpush1.bf16.msra.mxu0 %v3341
    %3543 = vmatprep.subr.bf16.mxu0 0
    %3544 = vmatpush1.bf16.msra.mxu0 %v3340
    %3545 = vmatprep.subr.bf16.mxu0 0
    %3546 = vmatpush2.bf16.msra.mxu0 0
    %3547 = vmatprep.subr.bf16.mxu0 0
    %3548 = vmatpush2.bf16.msra.mxu0 0
    %3549 = vmatprep.subr.bf16.mxu0 0
    %3550 = vmatpush2.bf16.msra.mxu0 0
    %3551 = vmatprep.subr.bf16.mxu0 0
    %3552 = vmatpush2.bf16.msra.mxu0 0
    %3553 = vmatprep.subr.bf16.mxu0 0
    %3554 = vmatpush2.bf16.msra.mxu0 0
    %3555 = vmatprep.subr.bf16.mxu0 0
    %3556 = vmatpush2.bf16.msra.mxu0 0
    %3557 = vmatprep.subr.bf16.mxu0 0
    %3558 = vmatpush2.bf16.msra.mxu0 0
    %3559 = vmatprep.subr.bf16.mxu0 0
    %3560 = vmatpush2.bf16.msra.mxu0 0
    %3561 = vmatprep.mubr.bf16.mxu0 0
    %3562 = vmatmul.mubr.bf16.gmra.mxu0 %v3527
    %v3563 = vpop.f32.mrf.mxu0
    %v3564 = vadd.f32 %v3314, %v3563
    %v3565 = vpop.f32.mrf.mxu0
    %v3566 = vpop.f32.mrf.mxu0
    %v3567 = vpop.f32.mrf.mxu0
    %3568 = vdwg.mxu0
    %v3569 = vxor.u32 %v3564, 2147483648
    %v3570 = vmul.f32 %v3569, 1.442695
    %v3571 = vpow.pop %v3570
    %v3572 = vadd.f32 %v3571, 1.0
    %v3573 = vrcp.pop %v3572
    %v3574 = vmul.f32 1.0, %v3573
    %v3575 = vtanh.pop %v3564
    %v3576 = vmul.f32 %v3574, %v3501
    %3578 = vrot.lane.b32.xlu0 %v3575, 64
    %v3579 = vpop.permute.xlu0 %3578
    %v3581 = vmul.f32 %v3574, %v3579
    %3583 = vrot.lane.b32.xlu0 %v3581, 32
    %v3584 = vpop.permute.xlu0 %3583
    %v3586 = vadd.f32 %v3576, %v3584
    %v3587 = vtanh.pop %v3586
    %3589 = vrot.lane.b32.xlu0 %v3587, 64
    %v3590 = vpop.permute.xlu0 %3589
    %v3592 = vmul.f32 %v3574, %v3590
    %3594 = vrot.lane.b32.xlu0 %v3592, 32
    %v3595 = vpop.permute.xlu0 %3594
    %s3597 = scalar_lea.vmem [#allocation3], 4
    %3598 = vst.msk [vmem:[%s3597] sm:$0x3] %vm3427, %v3595
    %s3599 = scalar_lea.vmem [#allocation2], 6
    %v3600 = vld [vmem:[%s3599] sm:$0x3]
    %3602 = vrot.lane.b32.xlu0 %v3600, 32
    %v3603 = vpop.permute.xlu0 %3602
    %3605 = vrot.lane.b32.xlu0 %v3592, 96
    %v3606 = vpop.permute.xlu0 %3605
    %v3608 = vsel %vm412, %v3595, %v3603
    %v3609 = vsel %vm3307, %v3608, %v3606
    %v3610 = vpack.c.bf16 %v3609, %v3609
    %v3612 = vsel %vm3352, %v3610, 0
    %3614 = vmatprep.subr.bf16.mxu0 0
    %3615 = vmatpush1.bf16.msra.mxu0 0
    %3616 = vmatprep.subr.bf16.mxu0 0
    %3617 = vmatpush1.bf16.msra.mxu0 0
    %3618 = vmatprep.subr.bf16.mxu0 0
    %3619 = vmatpush1.bf16.msra.mxu0 %v3345
    %3620 = vmatprep.subr.bf16.mxu0 0
    %3621 = vmatpush1.bf16.msra.mxu0 %v3344
    %3622 = vmatprep.subr.bf16.mxu0 0
    %3623 = vmatpush1.bf16.msra.mxu0 %v3343
    %3624 = vmatprep.subr.bf16.mxu0 0
    %3625 = vmatpush1.bf16.msra.mxu0 %v3342
    %3626 = vmatprep.subr.bf16.mxu0 0
    %3627 = vmatpush1.bf16.msra.mxu0 %v3341
    %3628 = vmatprep.subr.bf16.mxu0 0
    %3629 = vmatpush1.bf16.msra.mxu0 %v3340
    %3630 = vmatprep.subr.bf16.mxu0 0
    %3631 = vmatpush2.bf16.msra.mxu0 0
    %3632 = vmatprep.subr.bf16.mxu0 0
    %3633 = vmatpush2.bf16.msra.mxu0 0
    %3634 = vmatprep.subr.bf16.mxu0 0
    %3635 = vmatpush2.bf16.msra.mxu0 0
    %3636 = vmatprep.subr.bf16.mxu0 0
    %3637 = vmatpush2.bf16.msra.mxu0 0
    %3638 = vmatprep.subr.bf16.mxu0 0
    %3639 = vmatpush2.bf16.msra.mxu0 0
    %3640 = vmatprep.subr.bf16.mxu0 0
    %3641 = vmatpush2.bf16.msra.mxu0 0
    %3642 = vmatprep.subr.bf16.mxu0 0
    %3643 = vmatpush2.bf16.msra.mxu0 0
    %3644 = vmatprep.subr.bf16.mxu0 0
    %3645 = vmatpush2.bf16.msra.mxu0 0
    %3646 = vmatprep.mubr.bf16.mxu0 0
    %3647 = vmatmul.mubr.bf16.gmra.mxu0 %v3612
    %v3648 = vpop.f32.mrf.mxu0
    %v3649 = vadd.f32 %v3314, %v3648
    %v3650 = vpop.f32.mrf.mxu0
    %v3651 = vpop.f32.mrf.mxu0
    %v3652 = vpop.f32.mrf.mxu0
    %3653 = vdwg.mxu0
    %v3654 = vxor.u32 %v3649, 2147483648
    %v3655 = vmul.f32 %v3654, 1.442695
    %v3656 = vpow.pop %v3655
    %v3657 = vadd.f32 %v3656, 1.0
    %v3658 = vrcp.pop %v3657
    %v3659 = vmul.f32 1.0, %v3658
    %v3660 = vtanh.pop %v3649
    %v3661 = vmul.f32 %v3659, %v3586
    %3663 = vrot.lane.b32.xlu0 %v3660, 64
    %v3664 = vpop.permute.xlu0 %3663
    %v3666 = vmul.f32 %v3659, %v3664
    %3668 = vrot.lane.b32.xlu0 %v3666, 32
    %v3669 = vpop.permute.xlu0 %3668
    %v3671 = vadd.f32 %v3661, %v3669
    %v3672 = vtanh.pop %v3671
    %3674 = vrot.lane.b32.xlu0 %v3672, 64
    %v3675 = vpop.permute.xlu0 %3674
    %v3677 = vmul.f32 %v3659, %v3675
    %3679 = vrot.lane.b32.xlu0 %v3677, 32
    %v3680 = vpop.permute.xlu0 %3679
    %s3682 = scalar_lea.vmem [#allocation3], 6
    %3683 = vst.msk [vmem:[%s3682] sm:$0x3] %vm3427, %v3680
    %s3684 = scalar_lea.vmem [#allocation2], 8
    %v3685 = vld [vmem:[%s3684] sm:$0x3]
    %3687 = vrot.lane.b32.xlu0 %v3685, 32
    %v3688 = vpop.permute.xlu0 %3687
    %3690 = vrot.lane.b32.xlu0 %v3677, 96
    %v3691 = vpop.permute.xlu0 %3690
    %v3693 = vsel %vm412, %v3680, %v3688
    %v3694 = vsel %vm3307, %v3693, %v3691
    %v3695 = vpack.c.bf16 %v3694, %v3694
    %v3697 = vsel %vm3352, %v3695, 0
    %3699 = vmatprep.subr.bf16.mxu0 0
    %3700 = vmatpush1.bf16.msra.mxu0 0
    %3701 = vmatprep.subr.bf16.mxu0 0
    %3702 = vmatpush1.bf16.msra.mxu0 0
    %3703 = vmatprep.subr.bf16.mxu0 0
    %3704 = vmatpush1.bf16.msra.mxu0 %v3345
    %3705 = vmatprep.subr.bf16.mxu0 0
    %3706 = vmatpush1.bf16.msra.mxu0 %v3344
    %3707 = vmatprep.subr.bf16.mxu0 0
    %3708 = vmatpush1.bf16.msra.mxu0 %v3343
    %3709 = vmatprep.subr.bf16.mxu0 0
    %3710 = vmatpush1.bf16.msra.mxu0 %v3342
    %3711 = vmatprep.subr.bf16.mxu0 0
    %3712 = vmatpush1.bf16.msra.mxu0 %v3341
    %3713 = vmatprep.subr.bf16.mxu0 0
    %3714 = vmatpush1.bf16.msra.mxu0 %v3340
    %3715 = vmatprep.subr.bf16.mxu0 0
    %3716 = vmatpush2.bf16.msra.mxu0 0
    %3717 = vmatprep.subr.bf16.mxu0 0
    %3718 = vmatpush2.bf16.msra.mxu0 0
    %3719 = vmatprep.subr.bf16.mxu0 0
    %3720 = vmatpush2.bf16.msra.mxu0 0
    %3721 = vmatprep.subr.bf16.mxu0 0
    %3722 = vmatpush2.bf16.msra.mxu0 0
    %3723 = vmatprep.subr.bf16.mxu0 0
    %3724 = vmatpush2.bf16.msra.mxu0 0
    %3725 = vmatprep.subr.bf16.mxu0 0
    %3726 = vmatpush2.bf16.msra.mxu0 0
    %3727 = vmatprep.subr.bf16.mxu0 0
    %3728 = vmatpush2.bf16.msra.mxu0 0
    %3729 = vmatprep.subr.bf16.mxu0 0
    %3730 = vmatpush2.bf16.msra.mxu0 0
    %3731 = vmatprep.mubr.bf16.mxu0 0
    %3732 = vmatmul.mubr.bf16.gmra.mxu0 %v3697
    %v3733 = vpop.f32.mrf.mxu0
    %v3734 = vadd.f32 %v3314, %v3733
    %v3735 = vpop.f32.mrf.mxu0
    %v3736 = vpop.f32.mrf.mxu0
    %v3737 = vpop.f32.mrf.mxu0
    %3738 = vdwg.mxu0
    %v3739 = vxor.u32 %v3734, 2147483648
    %v3740 = vmul.f32 %v3739, 1.442695
    %v3741 = vpow.pop %v3740
    %v3742 = vadd.f32 %v3741, 1.0
    %v3743 = vrcp.pop %v3742
    %v3744 = vmul.f32 1.0, %v3743
    %v3745 = vtanh.pop %v3734
    %v3746 = vmul.f32 %v3744, %v3671
    %3748 = vrot.lane.b32.xlu0 %v3745, 64
    %v3749 = vpop.permute.xlu0 %3748
    %v3751 = vmul.f32 %v3744, %v3749
    %3753 = vrot.lane.b32.xlu0 %v3751, 32
    %v3754 = vpop.permute.xlu0 %3753
    %v3756 = vadd.f32 %v3746, %v3754
    %v3757 = vtanh.pop %v3756
    %3759 = vrot.lane.b32.xlu0 %v3757, 64
    %v3760 = vpop.permute.xlu0 %3759
    %v3762 = vmul.f32 %v3744, %v3760
    %3764 = vrot.lane.b32.xlu0 %v3762, 32
    %v3765 = vpop.permute.xlu0 %3764
    %s3767 = scalar_lea.vmem [#allocation3], 8
    %3768 = vst.msk [vmem:[%s3767] sm:$0x3] %vm3427, %v3765
    %s3769 = scalar_lea.vmem [#allocation2], 10
    %v3770 = vld [vmem:[%s3769] sm:$0x3]
    %3772 = vrot.lane.b32.xlu0 %v3770, 32
    %v3773 = vpop.permute.xlu0 %3772
    %3775 = vrot.lane.b32.xlu0 %v3762, 96
    %v3776 = vpop.permute.xlu0 %3775
    %v3778 = vsel %vm412, %v3765, %v3773
    %v3779 = vsel %vm3307, %v3778, %v3776
    %v3780 = vpack.c.bf16 %v3779, %v3779
    %v3782 = vsel %vm3352, %v3780, 0
    %3784 = vmatprep.subr.bf16.mxu0 0
    %3785 = vmatpush1.bf16.msra.mxu0 0
    %3786 = vmatprep.subr.bf16.mxu0 0
    %3787 = vmatpush1.bf16.msra.mxu0 0
    %3788 = vmatprep.subr.bf16.mxu0 0
    %3789 = vmatpush1.bf16.msra.mxu0 %v3345
    %3790 = vmatprep.subr.bf16.mxu0 0
    %3791 = vmatpush1.bf16.msra.mxu0 %v3344
    %3792 = vmatprep.subr.bf16.mxu0 0
    %3793 = vmatpush1.bf16.msra.mxu0 %v3343
    %3794 = vmatprep.subr.bf16.mxu0 0
    %3795 = vmatpush1.bf16.msra.mxu0 %v3342
    %3796 = vmatprep.subr.bf16.mxu0 0
    %3797 = vmatpush1.bf16.msra.mxu0 %v3341
    %3798 = vmatprep.subr.bf16.mxu0 0
    %3799 = vmatpush1.bf16.msra.mxu0 %v3340
    %3800 = vmatprep.subr.bf16.mxu0 0
    %3801 = vmatpush2.bf16.msra.mxu0 0
    %3802 = vmatprep.subr.bf16.mxu0 0
    %3803 = vmatpush2.bf16.msra.mxu0 0
    %3804 = vmatprep.subr.bf16.mxu0 0
    %3805 = vmatpush2.bf16.msra.mxu0 0
    %3806 = vmatprep.subr.bf16.mxu0 0
    %3807 = vmatpush2.bf16.msra.mxu0 0
    %3808 = vmatprep.subr.bf16.mxu0 0
    %3809 = vmatpush2.bf16.msra.mxu0 0
    %3810 = vmatprep.subr.bf16.mxu0 0
    %3811 = vmatpush2.bf16.msra.mxu0 0
    %3812 = vmatprep.subr.bf16.mxu0 0
    %3813 = vmatpush2.bf16.msra.mxu0 0
    %3814 = vmatprep.subr.bf16.mxu0 0
    %3815 = vmatpush2.bf16.msra.mxu0 0
    %3816 = vmatprep.mubr.bf16.mxu0 0
    %3817 = vmatmul.mubr.bf16.gmra.mxu0 %v3782
    %v3818 = vpop.f32.mrf.mxu0
    %v3819 = vadd.f32 %v3314, %v3818
    %v3820 = vpop.f32.mrf.mxu0
    %v3821 = vpop.f32.mrf.mxu0
    %v3822 = vpop.f32.mrf.mxu0
    %3823 = vdwg.mxu0
    %v3824 = vxor.u32 %v3819, 2147483648
    %v3825 = vmul.f32 %v3824, 1.442695
    %v3826 = vpow.pop %v3825
    %v3827 = vadd.f32 %v3826, 1.0
    %v3828 = vrcp.pop %v3827
    %v3829 = vmul.f32 1.0, %v3828
    %v3830 = vtanh.pop %v3819
    %v3831 = vmul.f32 %v3829, %v3756
    %3833 = vrot.lane.b32.xlu0 %v3830, 64
    %v3834 = vpop.permute.xlu0 %3833
    %v3836 = vmul.f32 %v3829, %v3834
    %3838 = vrot.lane.b32.xlu0 %v3836, 32
    %v3839 = vpop.permute.xlu0 %3838
    %v3841 = vadd.f32 %v3831, %v3839
    %v3842 = vtanh.pop %v3841
    %3844 = vrot.lane.b32.xlu0 %v3842, 64
    %v3845 = vpop.permute.xlu0 %3844
    %v3847 = vmul.f32 %v3829, %v3845
    %3849 = vrot.lane.b32.xlu0 %v3847, 32
    %v3850 = vpop.permute.xlu0 %3849
    %s3852 = scalar_lea.vmem [#allocation3], 10
    %3853 = vst.msk [vmem:[%s3852] sm:$0x3] %vm3427, %v3850
    %s3854 = scalar_lea.vmem [#allocation2], 12
    %v3855 = vld [vmem:[%s3854] sm:$0x3]
    %3857 = vrot.lane.b32.xlu0 %v3855, 32
    %v3858 = vpop.permute.xlu0 %3857
    %3860 = vrot.lane.b32.xlu0 %v3847, 96
    %v3861 = vpop.permute.xlu0 %3860
    %v3863 = vsel %vm412, %v3850, %v3858
    %v3864 = vsel %vm3307, %v3863, %v3861
    %v3865 = vpack.c.bf16 %v3864, %v3864
    %v3867 = vsel %vm3352, %v3865, 0
    %3869 = vmatprep.subr.bf16.mxu0 0
    %3870 = vmatpush1.bf16.msra.mxu0 0
    %3871 = vmatprep.subr.bf16.mxu0 0
    %3872 = vmatpush1.bf16.msra.mxu0 0
    %3873 = vmatprep.subr.bf16.mxu0 0
    %3874 = vmatpush1.bf16.msra.mxu0 %v3345
    %3875 = vmatprep.subr.bf16.mxu0 0
    %3876 = vmatpush1.bf16.msra.mxu0 %v3344
    %3877 = vmatprep.subr.bf16.mxu0 0
    %3878 = vmatpush1.bf16.msra.mxu0 %v3343
    %3879 = vmatprep.subr.bf16.mxu0 0
    %3880 = vmatpush1.bf16.msra.mxu0 %v3342
    %3881 = vmatprep.subr.bf16.mxu0 0
    %3882 = vmatpush1.bf16.msra.mxu0 %v3341
    %3883 = vmatprep.subr.bf16.mxu0 0
    %3884 = vmatpush1.bf16.msra.mxu0 %v3340
    %3885 = vmatprep.subr.bf16.mxu0 0
    %3886 = vmatpush2.bf16.msra.mxu0 0
    %3887 = vmatprep.subr.bf16.mxu0 0
    %3888 = vmatpush2.bf16.msra.mxu0 0
    %3889 = vmatprep.subr.bf16.mxu0 0
    %3890 = vmatpush2.bf16.msra.mxu0 0
    %3891 = vmatprep.subr.bf16.mxu0 0
    %3892 = vmatpush2.bf16.msra.mxu0 0
    %3893 = vmatprep.subr.bf16.mxu0 0
    %3894 = vmatpush2.bf16.msra.mxu0 0
    %3895 = vmatprep.subr.bf16.mxu0 0
    %3896 = vmatpush2.bf16.msra.mxu0 0
    %3897 = vmatprep.subr.bf16.mxu0 0
    %3898 = vmatpush2.bf16.msra.mxu0 0
    %3899 = vmatprep.subr.bf16.mxu0 0
    %3900 = vmatpush2.bf16.msra.mxu0 0
    %3901 = vmatprep.mubr.bf16.mxu0 0
    %3902 = vmatmul.mubr.bf16.gmra.mxu0 %v3867
    %v3903 = vpop.f32.mrf.mxu0
    %v3904 = vadd.f32 %v3314, %v3903
    %v3905 = vpop.f32.mrf.mxu0
    %v3906 = vpop.f32.mrf.mxu0
    %v3907 = vpop.f32.mrf.mxu0
    %3908 = vdwg.mxu0
    %v3909 = vxor.u32 %v3904, 2147483648
    %v3910 = vmul.f32 %v3909, 1.442695
    %v3911 = vpow.pop %v3910
    %v3912 = vadd.f32 %v3911, 1.0
    %v3913 = vrcp.pop %v3912
    %v3914 = vmul.f32 1.0, %v3913
    %v3915 = vtanh.pop %v3904
    %v3916 = vmul.f32 %v3914, %v3841
    %3918 = vrot.lane.b32.xlu0 %v3915, 64
    %v3919 = vpop.permute.xlu0 %3918
    %v3921 = vmul.f32 %v3914, %v3919
    %3923 = vrot.lane.b32.xlu0 %v3921, 32
    %v3924 = vpop.permute.xlu0 %3923
    %v3926 = vadd.f32 %v3916, %v3924
    %v3927 = vtanh.pop %v3926
    %3929 = vrot.lane.b32.xlu0 %v3927, 64
    %v3930 = vpop.permute.xlu0 %3929
    %v3932 = vmul.f32 %v3914, %v3930
    %3934 = vrot.lane.b32.xlu0 %v3932, 32
    %v3935 = vpop.permute.xlu0 %3934
    %s3937 = scalar_lea.vmem [#allocation3], 12
    %3938 = vst.msk [vmem:[%s3937] sm:$0x3] %vm3427, %v3935
    %s3939 = scalar_lea.vmem [#allocation2], 14
    %v3940 = vld [vmem:[%s3939] sm:$0x3]
    %3942 = vrot.lane.b32.xlu0 %v3940, 32
    %v3943 = vpop.permute.xlu0 %3942
    %3945 = vrot.lane.b32.xlu0 %v3932, 96
    %v3946 = vpop.permute.xlu0 %3945
    %v3948 = vsel %vm412, %v3935, %v3943
    %v3949 = vsel %vm3307, %v3948, %v3946
    %v3950 = vpack.c.bf16 %v3949, %v3949
    %v3952 = vsel %vm3352, %v3950, 0
    %3954 = vmatprep.subr.bf16.mxu0 0
    %3955 = vmatpush1.bf16.msra.mxu0 0
    %3956 = vmatprep.subr.bf16.mxu0 0
    %3957 = vmatpush1.bf16.msra.mxu0 0
    %3958 = vmatprep.subr.bf16.mxu0 0
    %3959 = vmatpush1.bf16.msra.mxu0 %v3345
    %3960 = vmatprep.subr.bf16.mxu0 0
    %3961 = vmatpush1.bf16.msra.mxu0 %v3344
    %3962 = vmatprep.subr.bf16.mxu0 0
    %3963 = vmatpush1.bf16.msra.mxu0 %v3343
    %3964 = vmatprep.subr.bf16.mxu0 0
    %3965 = vmatpush1.bf16.msra.mxu0 %v3342
    %3966 = vmatprep.subr.bf16.mxu0 0
    %3967 = vmatpush1.bf16.msra.mxu0 %v3341
    %3968 = vmatprep.subr.bf16.mxu0 0
    %3969 = vmatpush1.bf16.msra.mxu0 %v3340
    %3970 = vmatprep.subr.bf16.mxu0 0
    %3971 = vmatpush2.bf16.msra.mxu0 0
    %3972 = vmatprep.subr.bf16.mxu0 0
    %3973 = vmatpush2.bf16.msra.mxu0 0
    %3974 = vmatprep.subr.bf16.mxu0 0
    %3975 = vmatpush2.bf16.msra.mxu0 0
    %3976 = vmatprep.subr.bf16.mxu0 0
    %3977 = vmatpush2.bf16.msra.mxu0 0
    %3978 = vmatprep.subr.bf16.mxu0 0
    %3979 = vmatpush2.bf16.msra.mxu0 0
    %3980 = vmatprep.subr.bf16.mxu0 0
    %3981 = vmatpush2.bf16.msra.mxu0 0
    %3982 = vmatprep.subr.bf16.mxu0 0
    %3983 = vmatpush2.bf16.msra.mxu0 0
    %3984 = vmatprep.subr.bf16.mxu0 0
    %3985 = vmatpush2.bf16.msra.mxu0 0
    %3986 = vmatprep.mubr.bf16.mxu0 0
    %3987 = vmatmul.mubr.bf16.gmra.mxu0 %v3952
    %v3988 = vpop.f32.mrf.mxu0
    %v3989 = vadd.f32 %v3314, %v3988
    %v3990 = vpop.f32.mrf.mxu0
    %v3991 = vpop.f32.mrf.mxu0
    %v3992 = vpop.f32.mrf.mxu0
    %3993 = vdwg.mxu0
    %v3994 = vxor.u32 %v3989, 2147483648
    %v3995 = vmul.f32 %v3994, 1.442695
    %v3996 = vpow.pop %v3995
    %v3997 = vadd.f32 %v3996, 1.0
    %v3998 = vrcp.pop %v3997
    %v3999 = vmul.f32 1.0, %v3998
    %v4000 = vtanh.pop %v3989
    %v4001 = vmul.f32 %v3999, %v3926
    %4003 = vrot.lane.b32.xlu0 %v4000, 64
    %v4004 = vpop.permute.xlu0 %4003
    %v4006 = vmul.f32 %v3999, %v4004
    %4008 = vrot.lane.b32.xlu0 %v4006, 32
    %v4009 = vpop.permute.xlu0 %4008
    %v4011 = vadd.f32 %v4001, %v4009
    %v4012 = vtanh.pop %v4011
    %4014 = vrot.lane.b32.xlu0 %v4012, 64
    %v4015 = vpop.permute.xlu0 %4014
    %v4017 = vmul.f32 %v3999, %v4015
    %4019 = vrot.lane.b32.xlu0 %v4017, 32
    %v4020 = vpop.permute.xlu0 %4019
    %s4022 = scalar_lea.vmem [#allocation3], 14
    %4023 = vst.msk [vmem:[%s4022] sm:$0x3] %vm3427, %v4020
    %v4024 = vld [vmem:[#allocation3] sm:$0x3]
    %v4025 = vld [vmem:[#allocation3 + $0x2] sm:$0x3]
    %v4026 = vld [vmem:[#allocation3 + $0x4] sm:$0x3]
    %v4027 = vld [vmem:[#allocation3 + $0x6] sm:$0x3]
    %v4028 = vld [vmem:[#allocation3 + $0x8] sm:$0x3]
    %v4029 = vld [vmem:[#allocation3 + $0xa] sm:$0x3]
    %v4030 = vld [vmem:[#allocation3 + $0xc] sm:$0x3]
    %v4031 = vld [vmem:[#allocation3 + $0xe] sm:$0x3]
    %v4032 = vld [vmem:[%s24] sm:$0xf]
    %v4033 = vld [vmem:[%s24 + $0x4] sm:$0xf]
    %v4034 = vld [vmem:[%s24 + $0x8] sm:$0xf]
    %v4035 = vld [vmem:[%s24 + $0xc] sm:$0xf]
    %v4044 = vcombine.low %v4024, %v4025
    %v4045 = vcombine.low %v4026, %v4027
    %v4047 = vunpack.c.l.s4 1983009808
    %v4048 = vunpack.c.0.s8 %v4047
    %v4049 = vlaneseq
    %v4050 = vshrl.u32 %v4049, 7
    %v4051 = vsub.s32 %v4048, %v4050
    %v4052 = vrot.slane %v4044, %v4051
    %v4054 = vunpack.c.l.s4 1983009808
    %v4055 = vunpack.c.0.s8 %v4054
    %v4056 = vlaneseq
    %v4057 = vshrl.u32 %v4056, 7
    %v4058 = vsub.s32 %v4055, %v4057
    %v4059 = vrot.slane %v4045, %v4058
    %v4060 = vcombine.low %v4052, %v4059
    %v4061 = vcombine.low %v4028, %v4029
    %v4062 = vcombine.low %v4030, %v4031
    %v4064 = vunpack.c.l.s4 1983009808
    %v4065 = vunpack.c.0.s8 %v4064
    %v4066 = vlaneseq
    %v4067 = vshrl.u32 %v4066, 7
    %v4068 = vsub.s32 %v4065, %v4067
    %v4069 = vrot.slane %v4061, %v4068
    %v4071 = vunpack.c.l.s4 1983009808
    %v4072 = vunpack.c.0.s8 %v4071
    %v4073 = vlaneseq
    %v4074 = vshrl.u32 %v4073, 7
    %v4075 = vsub.s32 %v4072, %v4074
    %v4076 = vrot.slane %v4062, %v4075
    %v4077 = vcombine.low %v4069, %v4076
    %v4080 = vpack.c.bf16 %v4077, %v4060
    %v4081 = vld [vmem:[%s25] sm:$0x1]
    %v4083 = vlaneseq
    %v4084 = vshrl.u32 %v4083, 7
    %v4085 = vsub.s32 0, %v4084
    %v4086 = vrot.slane %v4081, %v4085
    %v4092 = vunpack.c.l.b16 %v4032
    %v4093 = vunpack.c.l.b16 %v4033
    %v4094 = vunpack.c.l.b16 %v4034
    %v4095 = vunpack.c.l.b16 %v4035
    %v4096 = vpack.c.b16 %v4093, %v4092
    %v4097 = vpack.c.b16 %v4095, %v4094
    %v4101 = vsel %vm412, %v4080, 0
    %4103 = vmatprep.subr.bf16.mxu0 0
    %4104 = vmatpush1.bf16.msra.mxu0 0
    %4105 = vmatprep.subr.bf16.mxu0 0
    %4106 = vmatpush1.bf16.msra.mxu0 0
    %4107 = vmatprep.subr.bf16.mxu0 0
    %4108 = vmatpush1.bf16.msra.mxu0 0
    %4109 = vmatprep.subr.bf16.mxu0 0
    %4110 = vmatpush1.bf16.msra.mxu0 0
    %4111 = vmatprep.subr.bf16.mxu0 0
    %4112 = vmatpush1.bf16.msra.mxu0 0
    %4113 = vmatprep.subr.bf16.mxu0 0
    %4114 = vmatpush1.bf16.msra.mxu0 0
    %4115 = vmatprep.subr.bf16.mxu0 0
    %4116 = vmatpush1.bf16.msra.mxu0 %v4097
    %4117 = vmatprep.subr.bf16.mxu0 0
    %4118 = vmatpush1.bf16.msra.mxu0 %v4096
    %4119 = vmatprep.subr.bf16.mxu0 0
    %4120 = vmatpush2.bf16.msra.mxu0 0
    %4121 = vmatprep.subr.bf16.mxu0 0
    %4122 = vmatpush2.bf16.msra.mxu0 0
    %4123 = vmatprep.subr.bf16.mxu0 0
    %4124 = vmatpush2.bf16.msra.mxu0 0
    %4125 = vmatprep.subr.bf16.mxu0 0
    %4126 = vmatpush2.bf16.msra.mxu0 0
    %4127 = vmatprep.subr.bf16.mxu0 0
    %4128 = vmatpush2.bf16.msra.mxu0 0
    %4129 = vmatprep.subr.bf16.mxu0 0
    %4130 = vmatpush2.bf16.msra.mxu0 0
    %4131 = vmatprep.subr.bf16.mxu0 0
    %4132 = vmatpush2.bf16.msra.mxu0 0
    %4133 = vmatprep.subr.bf16.mxu0 0
    %4134 = vmatpush2.bf16.msra.mxu0 0
    %4135 = vmatprep.mubr.bf16.mxu0 0
    %4136 = vmatmul.mubr.bf16.gmra.mxu0 %v4101
    %v4137 = vpop.f32.mrf.mxu0
    %v4138 = vadd.f32 %v4086, %v4137
    %v4139 = vpop.f32.mrf.mxu0
    %v4140 = vpop.f32.mrf.mxu0
    %v4141 = vadd.f32 %v4086, %v4140
    %v4142 = vpop.f32.mrf.mxu0
    %4143 = vdwg.mxu0
    %v4144 = vmax.f32 %v4138, 0.0
    %v4145 = vmax.f32 %v4141, 0.0
    %v4146 = vld [vmem:[%s26] sm:$0xf]
    %v4147 = vld [vmem:[%s26 + $0x4] sm:$0xf]
    %v4148 = vpack.c.bf16 %v4145, %v4144
    %v4149 = vld [vmem:[#allocation4] sm:$0x1]
    %v4151 = vlaneseq
    %v4152 = vshrl.u32 %v4151, 7
    %v4153 = vsub.s32 0, %v4152
    %v4154 = vrot.slane %v4149, %v4153
    %v4158 = vunpack.c.l.b16 %v4146
    %v4159 = vunpack.c.l.b16 %v4147
    %v4160 = vpack.c.b16 %v4159, %v4158
    %v4163 = vsel %vm345, %v4148, 0
    %4165 = vmatprep.subr.bf16.mxu0 0
    %4166 = vmatpush1.bf16.msra.mxu0 0
    %4167 = vmatprep.subr.bf16.mxu0 0
    %4168 = vmatpush1.bf16.msra.mxu0 0
    %4169 = vmatprep.subr.bf16.mxu0 0
    %4170 = vmatpush1.bf16.msra.mxu0 0
    %4171 = vmatprep.subr.bf16.mxu0 0
    %4172 = vmatpush1.bf16.msra.mxu0 0
    %4173 = vmatprep.subr.bf16.mxu0 0
    %4174 = vmatpush1.bf16.msra.mxu0 0
    %4175 = vmatprep.subr.bf16.mxu0 0
    %4176 = vmatpush1.bf16.msra.mxu0 0
    %4177 = vmatprep.subr.bf16.mxu0 0
    %4178 = vmatpush1.bf16.msra.mxu0 0
    %4179 = vmatprep.subr.bf16.mxu0 0
    %4180 = vmatpush1.bf16.msra.mxu0 %v4160
    %4181 = vmatprep.subr.bf16.mxu0 0
    %4182 = vmatpush2.bf16.msra.mxu0 0
    %4183 = vmatprep.subr.bf16.mxu0 0
    %4184 = vmatpush2.bf16.msra.mxu0 0
    %4185 = vmatprep.subr.bf16.mxu0 0
    %4186 = vmatpush2.bf16.msra.mxu0 0
    %4187 = vmatprep.subr.bf16.mxu0 0
    %4188 = vmatpush2.bf16.msra.mxu0 0
    %4189 = vmatprep.subr.bf16.mxu0 0
    %4190 = vmatpush2.bf16.msra.mxu0 0
    %4191 = vmatprep.subr.bf16.mxu0 0
    %4192 = vmatpush2.bf16.msra.mxu0 0
    %4193 = vmatprep.subr.bf16.mxu0 0
    %4194 = vmatpush2.bf16.msra.mxu0 0
    %4195 = vmatprep.subr.bf16.mxu0 0
    %4196 = vmatpush2.bf16.msra.mxu0 0
    %4197 = vmatprep.mubr.bf16.mxu0 0
    %4198 = vmatmul.mubr.bf16.gmra.mxu0 %v4163
    %v4199 = vpop.f32.mrf.mxu0
    %v4200 = vadd.f32 %v4154, %v4199
    %v4201 = vpop.f32.mrf.mxu0
    %v4202 = vpop.f32.mrf.mxu0
    %v4203 = vadd.f32 %v4154, %v4202
    %v4204 = vpop.f32.mrf.mxu0
    %4205 = vdwg.mxu0
    %v4206 = vld [vmem:[%s2] sm:$0xff]
    %v4207 = vld [vmem:[%s2 + $0x8] sm:$0xff]
    %v4208 = vmul.f32 %v4200, %v4206
    %v4209 = vmul.f32 %v4203, %v4207
    %4211 = vset.pattern.permute.xlu0 0
    %4212 = vperm.xlu0 %4211, %v4208
    %v4213 = vpop.permute.xlu0 %4212
    %4216 = vset.pattern.permute.xlu0 0
    %4217 = vperm.xlu0 %4216, %v4209
    %v4218 = vpop.permute.xlu0 %4217
    %4220 = vst [vmem:[#allocation34] sm:$0xff] %v4213
    %4221 = vst [vmem:[#allocation34 + $0x8] sm:$0xff] %v4218
    // Predicated region
    $region186: #{tpu_custom_call.1} parent=1 // pred_check
      _
    $region187: #{tpu_custom_call.1} parent=1 // pred_check_branch
      %4223 = sbr.rel (0) target = $region189
    $region188: #{tpu_custom_call.1} parent=1 // pred_region
      %s4225 = ssub.s32 256, 256
      %4226 = vsyncadd [#allocation7], %s4225
      %s4227 = sshll.u32 [#allocation34], 4
      %s4228 = int_to_ptr.vmem [resolvable:$true] %s4227
      %4233 = dma.vmem_to_hbm [thread:$0]  %s4228, 256, %s28, [#allocation7], 128, 128, 8
    $region189: #{tpu_custom_call.1} parent=1 // pred_fallthru
      _
    // Predicated region
    $region190: #{tpu_custom_call.1} parent=1 // pred_check
      _
    $region191: #{tpu_custom_call.1} parent=1 // pred_check_branch
      %4235 = sbr.rel (0) target = $region193
    $region192: #{tpu_custom_call.1} parent=1 // pred_region
      %4236 = dma.done [#allocation7], 256
    $region193: #{tpu_custom_call.1} parent=1 // pred_fallthru
      _
    %4237 = vsyncpa [#allocation6], 1
    %4238 = vsyncpa [#allocation9], 1
    %4239 = vsyncpa [#allocation12], 1
    %4240 = vsyncpa [#allocation15], 1
    %4241 = vsyncpa [#allocation18], 1
    %4242 = vsyncpa [#allocation21], 1
    %4243 = vsyncpa [#allocation24], 1
    %4244 = vsyncpa [#allocation27], 1
    %4245 = vsyncpa [#allocation30], 1
    %4246 = vsyncpa [#allocation33], 1
    %4247 = vsyncpa [#allocation7], 1

</llo_original>
